<compile_context>
chip_gen: v7x
topology: tpu7x:2x2x1
jax: 0.10.0
libtpu: 0.0.40
codegen_flags: <defaults>
</compile_context>

<pallas_src>
import math

import jax
import jax.numpy as jnp
from jax.experimental import pallas as pl
from jax.experimental.pallas import tpu as pltpu


_BN_EPS = 1e-5
# eval-mode BatchNorm1d with default running stats (mean=0, var=1, gamma=1, beta=0)
# TODO(synk): when loading trained weights, fold the real running_mean/var/gamma/beta
#             into the conv weights instead of this identity-stats scale.
_BN_SCALE = 1.0 / math.sqrt(1.0 + _BN_EPS)
_NEG_INF = -1e30


# ---------------------------------------------------------------------------
# Fused whole-network kernel (one grid step == one graph of the batch)
# ---------------------------------------------------------------------------
def _make_fused_kernel(treedef, num_relation, num_heads, num_node):
    n_leaves = treedef.num_leaves
    R = num_relation
    N = num_node

    def conv_apply(adjt_wide, inputs, w_refs, b_ref):
        """relu( sum_r A_r^T (x W_r) + b ), BN folded, as ONE K=R*N GEMM."""
        xw = None
        for inp, w_ref in zip(inputs, w_refs):
            t = jnp.dot(inp.astype(jnp.bfloat16), w_ref[...],
                        preferred_element_type=jnp.float32)      # wide lane-dense GEMM
            xw = t if xw is None else xw + t                     # (N, R*dout) f32
        dout = xw.shape[1] // R
        xw_b = xw.astype(jnp.bfloat16)
        # regroup per-relation column blocks into row blocks -> (R*N, dout)
        xw_tall = jnp.concatenate(
            [xw_b[:, r * dout:(r + 1) * dout] for r in range(R)], axis=0)
        # single K = R*N contraction; adjacency already transposed -> plain GEMM
        acc = jnp.dot(adjt_wide, xw_tall, preferred_element_type=jnp.float32)
        return jnp.maximum(acc + b_ref[...], 0.0)                # (N, dout) f32

    def rewire(rel_out, mt_ref, mask_add_t, adjt0):
        """Multi-head windowed attention emitted directly in the transposed
        ("wide adjacency") orientation, then max() with the ORIGINAL adjacency."""
        si = rel_out.shape[1]
        rel_b = rel_out.astype(jnp.bfloat16)                     # (N, si)
        rel_t = jnp.transpose(rel_out).astype(jnp.bfloat16)      # (si, N), hoisted once
        # one wide GEMM for all heads: rel_out @ [M_0^T | ... | M_{H-1}^T]
        tt_all = jnp.dot(rel_b, mt_ref[...],
                         preferred_element_type=jnp.float32).astype(jnp.bfloat16)
        blocks = []
        for h in range(num_heads):
            st = jnp.dot(tt_all[:, h * si:(h + 1) * si], rel_t,
                         preferred_element_type=jnp.float32)     # (N, N) == scores^T
            st = st + mask_add_t                                 # additive window mask
            p = jnp.exp(st - jnp.max(st, axis=0, keepdims=True))
            att_t = p * pl.reciprocal(jnp.sum(p, axis=0, keepdims=True), approx=True)
            blocks.append(jnp.maximum(
                adjt0[:, h * N:(h + 1) * N].astype(jnp.float32), att_t))
        # rewired adjacency already in the wide transposed layout the convs consume
        return jnp.concatenate(blocks, axis=1).astype(jnp.bfloat16)   # (N, R*N)

    def kernel(x_ref, adj_ref, mask_ref, *rest):
        param_refs = rest[:n_leaves]
        node_ref, graph_ref = rest[n_leaves], rest[n_leaves + 1]
        layers = jax.tree_util.tree_unflatten(treedef, list(param_refs))

        x = x_ref[0]                    # (N, din)  bf16
        adjt0 = adj_ref[0]              # (N, R*N)  bf16, ORIGINAL adjacency (wide, transposed)
        mask_add_t = mask_ref[...]      # (N, N)    f32 additive mask (transposed)

        score_adjt = adjt0
        score_in = [x]
        layer_in = [x]
        hidden = None
        for score_convs, mt_ref, gear_convs in layers:
            # relationalGraphStack on the score-layer adjacency
            h = score_in
            for w_refs, b_ref in score_convs:
                h = [conv_apply(score_adjt, h, w_refs, b_ref)]
            rel_out = h[0]                                       # (N, R*hidden) f32
            # Rewirescorelayer + elementwise max with the ORIGINAL adjacency
            # TODO(synk): top-k / Gumbel sparsification approximated by the
            #             window-masked soft softmax.
            new_adjt = rewire(rel_out, mt_ref, mask_add_t, adjt0)
            # rewireGearNetstack on the rewired adjacency
            g = layer_in
            for w_refs, b_ref in gear_convs:
                g = [conv_apply(new_adjt, g, w_refs, b_ref)]
            hidden = g[0]                                        # (N, dout) f32
            # next-layer wiring (concat-free via host-side weight row split)
            score_in = [hidden, rel_out]
            layer_in = [hidden]
            score_adjt = new_adjt

        node_ref[0] = hidden
        # fused SumReadout routed through the (otherwise idle at this point) MXU
        ones = jnp.ones((1, N), jnp.float32)
        graph_ref[0] = jnp.dot(ones, hidden, preferred_element_type=jnp.float32)

    return kernel


def dgm_gearnet_forward(x, adj3, prepared_params, mask, cfg):
    """x: (B,N,din) f32, adj3: (B,R,N,N) f32 dense relational adjacency,
    mask: (N,N) {0,1} attention window mask."""
    B, N, din = x.shape
    R = cfg["num_relation"]
    dout = cfg["diffusion_dims"][-1][-1]

    # host-side layout prep (free): wide transposed adjacency, additive mask, bf16 operands
    adjt_wide = jnp.transpose(adj3, (0, 3, 1, 2)).reshape(B, N, R * N).astype(jnp.bfloat16)
    mask_add_t = jnp.where(mask > 0, 0.0, _NEG_INF).astype(jnp.float32).T
    x_b = x.astype(jnp.bfloat16)

    leaves, treedef = jax.tree_util.tree_flatten(prepared_params)
    kernel = _make_fused_kernel(treedef, R, cfg["num_heads"], N)

    def _const_map(ndim):
        def imap(b):
            return (0,) * ndim
        return imap

    param_specs = [pl.BlockSpec(leaf.shape, _const_map(leaf.ndim)) for leaf in leaves]

    node_f, graph_f = pl.pallas_call(
        kernel,
        grid=(B,),
        out_shape=(jax.ShapeDtypeStruct((B, N, dout), jnp.float32),
                   jax.ShapeDtypeStruct((B, 1, dout), jnp.float32)),
        in_specs=[
            pl.BlockSpec((1, N, din), lambda b: (b, 0, 0)),
            pl.BlockSpec((1, N, R * N), lambda b: (b, 0, 0)),
            pl.BlockSpec((N, N), lambda b: (0, 0)),
        ] + param_specs,
        out_specs=(pl.BlockSpec((1, N, dout), lambda b: (b, 0, 0)),
                   pl.BlockSpec((1, 1, dout), lambda b: (b, 0, 0))),
        # independent graphs -> shards across v7x's two TensorCores
        compiler_params=pltpu.CompilerParams(dimension_semantics=("parallel",)),
    )(x_b, adjt_wide, mask_add_t, *leaves)
    return {"graph_feature": graph_f[:, 0, :], "node_feature": node_f}


# ---------------------------------------------------------------------------
# Parameter init + host-side preparation (BN fold, weight widening/splitting,
# packed transposed per-head score matrices, bf16 casts)
# ---------------------------------------------------------------------------
def _init_conv_stack(key, dims, num_relation):
    params = []
    for din, dout in zip(dims[:-1], dims[1:]):
        key, kw, kb = jax.random.split(key, 3)
        w = jax.random.normal(kw, (num_relation, din, dout), jnp.float32) * 0.1
        b = jax.random.normal(kb, (dout,), jnp.float32) * 0.01
        params.append((w, b))
    return key, params


def init_raw_params(key, cfg):
    raw = {"score_stacks": [], "score_layers": [], "gear_stacks": []}
    for i in range(len(cfg["diffusion_dims"])):
        key, stack = _init_conv_stack(key, cfg["relation_dims"][i], cfg["num_relation"])
        raw["score_stacks"].append(stack)
        key, kq, kk = jax.random.split(key, 3)
        wq = jax.random.normal(kq, (cfg["score_in_dim"], cfg["score_out_dim"]),
                               jnp.float32) * 0.1
        wk = jax.random.normal(kk, (cfg["score_in_dim"], cfg["score_out_dim"]),
                               jnp.float32) * 0.1
        raw["score_layers"].append((wq, wk))
        key, stack = _init_conv_stack(key, cfg["diffusion_dims"][i], cfg["num_relation"])
        raw["gear_stacks"].append(stack)
    return raw


def _prep_conv(w, b):
    """Fold eval-mode BN scale, widen W to (din, R*dout), bf16 for the MXU."""
    num_relation, din, dout = w.shape
    w = w * _BN_SCALE
    b = b * _BN_SCALE
    w_wide = jnp.transpose(w, (1, 0, 2)).reshape(din, num_relation * dout)
    return w_wide.astype(jnp.bfloat16), b.reshape(1, dout).astype(jnp.float32)


def _prep_rewire(wq, wk, num_heads, temperature):
    """Per-head TRANSPOSED score matrices M_h^T = Wk_h Wq_h^T * scale, packed into
    one (si, H*si) block so the kernel issues a single wide GEMM for all heads."""
    si, so = wq.shape
    dh = so // num_heads
    scale = 1.0 / (math.sqrt(dh) * temperature)
    ms = [wk[:, h * dh:(h + 1) * dh] @ wq[:, h * dh:(h + 1) * dh].T * scale
          for h in range(num_heads)]
    return jnp.concatenate(ms, axis=-1).astype(jnp.bfloat16)      # (si, H*si)


def prepare_params(raw, cfg):
    assert cfg["num_heads"] == cfg["num_relation"], "heads map one-to-one onto relations"
    prepared = []
    for i in range(len(cfg["diffusion_dims"])):
        score_convs = []
        for j, (w, b) in enumerate(raw["score_stacks"][i]):
            w_wide, b2 = _prep_conv(w, b)
            if i > 0 and j == 0:
                d_hidden = cfg["diffusion_dims"][i - 1][-1]
                # score input of layer i>0 is [hidden | rel_out]; split rows so the
                # kernel never concatenates features.
                parts = (w_wide[:d_hidden, :], w_wide[d_hidden:, :])
            else:
                parts = (w_wide,)
            score_convs.append((parts, b2))
        wq, wk = raw["score_layers"][i]
        mt = _prep_rewire(wq, wk, cfg["num_heads"], cfg["temperature"])
        gear_convs = []
        for (w, b) in raw["gear_stacks"][i]:
            w_wide, b2 = _prep_conv(w, b)
            gear_convs.append(((w_wide,), b2))
        prepared.append((tuple(score_convs), mt, tuple(gear_convs)))
    return prepared


# ---------------------------------------------------------------------------
# Pure-JAX reference (per-relation / per-head loops over raw params).  Matmul
# operands are cast to bf16 at the same logical points as the kernel so the
# check validates structure / data flow at tight tolerance.
# ---------------------------------------------------------------------------
def _reference_forward(x, adj3, raw, mask, cfg):
    R = cfg["num_relation"]
    H = cfg["num_heads"]
    bf = lambda a: a.astype(jnp.bfloat16)

    def one_graph(xg, adjg):
        adjt = jnp.swapaxes(adjg, 1, 2)                    # adjT[r][j,i] = adj[r][i,j]

        def relconv(adjt_, h, w, b):
            acc = jnp.zeros((h.shape[0], w.shape[-1]), jnp.float32)
            for r in range(R):
                xw = jnp.dot(bf(h), bf(w[r]), preferred_element_type=jnp.float32)
                acc = acc + jnp.dot(bf(adjt_[r]), bf(xw), preferred_element_type=jnp.float32)
            return jnp.maximum((acc + b) * _BN_SCALE, 0.0)

        def rewire(rel_out, wq, wk):
            dh = wq.shape[1] // H
            scale = 1.0 / (math.sqrt(dh) * cfg["temperature"])
            outs = []
            for h in range(H):
                # q_h k_h^T * scale == rel_out (Wq_h Wk_h^T * scale) rel_out^T (exact identity)
                m_h = wq[:, h * dh:(h + 1) * dh] @ wk[:, h * dh:(h + 1) * dh].T * scale
                t = jnp.dot(bf(rel_out), bf(m_h), preferred_element_type=jnp.float32)
                s = jnp.dot(bf(t), bf(rel_out).T, preferred_element_type=jnp.float32)
                s = jnp.where(mask > 0, s, _NEG_INF)
                p = jnp.exp(s - jnp.max(s, axis=-1, keepdims=True))
                att = p / jnp.sum(p, axis=-1, keepdims=True)
                outs.append(jnp.maximum(adjg[h], att))
            return jnp.stack(outs)

        layer_in = xg
        score_in = xg
        score_adjt = adjt
        hidden = xg
        for i in range(len(cfg["diffusion_dims"])):
            h = score_in
            for (w, b) in raw["score_stacks"][i]:
                h = relconv(score_adjt, h, w, b)
            rel_out = h
            wq, wk = raw["score_layers"][i]
            new_adj = rewire(rel_out, wq, wk)
            new_adjt = jnp.swapaxes(new_adj, 1, 2)
            g = layer_in
            for (w, b) in raw["gear_stacks"][i]:
                g = relconv(new_adjt, g, w, b)
            hidden = g
            score_in = jnp.concatenate([hidden, rel_out], axis=-1)
            layer_in = hidden
            score_adjt = new_adjt
        return hidden, jnp.sum(hidden, axis=0)

    nodes, graphs = [], []
    for bidx in range(x.shape[0]):
        nf, gf = one_graph(x[bidx], adj3[bidx])
        nodes.append(nf)
        graphs.append(gf)
    return jnp.stack(nodes), jnp.stack(graphs)


# ---------------------------------------------------------------------------
if __name__ == "__main__":
    # small configuration consistent with the module's constructor
    B = 2                        # batch of graphs -> 'parallel' grid axis
    N = 32                       # nodes per graph
    E = 96                       # edges per graph
    R = 4                        # num_relation
    cfg = dict(
        num_relation=R,
        num_heads=R,             # heads map onto relations for the rewired adjacency
        window_size=8,
        k=4,
        temperature=0.5,
        diffusion_dims=[[16, 32], [32, 32]],
        relation_dims=[[16, 4 * 32], [32 + 4 * 32, 4 * 32]],
        score_in_dim=4 * 32,     # dim of relational_output
        score_out_dim=32,
    )

    key = jax.random.PRNGKey(0)
    key, k_x, k_in, k_out, k_rel = jax.random.split(key, 5)

    # input node features
    x = jax.random.normal(k_x, (B, N, cfg["diffusion_dims"][0][0]), jnp.float32)

    # deterministic random edge lists -> dense relational adjacency (B, R, N, N)
    node_in = jax.random.randint(k_in, (B, E), 0, N)
    node_out = jax.random.randint(k_out, (B, E), 0, N)
    relation = jax.random.randint(k_rel, (B, E), 0, R)
    edge_weight = jnp.ones((B, E), jnp.float32)
    batch_idx = jnp.broadcast_to(jnp.arange(B)[:, None], (B, E))
    adj3 = jnp.zeros((B, R, N, N), jnp.float32).at[
        batch_idx, relation, node_in, node_out].add(edge_weight)

    # band window mask for the rewire score layer: |i - j| < window_size
    ii = jnp.arange(N)[:, None]
    jj = jnp.arange(N)[None, :]
    mask = (jnp.abs(ii - jj) < cfg["window_size"]).astype(jnp.float32)

    raw_params = init_raw_params(key, cfg)
    prepared = prepare_params(raw_params, cfg)

    out = dgm_gearnet_forward(x, adj3, prepared, mask, cfg)
    jax.block_until_ready(out["node_feature"])
    jax.block_until_ready(out["graph_feature"])

    assert out["node_feature"].shape == (B, N, cfg["diffusion_dims"][-1][-1])
    assert out["graph_feature"].shape == (B, cfg["diffusion_dims"][-1][-1])
    assert bool(jnp.all(jnp.isfinite(out["node_feature"])))
    assert bool(jnp.all(jnp.isfinite(out["graph_feature"])))

    # numerical check against the pure-JAX reference; both sides use bf16 MXU
    # operands (f32 accumulation / f32 softmax), hence the 2e-2 tolerance.
    ref_node, ref_graph = _reference_forward(x, adj3, raw_params, mask, cfg)
    assert bool(jnp.allclose(out["node_feature"], ref_node, rtol=2e-2, atol=2e-2))
    assert bool(jnp.allclose(out["graph_feature"], ref_graph, rtol=2e-2, atol=2e-2))

    print("KERNEL_OK")
</pallas_src>

<mosaic_0001>
module attributes {stable_mosaic.version = 11 : i64} {
  func.func @kernel(%arg0: i32, %arg1: memref<1x32x16xbf16, #tpu.memory_space<vmem>>, %arg2: memref<1x32x128xbf16, #tpu.memory_space<vmem>>, %arg3: memref<32x32xf32, #tpu.memory_space<vmem>>, %arg4: memref<16x512xbf16, #tpu.memory_space<vmem>>, %arg5: memref<1x128xf32, #tpu.memory_space<vmem>>, %arg6: memref<128x512xbf16, #tpu.memory_space<vmem>>, %arg7: memref<16x128xbf16, #tpu.memory_space<vmem>>, %arg8: memref<1x32xf32, #tpu.memory_space<vmem>>, %arg9: memref<32x512xbf16, #tpu.memory_space<vmem>>, %arg10: memref<128x512xbf16, #tpu.memory_space<vmem>>, %arg11: memref<1x128xf32, #tpu.memory_space<vmem>>, %arg12: memref<128x512xbf16, #tpu.memory_space<vmem>>, %arg13: memref<32x128xbf16, #tpu.memory_space<vmem>>, %arg14: memref<1x32xf32, #tpu.memory_space<vmem>>, %arg15: memref<1x32x32xf32, #tpu.memory_space<vmem>>, %arg16: memref<1x1x32xf32, #tpu.memory_space<vmem>>) attributes {dimension_semantics = [#tpu.dimension_semantics<parallel>], iteration_bounds = array<i64: 2>, scalar_prefetch = 0 : i64, scratch_operands = 0 : i64, tpu.core_type = #tpu.core_type<tc>, window_params = [{transform_indices = @transform_0, window_bounds = array<i64: 1, 32, 16>}, {transform_indices = @transform_1, window_bounds = array<i64: 1, 32, 128>}, {pipeline_mode = #tpu.pipeline_mode<synchronous>, transform_indices = @transform_2, window_bounds = array<i64: 32, 32>}, {pipeline_mode = #tpu.pipeline_mode<synchronous>, transform_indices = @transform_3, window_bounds = array<i64: 16, 512>}, {pipeline_mode = #tpu.pipeline_mode<synchronous>, transform_indices = @transform_4, window_bounds = array<i64: 1, 128>}, {pipeline_mode = #tpu.pipeline_mode<synchronous>, transform_indices = @transform_5, window_bounds = array<i64: 128, 512>}, {pipeline_mode = #tpu.pipeline_mode<synchronous>, transform_indices = @transform_6, window_bounds = array<i64: 16, 128>}, {pipeline_mode = #tpu.pipeline_mode<synchronous>, transform_indices = @transform_7, window_bounds = array<i64: 1, 32>}, {pipeline_mode = #tpu.pipeline_mode<synchronous>, transform_indices = @transform_8, window_bounds = array<i64: 32, 512>}, {pipeline_mode = #tpu.pipeline_mode<synchronous>, transform_indices = @transform_9, window_bounds = array<i64: 128, 512>}, {pipeline_mode = #tpu.pipeline_mode<synchronous>, transform_indices = @transform_10, window_bounds = array<i64: 1, 128>}, {pipeline_mode = #tpu.pipeline_mode<synchronous>, transform_indices = @transform_11, window_bounds = array<i64: 128, 512>}, {pipeline_mode = #tpu.pipeline_mode<synchronous>, transform_indices = @transform_12, window_bounds = array<i64: 32, 128>}, {pipeline_mode = #tpu.pipeline_mode<synchronous>, transform_indices = @transform_13, window_bounds = array<i64: 1, 32>}, {transform_indices = @transform_14, window_bounds = array<i64: 1, 32, 32>}, {transform_indices = @transform_15, window_bounds = array<i64: 1, 1, 32>}]} {
    %c0 = arith.constant 0 : index
    %c0_0 = arith.constant 0 : index
    %c0_1 = arith.constant 0 : index
    %0 = vector.load %arg1[%c0, %c0_0, %c0_1] : memref<1x32x16xbf16, #tpu.memory_space<vmem>>, vector<1x32x16xbf16>
    %1 = vector.shape_cast %0 : vector<1x32x16xbf16> to vector<32x16xbf16>
    %c0_2 = arith.constant 0 : index
    %c0_3 = arith.constant 0 : index
    %c0_4 = arith.constant 0 : index
    %2 = vector.load %arg2[%c0_2, %c0_3, %c0_4] : memref<1x32x128xbf16, #tpu.memory_space<vmem>>, vector<1x32x128xbf16>
    %3 = vector.shape_cast %2 : vector<1x32x128xbf16> to vector<32x128xbf16>
    %c0_5 = arith.constant 0 : index
    %c0_6 = arith.constant 0 : index
    %4 = vector.load %arg3[%c0_5, %c0_6] : memref<32x32xf32, #tpu.memory_space<vmem>>, vector<32x32xf32>
    %c0_7 = arith.constant 0 : index
    %c0_8 = arith.constant 0 : index
    %5 = vector.load %arg4[%c0_7, %c0_8] : memref<16x512xbf16, #tpu.memory_space<vmem>>, vector<16x512xbf16>
    %cst = arith.constant dense<0.000000e+00> : vector<32x512xf32>
    %6 = tpu.matmul %1, %5, %cst {dimension_numbers = #tpu.dot_dimension_numbers<[1], [0], [0], [1], [0, 0, 1, 1], [], []>} : vector<32x16xbf16>, vector<16x512xbf16>, vector<32x512xf32> -> vector<32x512xf32>
    %7 = arith.truncf %6 : vector<32x512xf32> to vector<32x512xbf16>
    %8 = vector.extract_strided_slice %7 {offsets = [0, 0], sizes = [32, 128], strides = [1, 1]} : vector<32x512xbf16> to vector<32x128xbf16>
    %9 = vector.extract_strided_slice %7 {offsets = [0, 128], sizes = [32, 128], strides = [1, 1]} : vector<32x512xbf16> to vector<32x128xbf16>
    %10 = vector.extract_strided_slice %7 {offsets = [0, 256], sizes = [32, 128], strides = [1, 1]} : vector<32x512xbf16> to vector<32x128xbf16>
    %11 = vector.extract_strided_slice %7 {offsets = [0, 384], sizes = [32, 128], strides = [1, 1]} : vector<32x512xbf16> to vector<32x128xbf16>
    %12 = tpu.concatenate %8, %9, %10, %11 in 0 : vector<32x128xbf16>, vector<32x128xbf16>, vector<32x128xbf16>, vector<32x128xbf16> -> vector<128x128xbf16>
    %cst_9 = arith.constant dense<0.000000e+00> : vector<32x128xf32>
    %13 = tpu.matmul %3, %12, %cst_9 {dimension_numbers = #tpu.dot_dimension_numbers<[1], [0], [0], [1], [0, 0, 1, 1], [], []>} : vector<32x128xbf16>, vector<128x128xbf16>, vector<32x128xf32> -> vector<32x128xf32>
    %c0_10 = arith.constant 0 : index
    %c0_11 = arith.constant 0 : index
    %14 = vector.load %arg5[%c0_10, %c0_11] : memref<1x128xf32, #tpu.memory_space<vmem>>, vector<1x128xf32>
    %15 = vector.broadcast %14 : vector<1x128xf32> to vector<32x128xf32>
    %16 = arith.addf %13, %15 : vector<32x128xf32>
    %cst_12 = arith.constant 0.000000e+00 : f32
    %17 = vector.broadcast %cst_12 : f32 to vector<32x128xf32>
    %18 = arith.maximumf %16, %17 : vector<32x128xf32>
    %19 = arith.truncf %18 : vector<32x128xf32> to vector<32x128xbf16>
    %20 = tpu.transpose %18, [1, 0] : vector<32x128xf32> -> vector<128x32xf32>
    %21 = arith.truncf %20 : vector<128x32xf32> to vector<128x32xbf16>
    %c0_13 = arith.constant 0 : index
    %c0_14 = arith.constant 0 : index
    %22 = vector.load %arg6[%c0_13, %c0_14] : memref<128x512xbf16, #tpu.memory_space<vmem>>, vector<128x512xbf16>
    %cst_15 = arith.constant dense<0.000000e+00> : vector<32x512xf32>
    %23 = tpu.matmul %19, %22, %cst_15 {dimension_numbers = #tpu.dot_dimension_numbers<[1], [0], [0], [1], [0, 0, 1, 1], [], []>} : vector<32x128xbf16>, vector<128x512xbf16>, vector<32x512xf32> -> vector<32x512xf32>
    %24 = arith.truncf %23 : vector<32x512xf32> to vector<32x512xbf16>
    %25 = vector.extract_strided_slice %24 {offsets = [0, 0], sizes = [32, 128], strides = [1, 1]} : vector<32x512xbf16> to vector<32x128xbf16>
    %cst_16 = arith.constant dense<0.000000e+00> : vector<32x32xf32>
    %26 = tpu.matmul %25, %21, %cst_16 {dimension_numbers = #tpu.dot_dimension_numbers<[1], [0], [0], [1], [0, 0, 1, 1], [], []>} : vector<32x128xbf16>, vector<128x32xbf16>, vector<32x32xf32> -> vector<32x32xf32>
    %27 = arith.addf %26, %4 : vector<32x32xf32>
    %cst_17 = arith.constant dense<0xFF800000> : vector<32xf32>
    %28 = vector.multi_reduction <maximumf>, %27, %cst_17 [0] : vector<32x32xf32> to vector<32xf32>
    %29 = vector.shape_cast %28 : vector<32xf32> to vector<1x32xf32>
    %30 = vector.broadcast %29 : vector<1x32xf32> to vector<32x32xf32>
    %31 = arith.subf %27, %30 : vector<32x32xf32>
    %32 = math.exp %31 : vector<32x32xf32>
    %cst_18 = arith.constant dense<0.000000e+00> : vector<32xf32>
    %33 = vector.multi_reduction <add>, %32, %cst_18 [0] : vector<32x32xf32> to vector<32xf32>
    %34 = vector.shape_cast %33 : vector<32xf32> to vector<1x32xf32>
    %35 = tpu.reciprocal %34 {approx = true} : vector<1x32xf32> -> vector<1x32xf32>
    %36 = vector.broadcast %35 : vector<1x32xf32> to vector<32x32xf32>
    %37 = arith.mulf %32, %36 : vector<32x32xf32>
    %38 = vector.extract_strided_slice %3 {offsets = [0, 0], sizes = [32, 32], strides = [1, 1]} : vector<32x128xbf16> to vector<32x32xbf16>
    %39 = arith.extf %38 : vector<32x32xbf16> to vector<32x32xf32>
    %40 = arith.maximumf %39, %37 : vector<32x32xf32>
    %41 = vector.extract_strided_slice %24 {offsets = [0, 128], sizes = [32, 128], strides = [1, 1]} : vector<32x512xbf16> to vector<32x128xbf16>
    %cst_19 = arith.constant dense<0.000000e+00> : vector<32x32xf32>
    %42 = tpu.matmul %41, %21, %cst_19 {dimension_numbers = #tpu.dot_dimension_numbers<[1], [0], [0], [1], [0, 0, 1, 1], [], []>} : vector<32x128xbf16>, vector<128x32xbf16>, vector<32x32xf32> -> vector<32x32xf32>
    %43 = arith.addf %42, %4 : vector<32x32xf32>
    %cst_20 = arith.constant dense<0xFF800000> : vector<32xf32>
    %44 = vector.multi_reduction <maximumf>, %43, %cst_20 [0] : vector<32x32xf32> to vector<32xf32>
    %45 = vector.shape_cast %44 : vector<32xf32> to vector<1x32xf32>
    %46 = vector.broadcast %45 : vector<1x32xf32> to vector<32x32xf32>
    %47 = arith.subf %43, %46 : vector<32x32xf32>
    %48 = math.exp %47 : vector<32x32xf32>
    %cst_21 = arith.constant dense<0.000000e+00> : vector<32xf32>
    %49 = vector.multi_reduction <add>, %48, %cst_21 [0] : vector<32x32xf32> to vector<32xf32>
    %50 = vector.shape_cast %49 : vector<32xf32> to vector<1x32xf32>
    %51 = tpu.reciprocal %50 {approx = true} : vector<1x32xf32> -> vector<1x32xf32>
    %52 = vector.broadcast %51 : vector<1x32xf32> to vector<32x32xf32>
    %53 = arith.mulf %48, %52 : vector<32x32xf32>
    %54 = vector.extract_strided_slice %3 {offsets = [0, 32], sizes = [32, 32], strides = [1, 1]} : vector<32x128xbf16> to vector<32x32xbf16>
    %55 = arith.extf %54 : vector<32x32xbf16> to vector<32x32xf32>
    %56 = arith.maximumf %55, %53 : vector<32x32xf32>
    %57 = vector.extract_strided_slice %24 {offsets = [0, 256], sizes = [32, 128], strides = [1, 1]} : vector<32x512xbf16> to vector<32x128xbf16>
    %cst_22 = arith.constant dense<0.000000e+00> : vector<32x32xf32>
    %58 = tpu.matmul %57, %21, %cst_22 {dimension_numbers = #tpu.dot_dimension_numbers<[1], [0], [0], [1], [0, 0, 1, 1], [], []>} : vector<32x128xbf16>, vector<128x32xbf16>, vector<32x32xf32> -> vector<32x32xf32>
    %59 = arith.addf %58, %4 : vector<32x32xf32>
    %cst_23 = arith.constant dense<0xFF800000> : vector<32xf32>
    %60 = vector.multi_reduction <maximumf>, %59, %cst_23 [0] : vector<32x32xf32> to vector<32xf32>
    %61 = vector.shape_cast %60 : vector<32xf32> to vector<1x32xf32>
    %62 = vector.broadcast %61 : vector<1x32xf32> to vector<32x32xf32>
    %63 = arith.subf %59, %62 : vector<32x32xf32>
    %64 = math.exp %63 : vector<32x32xf32>
    %cst_24 = arith.constant dense<0.000000e+00> : vector<32xf32>
    %65 = vector.multi_reduction <add>, %64, %cst_24 [0] : vector<32x32xf32> to vector<32xf32>
    %66 = vector.shape_cast %65 : vector<32xf32> to vector<1x32xf32>
    %67 = tpu.reciprocal %66 {approx = true} : vector<1x32xf32> -> vector<1x32xf32>
    %68 = vector.broadcast %67 : vector<1x32xf32> to vector<32x32xf32>
    %69 = arith.mulf %64, %68 : vector<32x32xf32>
    %70 = vector.extract_strided_slice %3 {offsets = [0, 64], sizes = [32, 32], strides = [1, 1]} : vector<32x128xbf16> to vector<32x32xbf16>
    %71 = arith.extf %70 : vector<32x32xbf16> to vector<32x32xf32>
    %72 = arith.maximumf %71, %69 : vector<32x32xf32>
    %73 = vector.extract_strided_slice %24 {offsets = [0, 384], sizes = [32, 128], strides = [1, 1]} : vector<32x512xbf16> to vector<32x128xbf16>
    %cst_25 = arith.constant dense<0.000000e+00> : vector<32x32xf32>
    %74 = tpu.matmul %73, %21, %cst_25 {dimension_numbers = #tpu.dot_dimension_numbers<[1], [0], [0], [1], [0, 0, 1, 1], [], []>} : vector<32x128xbf16>, vector<128x32xbf16>, vector<32x32xf32> -> vector<32x32xf32>
    %75 = arith.addf %74, %4 : vector<32x32xf32>
    %cst_26 = arith.constant dense<0xFF800000> : vector<32xf32>
    %76 = vector.multi_reduction <maximumf>, %75, %cst_26 [0] : vector<32x32xf32> to vector<32xf32>
    %77 = vector.shape_cast %76 : vector<32xf32> to vector<1x32xf32>
    %78 = vector.broadcast %77 : vector<1x32xf32> to vector<32x32xf32>
    %79 = arith.subf %75, %78 : vector<32x32xf32>
    %80 = math.exp %79 : vector<32x32xf32>
    %cst_27 = arith.constant dense<0.000000e+00> : vector<32xf32>
    %81 = vector.multi_reduction <add>, %80, %cst_27 [0] : vector<32x32xf32> to vector<32xf32>
    %82 = vector.shape_cast %81 : vector<32xf32> to vector<1x32xf32>
    %83 = tpu.reciprocal %82 {approx = true} : vector<1x32xf32> -> vector<1x32xf32>
    %84 = vector.broadcast %83 : vector<1x32xf32> to vector<32x32xf32>
    %85 = arith.mulf %80, %84 : vector<32x32xf32>
    %86 = vector.extract_strided_slice %3 {offsets = [0, 96], sizes = [32, 32], strides = [1, 1]} : vector<32x128xbf16> to vector<32x32xbf16>
    %87 = arith.extf %86 : vector<32x32xbf16> to vector<32x32xf32>
    %88 = arith.maximumf %87, %85 : vector<32x32xf32>
    %89 = tpu.concatenate %40, %56, %72, %88 in 1 : vector<32x32xf32>, vector<32x32xf32>, vector<32x32xf32>, vector<32x32xf32> -> vector<32x128xf32>
    %90 = arith.truncf %89 : vector<32x128xf32> to vector<32x128xbf16>
    %c0_28 = arith.constant 0 : index
    %c0_29 = arith.constant 0 : index
    %91 = vector.load %arg7[%c0_28, %c0_29] : memref<16x128xbf16, #tpu.memory_space<vmem>>, vector<16x128xbf16>
    %cst_30 = arith.constant dense<0.000000e+00> : vector<32x128xf32>
    %92 = tpu.matmul %1, %91, %cst_30 {dimension_numbers = #tpu.dot_dimension_numbers<[1], [0], [0], [1], [0, 0, 1, 1], [], []>} : vector<32x16xbf16>, vector<16x128xbf16>, vector<32x128xf32> -> vector<32x128xf32>
    %93 = arith.truncf %92 : vector<32x128xf32> to vector<32x128xbf16>
    %94 = vector.extract_strided_slice %93 {offsets = [0, 0], sizes = [32, 32], strides = [1, 1]} : vector<32x128xbf16> to vector<32x32xbf16>
    %95 = vector.extract_strided_slice %93 {offsets = [0, 32], sizes = [32, 32], strides = [1, 1]} : vector<32x128xbf16> to vector<32x32xbf16>
    %96 = vector.extract_strided_slice %93 {offsets = [0, 64], sizes = [32, 32], strides = [1, 1]} : vector<32x128xbf16> to vector<32x32xbf16>
    %97 = vector.extract_strided_slice %93 {offsets = [0, 96], sizes = [32, 32], strides = [1, 1]} : vector<32x128xbf16> to vector<32x32xbf16>
    %98 = tpu.concatenate %94, %95, %96, %97 in 0 : vector<32x32xbf16>, vector<32x32xbf16>, vector<32x32xbf16>, vector<32x32xbf16> -> vector<128x32xbf16>
    %cst_31 = arith.constant dense<0.000000e+00> : vector<32x32xf32>
    %99 = tpu.matmul %90, %98, %cst_31 {dimension_numbers = #tpu.dot_dimension_numbers<[1], [0], [0], [1], [0, 0, 1, 1], [], []>} : vector<32x128xbf16>, vector<128x32xbf16>, vector<32x32xf32> -> vector<32x32xf32>
    %c0_32 = arith.constant 0 : index
    %c0_33 = arith.constant 0 : index
    %100 = vector.load %arg8[%c0_32, %c0_33] : memref<1x32xf32, #tpu.memory_space<vmem>>, vector<1x32xf32>
    %101 = vector.broadcast %100 : vector<1x32xf32> to vector<32x32xf32>
    %102 = arith.addf %99, %101 : vector<32x32xf32>
    %cst_34 = arith.constant 0.000000e+00 : f32
    %103 = vector.broadcast %cst_34 : f32 to vector<32x32xf32>
    %104 = arith.maximumf %102, %103 : vector<32x32xf32>
    %105 = arith.truncf %104 : vector<32x32xf32> to vector<32x32xbf16>
    %c0_35 = arith.constant 0 : index
    %c0_36 = arith.constant 0 : index
    %106 = vector.load %arg9[%c0_35, %c0_36] : memref<32x512xbf16, #tpu.memory_space<vmem>>, vector<32x512xbf16>
    %cst_37 = arith.constant dense<0.000000e+00> : vector<32x512xf32>
    %107 = tpu.matmul %105, %106, %cst_37 {dimension_numbers = #tpu.dot_dimension_numbers<[1], [0], [0], [1], [0, 0, 1, 1], [], []>} : vector<32x32xbf16>, vector<32x512xbf16>, vector<32x512xf32> -> vector<32x512xf32>
    %108 = arith.truncf %18 : vector<32x128xf32> to vector<32x128xbf16>
    %c0_38 = arith.constant 0 : index
    %c0_39 = arith.constant 0 : index
    %109 = vector.load %arg10[%c0_38, %c0_39] : memref<128x512xbf16, #tpu.memory_space<vmem>>, vector<128x512xbf16>
    %cst_40 = arith.constant dense<0.000000e+00> : vector<32x512xf32>
    %110 = tpu.matmul %108, %109, %cst_40 {dimension_numbers = #tpu.dot_dimension_numbers<[1], [0], [0], [1], [0, 0, 1, 1], [], []>} : vector<32x128xbf16>, vector<128x512xbf16>, vector<32x512xf32> -> vector<32x512xf32>
    %111 = arith.addf %107, %110 : vector<32x512xf32>
    %112 = arith.truncf %111 : vector<32x512xf32> to vector<32x512xbf16>
    %113 = vector.extract_strided_slice %112 {offsets = [0, 0], sizes = [32, 128], strides = [1, 1]} : vector<32x512xbf16> to vector<32x128xbf16>
    %114 = vector.extract_strided_slice %112 {offsets = [0, 128], sizes = [32, 128], strides = [1, 1]} : vector<32x512xbf16> to vector<32x128xbf16>
    %115 = vector.extract_strided_slice %112 {offsets = [0, 256], sizes = [32, 128], strides = [1, 1]} : vector<32x512xbf16> to vector<32x128xbf16>
    %116 = vector.extract_strided_slice %112 {offsets = [0, 384], sizes = [32, 128], strides = [1, 1]} : vector<32x512xbf16> to vector<32x128xbf16>
    %117 = tpu.concatenate %113, %114, %115, %116 in 0 : vector<32x128xbf16>, vector<32x128xbf16>, vector<32x128xbf16>, vector<32x128xbf16> -> vector<128x128xbf16>
    %cst_41 = arith.constant dense<0.000000e+00> : vector<32x128xf32>
    %118 = tpu.matmul %90, %117, %cst_41 {dimension_numbers = #tpu.dot_dimension_numbers<[1], [0], [0], [1], [0, 0, 1, 1], [], []>} : vector<32x128xbf16>, vector<128x128xbf16>, vector<32x128xf32> -> vector<32x128xf32>
    %c0_42 = arith.constant 0 : index
    %c0_43 = arith.constant 0 : index
    %119 = vector.load %arg11[%c0_42, %c0_43] : memref<1x128xf32, #tpu.memory_space<vmem>>, vector<1x128xf32>
    %120 = vector.broadcast %119 : vector<1x128xf32> to vector<32x128xf32>
    %121 = arith.addf %118, %120 : vector<32x128xf32>
    %cst_44 = arith.constant 0.000000e+00 : f32
    %122 = vector.broadcast %cst_44 : f32 to vector<32x128xf32>
    %123 = arith.maximumf %121, %122 : vector<32x128xf32>
    %124 = arith.truncf %123 : vector<32x128xf32> to vector<32x128xbf16>
    %125 = tpu.transpose %123, [1, 0] : vector<32x128xf32> -> vector<128x32xf32>
    %126 = arith.truncf %125 : vector<128x32xf32> to vector<128x32xbf16>
    %c0_45 = arith.constant 0 : index
    %c0_46 = arith.constant 0 : index
    %127 = vector.load %arg12[%c0_45, %c0_46] : memref<128x512xbf16, #tpu.memory_space<vmem>>, vector<128x512xbf16>
    %cst_47 = arith.constant dense<0.000000e+00> : vector<32x512xf32>
    %128 = tpu.matmul %124, %127, %cst_47 {dimension_numbers = #tpu.dot_dimension_numbers<[1], [0], [0], [1], [0, 0, 1, 1], [], []>} : vector<32x128xbf16>, vector<128x512xbf16>, vector<32x512xf32> -> vector<32x512xf32>
    %129 = arith.truncf %128 : vector<32x512xf32> to vector<32x512xbf16>
    %130 = vector.extract_strided_slice %129 {offsets = [0, 0], sizes = [32, 128], strides = [1, 1]} : vector<32x512xbf16> to vector<32x128xbf16>
    %cst_48 = arith.constant dense<0.000000e+00> : vector<32x32xf32>
    %131 = tpu.matmul %130, %126, %cst_48 {dimension_numbers = #tpu.dot_dimension_numbers<[1], [0], [0], [1], [0, 0, 1, 1], [], []>} : vector<32x128xbf16>, vector<128x32xbf16>, vector<32x32xf32> -> vector<32x32xf32>
    %132 = arith.addf %131, %4 : vector<32x32xf32>
    %cst_49 = arith.constant dense<0xFF800000> : vector<32xf32>
    %133 = vector.multi_reduction <maximumf>, %132, %cst_49 [0] : vector<32x32xf32> to vector<32xf32>
    %134 = vector.shape_cast %133 : vector<32xf32> to vector<1x32xf32>
    %135 = vector.broadcast %134 : vector<1x32xf32> to vector<32x32xf32>
    %136 = arith.subf %132, %135 : vector<32x32xf32>
    %137 = math.exp %136 : vector<32x32xf32>
    %cst_50 = arith.constant dense<0.000000e+00> : vector<32xf32>
    %138 = vector.multi_reduction <add>, %137, %cst_50 [0] : vector<32x32xf32> to vector<32xf32>
    %139 = vector.shape_cast %138 : vector<32xf32> to vector<1x32xf32>
    %140 = tpu.reciprocal %139 {approx = true} : vector<1x32xf32> -> vector<1x32xf32>
    %141 = vector.broadcast %140 : vector<1x32xf32> to vector<32x32xf32>
    %142 = arith.mulf %137, %141 : vector<32x32xf32>
    %143 = vector.extract_strided_slice %3 {offsets = [0, 0], sizes = [32, 32], strides = [1, 1]} : vector<32x128xbf16> to vector<32x32xbf16>
    %144 = arith.extf %143 : vector<32x32xbf16> to vector<32x32xf32>
    %145 = arith.maximumf %144, %142 : vector<32x32xf32>
    %146 = vector.extract_strided_slice %129 {offsets = [0, 128], sizes = [32, 128], strides = [1, 1]} : vector<32x512xbf16> to vector<32x128xbf16>
    %cst_51 = arith.constant dense<0.000000e+00> : vector<32x32xf32>
    %147 = tpu.matmul %146, %126, %cst_51 {dimension_numbers = #tpu.dot_dimension_numbers<[1], [0], [0], [1], [0, 0, 1, 1], [], []>} : vector<32x128xbf16>, vector<128x32xbf16>, vector<32x32xf32> -> vector<32x32xf32>
    %148 = arith.addf %147, %4 : vector<32x32xf32>
    %cst_52 = arith.constant dense<0xFF800000> : vector<32xf32>
    %149 = vector.multi_reduction <maximumf>, %148, %cst_52 [0] : vector<32x32xf32> to vector<32xf32>
    %150 = vector.shape_cast %149 : vector<32xf32> to vector<1x32xf32>
    %151 = vector.broadcast %150 : vector<1x32xf32> to vector<32x32xf32>
    %152 = arith.subf %148, %151 : vector<32x32xf32>
    %153 = math.exp %152 : vector<32x32xf32>
    %cst_53 = arith.constant dense<0.000000e+00> : vector<32xf32>
    %154 = vector.multi_reduction <add>, %153, %cst_53 [0] : vector<32x32xf32> to vector<32xf32>
    %155 = vector.shape_cast %154 : vector<32xf32> to vector<1x32xf32>
    %156 = tpu.reciprocal %155 {approx = true} : vector<1x32xf32> -> vector<1x32xf32>
    %157 = vector.broadcast %156 : vector<1x32xf32> to vector<32x32xf32>
    %158 = arith.mulf %153, %157 : vector<32x32xf32>
    %159 = vector.extract_strided_slice %3 {offsets = [0, 32], sizes = [32, 32], strides = [1, 1]} : vector<32x128xbf16> to vector<32x32xbf16>
    %160 = arith.extf %159 : vector<32x32xbf16> to vector<32x32xf32>
    %161 = arith.maximumf %160, %158 : vector<32x32xf32>
    %162 = vector.extract_strided_slice %129 {offsets = [0, 256], sizes = [32, 128], strides = [1, 1]} : vector<32x512xbf16> to vector<32x128xbf16>
    %cst_54 = arith.constant dense<0.000000e+00> : vector<32x32xf32>
    %163 = tpu.matmul %162, %126, %cst_54 {dimension_numbers = #tpu.dot_dimension_numbers<[1], [0], [0], [1], [0, 0, 1, 1], [], []>} : vector<32x128xbf16>, vector<128x32xbf16>, vector<32x32xf32> -> vector<32x32xf32>
    %164 = arith.addf %163, %4 : vector<32x32xf32>
    %cst_55 = arith.constant dense<0xFF800000> : vector<32xf32>
    %165 = vector.multi_reduction <maximumf>, %164, %cst_55 [0] : vector<32x32xf32> to vector<32xf32>
    %166 = vector.shape_cast %165 : vector<32xf32> to vector<1x32xf32>
    %167 = vector.broadcast %166 : vector<1x32xf32> to vector<32x32xf32>
    %168 = arith.subf %164, %167 : vector<32x32xf32>
    %169 = math.exp %168 : vector<32x32xf32>
    %cst_56 = arith.constant dense<0.000000e+00> : vector<32xf32>
    %170 = vector.multi_reduction <add>, %169, %cst_56 [0] : vector<32x32xf32> to vector<32xf32>
    %171 = vector.shape_cast %170 : vector<32xf32> to vector<1x32xf32>
    %172 = tpu.reciprocal %171 {approx = true} : vector<1x32xf32> -> vector<1x32xf32>
    %173 = vector.broadcast %172 : vector<1x32xf32> to vector<32x32xf32>
    %174 = arith.mulf %169, %173 : vector<32x32xf32>
    %175 = vector.extract_strided_slice %3 {offsets = [0, 64], sizes = [32, 32], strides = [1, 1]} : vector<32x128xbf16> to vector<32x32xbf16>
    %176 = arith.extf %175 : vector<32x32xbf16> to vector<32x32xf32>
    %177 = arith.maximumf %176, %174 : vector<32x32xf32>
    %178 = vector.extract_strided_slice %129 {offsets = [0, 384], sizes = [32, 128], strides = [1, 1]} : vector<32x512xbf16> to vector<32x128xbf16>
    %cst_57 = arith.constant dense<0.000000e+00> : vector<32x32xf32>
    %179 = tpu.matmul %178, %126, %cst_57 {dimension_numbers = #tpu.dot_dimension_numbers<[1], [0], [0], [1], [0, 0, 1, 1], [], []>} : vector<32x128xbf16>, vector<128x32xbf16>, vector<32x32xf32> -> vector<32x32xf32>
    %180 = arith.addf %179, %4 : vector<32x32xf32>
    %cst_58 = arith.constant dense<0xFF800000> : vector<32xf32>
    %181 = vector.multi_reduction <maximumf>, %180, %cst_58 [0] : vector<32x32xf32> to vector<32xf32>
    %182 = vector.shape_cast %181 : vector<32xf32> to vector<1x32xf32>
    %183 = vector.broadcast %182 : vector<1x32xf32> to vector<32x32xf32>
    %184 = arith.subf %180, %183 : vector<32x32xf32>
    %185 = math.exp %184 : vector<32x32xf32>
    %cst_59 = arith.constant dense<0.000000e+00> : vector<32xf32>
    %186 = vector.multi_reduction <add>, %185, %cst_59 [0] : vector<32x32xf32> to vector<32xf32>
    %187 = vector.shape_cast %186 : vector<32xf32> to vector<1x32xf32>
    %188 = tpu.reciprocal %187 {approx = true} : vector<1x32xf32> -> vector<1x32xf32>
    %189 = vector.broadcast %188 : vector<1x32xf32> to vector<32x32xf32>
    %190 = arith.mulf %185, %189 : vector<32x32xf32>
    %191 = vector.extract_strided_slice %3 {offsets = [0, 96], sizes = [32, 32], strides = [1, 1]} : vector<32x128xbf16> to vector<32x32xbf16>
    %192 = arith.extf %191 : vector<32x32xbf16> to vector<32x32xf32>
    %193 = arith.maximumf %192, %190 : vector<32x32xf32>
    %194 = tpu.concatenate %145, %161, %177, %193 in 1 : vector<32x32xf32>, vector<32x32xf32>, vector<32x32xf32>, vector<32x32xf32> -> vector<32x128xf32>
    %195 = arith.truncf %194 : vector<32x128xf32> to vector<32x128xbf16>
    %196 = arith.truncf %104 : vector<32x32xf32> to vector<32x32xbf16>
    %c0_60 = arith.constant 0 : index
    %c0_61 = arith.constant 0 : index
    %197 = vector.load %arg13[%c0_60, %c0_61] : memref<32x128xbf16, #tpu.memory_space<vmem>>, vector<32x128xbf16>
    %cst_62 = arith.constant dense<0.000000e+00> : vector<32x128xf32>
    %198 = tpu.matmul %196, %197, %cst_62 {dimension_numbers = #tpu.dot_dimension_numbers<[1], [0], [0], [1], [0, 0, 1, 1], [], []>} : vector<32x32xbf16>, vector<32x128xbf16>, vector<32x128xf32> -> vector<32x128xf32>
    %199 = arith.truncf %198 : vector<32x128xf32> to vector<32x128xbf16>
    %200 = vector.extract_strided_slice %199 {offsets = [0, 0], sizes = [32, 32], strides = [1, 1]} : vector<32x128xbf16> to vector<32x32xbf16>
    %201 = vector.extract_strided_slice %199 {offsets = [0, 32], sizes = [32, 32], strides = [1, 1]} : vector<32x128xbf16> to vector<32x32xbf16>
    %202 = vector.extract_strided_slice %199 {offsets = [0, 64], sizes = [32, 32], strides = [1, 1]} : vector<32x128xbf16> to vector<32x32xbf16>
    %203 = vector.extract_strided_slice %199 {offsets = [0, 96], sizes = [32, 32], strides = [1, 1]} : vector<32x128xbf16> to vector<32x32xbf16>
    %204 = tpu.concatenate %200, %201, %202, %203 in 0 : vector<32x32xbf16>, vector<32x32xbf16>, vector<32x32xbf16>, vector<32x32xbf16> -> vector<128x32xbf16>
    %cst_63 = arith.constant dense<0.000000e+00> : vector<32x32xf32>
    %205 = tpu.matmul %195, %204, %cst_63 {dimension_numbers = #tpu.dot_dimension_numbers<[1], [0], [0], [1], [0, 0, 1, 1], [], []>} : vector<32x128xbf16>, vector<128x32xbf16>, vector<32x32xf32> -> vector<32x32xf32>
    %c0_64 = arith.constant 0 : index
    %c0_65 = arith.constant 0 : index
    %206 = vector.load %arg14[%c0_64, %c0_65] : memref<1x32xf32, #tpu.memory_space<vmem>>, vector<1x32xf32>
    %207 = vector.broadcast %206 : vector<1x32xf32> to vector<32x32xf32>
    %208 = arith.addf %205, %207 : vector<32x32xf32>
    %cst_66 = arith.constant 0.000000e+00 : f32
    %209 = vector.broadcast %cst_66 : f32 to vector<32x32xf32>
    %210 = arith.maximumf %208, %209 : vector<32x32xf32>
    %c0_67 = arith.constant 0 : index
    %c0_68 = arith.constant 0 : index
    %c0_69 = arith.constant 0 : index
    %211 = vector.load %arg15[%c0_67, %c0_68, %c0_69] : memref<1x32x32xf32, #tpu.memory_space<vmem>>, vector<1x32x32xf32>
    %212 = vector.shape_cast %211 : vector<1x32x32xf32> to vector<32x32xf32>
    %213 = vector.shape_cast %210 : vector<32x32xf32> to vector<1x32x32xf32>
    tpu.vector_store %arg15[%c0_67, %c0_68, %c0_69], %213 {strides = array<i32>} : memref<1x32x32xf32, #tpu.memory_space<vmem>>, vector<1x32x32xf32>,
    %cst_70 = arith.constant 1.000000e+00 : f32
    %214 = vector.broadcast %cst_70 : f32 to vector<1x32xf32>
    %cst_71 = arith.constant dense<0.000000e+00> : vector<1x32xf32>
    %215 = tpu.matmul %214, %210, %cst_71 {dimension_numbers = #tpu.dot_dimension_numbers<[1], [0], [0], [1], [0, 0, 1, 1], [], []>} : vector<1x32xf32>, vector<32x32xf32>, vector<1x32xf32> -> vector<1x32xf32>
    %c0_72 = arith.constant 0 : index
    %c0_73 = arith.constant 0 : index
    %c0_74 = arith.constant 0 : index
    %216 = vector.load %arg16[%c0_72, %c0_73, %c0_74] : memref<1x1x32xf32, #tpu.memory_space<vmem>>, vector<1x1x32xf32>
    %217 = vector.shape_cast %216 : vector<1x1x32xf32> to vector<1x32xf32>
    %218 = vector.shape_cast %215 : vector<1x32xf32> to vector<1x1x32xf32>
    tpu.vector_store %arg16[%c0_72, %c0_73, %c0_74], %218 {strides = array<i32>} : memref<1x1x32xf32, #tpu.memory_space<vmem>>, vector<1x1x32xf32>,
    return
  }
  func.func @transform_0(%arg0: i32) -> (i32, i32, i32) {
    %c0_i32 = arith.constant 0 : i32
    %c0_i32_0 = arith.constant 0 : i32
    %c0_i32_1 = arith.constant 0 : i32
    return %arg0, %c0_i32, %c0_i32_0 : i32, i32, i32
  }
  func.func @transform_1(%arg0: i32) -> (i32, i32, i32) {
    %c0_i32 = arith.constant 0 : i32
    %c0_i32_0 = arith.constant 0 : i32
    %c0_i32_1 = arith.constant 0 : i32
    return %arg0, %c0_i32, %c0_i32_0 : i32, i32, i32
  }
  func.func @transform_2(%arg0: i32) -> (i32, i32) {
    %c0_i32 = arith.constant 0 : i32
    %c0_i32_0 = arith.constant 0 : i32
    %c0_i32_1 = arith.constant 0 : i32
    return %c0_i32, %c0_i32_0 : i32, i32
  }
  func.func @transform_3(%arg0: i32) -> (i32, i32) {
    %c0_i32 = arith.constant 0 : i32
    %c0_i32_0 = arith.constant 0 : i32
    %c0_i32_1 = arith.constant 0 : i32
    return %c0_i32, %c0_i32_0 : i32, i32
  }
  func.func @transform_4(%arg0: i32) -> (i32, i32) {
    %c0_i32 = arith.constant 0 : i32
    %c0_i32_0 = arith.constant 0 : i32
    %c0_i32_1 = arith.constant 0 : i32
    return %c0_i32, %c0_i32_0 : i32, i32
  }
  func.func @transform_5(%arg0: i32) -> (i32, i32) {
    %c0_i32 = arith.constant 0 : i32
    %c0_i32_0 = arith.constant 0 : i32
    %c0_i32_1 = arith.constant 0 : i32
    return %c0_i32, %c0_i32_0 : i32, i32
  }
  func.func @transform_6(%arg0: i32) -> (i32, i32) {
    %c0_i32 = arith.constant 0 : i32
    %c0_i32_0 = arith.constant 0 : i32
    %c0_i32_1 = arith.constant 0 : i32
    return %c0_i32, %c0_i32_0 : i32, i32
  }
  func.func @transform_7(%arg0: i32) -> (i32, i32) {
    %c0_i32 = arith.constant 0 : i32
    %c0_i32_0 = arith.constant 0 : i32
    %c0_i32_1 = arith.constant 0 : i32
    return %c0_i32, %c0_i32_0 : i32, i32
  }
  func.func @transform_8(%arg0: i32) -> (i32, i32) {
    %c0_i32 = arith.constant 0 : i32
    %c0_i32_0 = arith.constant 0 : i32
    %c0_i32_1 = arith.constant 0 : i32
    return %c0_i32, %c0_i32_0 : i32, i32
  }
  func.func @transform_9(%arg0: i32) -> (i32, i32) {
    %c0_i32 = arith.constant 0 : i32
    %c0_i32_0 = arith.constant 0 : i32
    %c0_i32_1 = arith.constant 0 : i32
    return %c0_i32, %c0_i32_0 : i32, i32
  }
  func.func @transform_10(%arg0: i32) -> (i32, i32) {
    %c0_i32 = arith.constant 0 : i32
    %c0_i32_0 = arith.constant 0 : i32
    %c0_i32_1 = arith.constant 0 : i32
    return %c0_i32, %c0_i32_0 : i32, i32
  }
  func.func @transform_11(%arg0: i32) -> (i32, i32) {
    %c0_i32 = arith.constant 0 : i32
    %c0_i32_0 = arith.constant 0 : i32
    %c0_i32_1 = arith.constant 0 : i32
    return %c0_i32, %c0_i32_0 : i32, i32
  }
  func.func @transform_12(%arg0: i32) -> (i32, i32) {
    %c0_i32 = arith.constant 0 : i32
    %c0_i32_0 = arith.constant 0 : i32
    %c0_i32_1 = arith.constant 0 : i32
    return %c0_i32, %c0_i32_0 : i32, i32
  }
  func.func @transform_13(%arg0: i32) -> (i32, i32) {
    %c0_i32 = arith.constant 0 : i32
    %c0_i32_0 = arith.constant 0 : i32
    %c0_i32_1 = arith.constant 0 : i32
    return %c0_i32, %c0_i32_0 : i32, i32
  }
  func.func @transform_14(%arg0: i32) -> (i32, i32, i32) {
    %c0_i32 = arith.constant 0 : i32
    %c0_i32_0 = arith.constant 0 : i32
    %c0_i32_1 = arith.constant 0 : i32
    return %arg0, %c0_i32, %c0_i32_0 : i32, i32, i32
  }
  func.func @transform_15(%arg0: i32) -> (i32, i32, i32) {
    %c0_i32 = arith.constant 0 : i32
    %c0_i32_0 = arith.constant 0 : i32
    %c0_i32_1 = arith.constant 0 : i32
    return %arg0, %c0_i32, %c0_i32_0 : i32, i32, i32
  }
}

</mosaic_0001>

<llo_original>
// kernel: tpu_custom_call.1
$region0: #{tpu_custom_call.1}
  #allocation0 [shape = 'u32[]', space=smem, size = 0x4, offset = 0x4, fixed_abs, tag = 'smem constant byte address 0x4 - core index']
  #allocation1 [shape = 'u32[144,128]{1,0:T(1,128)}', space=vmem, size = 0x12000, scoped, tag = 'internal scratch']
  %s0 = inlined_call_operand.vmem [shape: bf16[2,32,16], index: 0, kind: input, shape index: {}]
  %s1 = inlined_call_operand.hbm [shape: bf16[2,32,128], index: 1, kind: input, shape index: {}]
  %s2 = inlined_call_operand.hbm [shape: f32[32,32], index: 2, kind: input, shape index: {}]
  %s3 = inlined_call_operand.hbm [shape: bf16[16,512], index: 3, kind: input, shape index: {}]
  %s4 = inlined_call_operand.vmem [shape: f32[1,128], index: 4, kind: input, shape index: {}]
  %s5 = inlined_call_operand.hbm [shape: bf16[128,512], index: 5, kind: input, shape index: {}]
  %s6 = inlined_call_operand.hbm [shape: bf16[16,128], index: 6, kind: input, shape index: {}]
  %s7 = inlined_call_operand.vmem [shape: f32[1,32], index: 7, kind: input, shape index: {}]
  %s8 = inlined_call_operand.vmem [shape: bf16[32,512], index: 8, kind: input, shape index: {}]
  %s9 = inlined_call_operand.hbm [shape: bf16[128,512], index: 9, kind: input, shape index: {}]
  %s10 = inlined_call_operand.vmem [shape: f32[1,128], index: 10, kind: input, shape index: {}]
  %s11 = inlined_call_operand.hbm [shape: bf16[128,512], index: 11, kind: input, shape index: {}]
  %s12 = inlined_call_operand.vmem [shape: bf16[32,128], index: 12, kind: input, shape index: {}]
  %s13 = inlined_call_operand.vmem [shape: f32[1,32], index: 13, kind: input, shape index: {}]
  %s14 = inlined_call_operand.hbm [shape: f32[2,32,32], index: 14, kind: output, shape index: {0}]
  %s15 = inlined_call_operand.hbm [shape: f32[2,1,32], index: 15, kind: output, shape index: {1}]
  %16 = xla_tuple %s14, %s15
  %s17 = sld [smem:[#allocation0]]
  $region125: #{tpu_custom_call.1} parent=0
    _
  %s19 = ssub.s32 1, %s17
  %s20 = scalar_select 0, %s19, %s17
  $region1: #{tpu_custom_call.1} parent=0
    #allocation2 [shape = 'u8[16384]{0}', space=vmem, size = 0x4000, scoped, tag = 'input window, operand 1']
    #allocation3 [shape = 's32[2]{0}', space=sflag, size = 0x8, scoped, tag = 'scoped memory for tpu_custom_call.1']
    #allocation4 [shape = 's32[2]{0}', space=sflag, size = 0x8, scoped, tag = 'scoped memory for tpu_custom_call.1']
    #allocation5 [shape = 'u8[16384]{0}', space=vmem, size = 0x4000, scoped, tag = 'input window, operand 2, single buffered']
    #allocation6 [shape = 's32[1]{0}', space=sflag, size = 0x4, scoped, tag = 'scoped memory for tpu_custom_call.1']
    #allocation7 [shape = 'u8[16384]{0}', space=vmem, size = 0x4000, scoped, tag = 'input window, operand 3, single buffered']
    #allocation8 [shape = 'u8[131072]{0}', space=vmem, size = 0x20000, scoped, tag = 'input window, operand 5, single buffered']
    #allocation9 [shape = 's32[1]{0}', space=sflag, size = 0x4, scoped, tag = 'scoped memory for tpu_custom_call.1']
    #allocation10 [shape = 'u8[4096]{0}', space=vmem, size = 0x1000, scoped, tag = 'input window, operand 6, single buffered']
    #allocation11 [shape = 'u8[131072]{0}', space=vmem, size = 0x20000, scoped, tag = 'input window, operand 9, single buffered']
    #allocation12 [shape = 's32[1]{0}', space=sflag, size = 0x4, scoped, tag = 'scoped memory for tpu_custom_call.1']
    #allocation13 [shape = 'u8[131072]{0}', space=vmem, size = 0x20000, scoped, tag = 'input window, operand 11, single buffered']
    #allocation14 [shape = 'u8[32768]{0}', space=vmem, size = 0x8000, scoped, tag = 'output window, operand 0']
    #allocation15 [shape = 'u8[1024]{0}', space=vmem, size = 0x400, scoped, tag = 'output window, operand 1']
    #allocation16 [shape = 's32[2]{0}', space=sflag, size = 0x8, scoped, tag = 'scoped memory for tpu_custom_call.1']
    %21 = vsyncpa [#allocation3], 0
    %s22 = scalar_lea.sflag [#allocation3], 1
    %23 = vsyncpa %s22, 0
    %24 = vsyncpa [#allocation6], 0
    %25 = vsyncpa [#allocation9], 0
    %26 = vsyncpa [#allocation12], 0
    %27 = vsyncpa [#allocation4], 0
    %s28 = scalar_lea.sflag [#allocation4], 1
    %29 = vsyncpa %s28, 0
    %30 = vsyncpa [#allocation16], 0
    %s31 = scalar_lea.sflag [#allocation16], 1
    %32 = vsyncpa %s31, 0
    loop: start=0, step=1, limit=4
    $region2: #{tpu_custom_call.1} parent=1 // loop_pre_header
      _
    $region3: #{tpu_custom_call.1} parent=1 // loop_header
      %s34 = sphi 0, %s38
      %p35 = scmp.ge.s32.totalorder %s34, 4
      %s44 = sphi 0, %s46
      %s47 = sphi 0, %s44
      %s48 = sphi 0, %s47
      %s64 = sphi 0, %s48
      %s70 = sphi 0, %s72
      %s73 = sphi 0, %s70
      %s74 = sphi 0, %s73
      %s90 = sphi 0, %s74
      %s94 = sphi 0, %s94
      %s96 = sphi 0, %s94
      %s97 = sphi 0, %s96
      %s111 = sphi 0, %s97
      %s115 = sphi 0, %s115
      %s117 = sphi 0, %s115
      %s118 = sphi 0, %s117
      %s132 = sphi 0, %s118
      %s136 = sphi 0, %s136
      %s138 = sphi 0, %s136
      %s139 = sphi 0, %s138
      %s153 = sphi 0, %s139
      %s157 = sphi 0, %s157
      %s159 = sphi 0, %s157
      %s160 = sphi 0, %s159
      %s174 = sphi 0, %s160
      %s178 = sphi 0, %s178
      %s180 = sphi 0, %s178
      %s181 = sphi 0, %s180
      %s195 = sphi 0, %s181
      %s199 = sphi 0, %s199
      %s201 = sphi 0, %s199
      %s202 = sphi 0, %s201
      %s216 = sphi 0, %s202
      %s220 = sphi 0, %s220
      %s222 = sphi 0, %s220
      %s223 = sphi 0, %s222
      %s237 = sphi 0, %s223
      %s241 = sphi 0, %s241
      %s243 = sphi 0, %s241
      %s244 = sphi 0, %s243
      %s258 = sphi 0, %s244
      %s262 = sphi 0, %s262
      %s264 = sphi 0, %s262
      %s265 = sphi 0, %s264
      %s279 = sphi 0, %s265
      %s283 = sphi 0, %s283
      %s285 = sphi 0, %s283
      %s286 = sphi 0, %s285
      %s300 = sphi 0, %s286
      %s304 = sphi 0, %s304
      %s306 = sphi 0, %s304
      %s307 = sphi 0, %s306
      %s321 = sphi 0, %s307
      %s325 = sphi 0, %s325
      %s327 = sphi 0, %s325
      %s328 = sphi 0, %s327
      %s342 = sphi 0, %s328
      %s348 = sphi 0, %s350
      %s351 = sphi 0, %s348
      %s352 = sphi 0, %s351
      %s368 = sphi 0, %s352
      %s374 = sphi 0, %s376
      %s377 = sphi 0, %s374
      %s378 = sphi 0, %s377
      %s394 = sphi 0, %s378
    $region4: #{tpu_custom_call.1} parent=1 // loop_header_branch
      %37 = sbr.rel (%p35) target = $region8
    $region5: #{tpu_custom_call.1} parent=1 // loop_body
      %s39 = ssub.s32 %s34, 1
      %s40 = ssub.s32 %s34, 2
      %s41 = sadd.s32 %s34, 1
      %s42 = ssub.s32 %s34, %s41
      %p43 = scmp.eq.s32.totalorder %s42, 0
      %s45 = sadd.s32 %s44, 1
      %s46 = scalar_select %p43, %s44, %s45
      %p49 = pneg %p43
      %p50 = scmp.eq.s32.totalorder %s34, 1
      %p51 = por %p49, %p50
      %p52 = scmp.ne.s32.totalorder %s44, %s47
      %p53 = scmp.eq.s32.totalorder %s34, 0
      %p54 = por %p52, %p53
      %p55 = scmp.ne.s32.totalorder %s44, %s47
      %p56 = scmp.eq.s32.totalorder %s39, 1
      %p57 = por %p55, %p56
      %p58 = scmp.ne.s32.totalorder %s47, %s48
      %p59 = scmp.eq.s32.totalorder %s39, 0
      %p60 = por %p58, %p59
      %p61 = scmp.ne.s32.totalorder %s47, %s48
      %p62 = scmp.eq.s32.totalorder %s40, 1
      %p63 = por %p61, %p62
      %p65 = scmp.ne.s32.totalorder %s48, %s64
      %p66 = scmp.eq.s32.totalorder %s40, 0
      %p67 = por %p65, %p66
      %s68 = ssub.s32 %s34, %s41
      %p69 = scmp.eq.s32.totalorder %s68, 0
      %s71 = sadd.s32 %s70, 1
      %s72 = scalar_select %p69, %s70, %s71
      %p75 = pneg %p69
      %p76 = scmp.eq.s32.totalorder %s34, 1
      %p77 = por %p75, %p76
      %p78 = scmp.ne.s32.totalorder %s70, %s73
      %p79 = scmp.eq.s32.totalorder %s34, 0
      %p80 = por %p78, %p79
      %p81 = scmp.ne.s32.totalorder %s70, %s73
      %p82 = scmp.eq.s32.totalorder %s39, 1
      %p83 = por %p81, %p82
      %p84 = scmp.ne.s32.totalorder %s73, %s74
      %p85 = scmp.eq.s32.totalorder %s39, 0
      %p86 = por %p84, %p85
      %p87 = scmp.ne.s32.totalorder %s73, %s74
      %p88 = scmp.eq.s32.totalorder %s40, 1
      %p89 = por %p87, %p88
      %p91 = scmp.ne.s32.totalorder %s74, %s90
      %p92 = scmp.eq.s32.totalorder %s40, 0
      %p93 = por %p91, %p92
      %s95 = sadd.s32 %s94, 1
      %p98 = scmp.eq.s32.totalorder %s34, 1
      %p99 = scmp.ne.s32.totalorder %s94, %s96
      %p100 = scmp.eq.s32.totalorder %s34, 0
      %p101 = por %p99, %p100
      %p102 = scmp.ne.s32.totalorder %s94, %s96
      %p103 = scmp.eq.s32.totalorder %s39, 1
      %p104 = por %p102, %p103
      %p105 = scmp.ne.s32.totalorder %s96, %s97
      %p106 = scmp.eq.s32.totalorder %s39, 0
      %p107 = por %p105, %p106
      %p108 = scmp.ne.s32.totalorder %s96, %s97
      %p109 = scmp.eq.s32.totalorder %s40, 1
      %p110 = por %p108, %p109
      %p112 = scmp.ne.s32.totalorder %s97, %s111
      %p113 = scmp.eq.s32.totalorder %s40, 0
      %p114 = por %p112, %p113
      %s116 = sadd.s32 %s115, 1
      %p119 = scmp.eq.s32.totalorder %s34, 1
      %p120 = scmp.ne.s32.totalorder %s115, %s117
      %p121 = scmp.eq.s32.totalorder %s34, 0
      %p122 = por %p120, %p121
      %p123 = scmp.ne.s32.totalorder %s115, %s117
      %p124 = scmp.eq.s32.totalorder %s39, 1
      %p125 = por %p123, %p124
      %p126 = scmp.ne.s32.totalorder %s117, %s118
      %p127 = scmp.eq.s32.totalorder %s39, 0
      %p128 = por %p126, %p127
      %p129 = scmp.ne.s32.totalorder %s117, %s118
      %p130 = scmp.eq.s32.totalorder %s40, 1
      %p131 = por %p129, %p130
      %p133 = scmp.ne.s32.totalorder %s118, %s132
      %p134 = scmp.eq.s32.totalorder %s40, 0
      %p135 = por %p133, %p134
      %s137 = sadd.s32 %s136, 1
      %p140 = scmp.eq.s32.totalorder %s34, 1
      %p141 = scmp.ne.s32.totalorder %s136, %s138
      %p142 = scmp.eq.s32.totalorder %s34, 0
      %p143 = por %p141, %p142
      %p144 = scmp.ne.s32.totalorder %s136, %s138
      %p145 = scmp.eq.s32.totalorder %s39, 1
      %p146 = por %p144, %p145
      %p147 = scmp.ne.s32.totalorder %s138, %s139
      %p148 = scmp.eq.s32.totalorder %s39, 0
      %p149 = por %p147, %p148
      %p150 = scmp.ne.s32.totalorder %s138, %s139
      %p151 = scmp.eq.s32.totalorder %s40, 1
      %p152 = por %p150, %p151
      %p154 = scmp.ne.s32.totalorder %s139, %s153
      %p155 = scmp.eq.s32.totalorder %s40, 0
      %p156 = por %p154, %p155
      %s158 = sadd.s32 %s157, 1
      %p161 = scmp.eq.s32.totalorder %s34, 1
      %p162 = scmp.ne.s32.totalorder %s157, %s159
      %p163 = scmp.eq.s32.totalorder %s34, 0
      %p164 = por %p162, %p163
      %p165 = scmp.ne.s32.totalorder %s157, %s159
      %p166 = scmp.eq.s32.totalorder %s39, 1
      %p167 = por %p165, %p166
      %p168 = scmp.ne.s32.totalorder %s159, %s160
      %p169 = scmp.eq.s32.totalorder %s39, 0
      %p170 = por %p168, %p169
      %p171 = scmp.ne.s32.totalorder %s159, %s160
      %p172 = scmp.eq.s32.totalorder %s40, 1
      %p173 = por %p171, %p172
      %p175 = scmp.ne.s32.totalorder %s160, %s174
      %p176 = scmp.eq.s32.totalorder %s40, 0
      %p177 = por %p175, %p176
      %s179 = sadd.s32 %s178, 1
      %p182 = scmp.eq.s32.totalorder %s34, 1
      %p183 = scmp.ne.s32.totalorder %s178, %s180
      %p184 = scmp.eq.s32.totalorder %s34, 0
      %p185 = por %p183, %p184
      %p186 = scmp.ne.s32.totalorder %s178, %s180
      %p187 = scmp.eq.s32.totalorder %s39, 1
      %p188 = por %p186, %p187
      %p189 = scmp.ne.s32.totalorder %s180, %s181
      %p190 = scmp.eq.s32.totalorder %s39, 0
      %p191 = por %p189, %p190
      %p192 = scmp.ne.s32.totalorder %s180, %s181
      %p193 = scmp.eq.s32.totalorder %s40, 1
      %p194 = por %p192, %p193
      %p196 = scmp.ne.s32.totalorder %s181, %s195
      %p197 = scmp.eq.s32.totalorder %s40, 0
      %p198 = por %p196, %p197
      %s200 = sadd.s32 %s199, 1
      %p203 = scmp.eq.s32.totalorder %s34, 1
      %p204 = scmp.ne.s32.totalorder %s199, %s201
      %p205 = scmp.eq.s32.totalorder %s34, 0
      %p206 = por %p204, %p205
      %p207 = scmp.ne.s32.totalorder %s199, %s201
      %p208 = scmp.eq.s32.totalorder %s39, 1
      %p209 = por %p207, %p208
      %p210 = scmp.ne.s32.totalorder %s201, %s202
      %p211 = scmp.eq.s32.totalorder %s39, 0
      %p212 = por %p210, %p211
      %p213 = scmp.ne.s32.totalorder %s201, %s202
      %p214 = scmp.eq.s32.totalorder %s40, 1
      %p215 = por %p213, %p214
      %p217 = scmp.ne.s32.totalorder %s202, %s216
      %p218 = scmp.eq.s32.totalorder %s40, 0
      %p219 = por %p217, %p218
      %s221 = sadd.s32 %s220, 1
      %p224 = scmp.eq.s32.totalorder %s34, 1
      %p225 = scmp.ne.s32.totalorder %s220, %s222
      %p226 = scmp.eq.s32.totalorder %s34, 0
      %p227 = por %p225, %p226
      %p228 = scmp.ne.s32.totalorder %s220, %s222
      %p229 = scmp.eq.s32.totalorder %s39, 1
      %p230 = por %p228, %p229
      %p231 = scmp.ne.s32.totalorder %s222, %s223
      %p232 = scmp.eq.s32.totalorder %s39, 0
      %p233 = por %p231, %p232
      %p234 = scmp.ne.s32.totalorder %s222, %s223
      %p235 = scmp.eq.s32.totalorder %s40, 1
      %p236 = por %p234, %p235
      %p238 = scmp.ne.s32.totalorder %s223, %s237
      %p239 = scmp.eq.s32.totalorder %s40, 0
      %p240 = por %p238, %p239
      %s242 = sadd.s32 %s241, 1
      %p245 = scmp.eq.s32.totalorder %s34, 1
      %p246 = scmp.ne.s32.totalorder %s241, %s243
      %p247 = scmp.eq.s32.totalorder %s34, 0
      %p248 = por %p246, %p247
      %p249 = scmp.ne.s32.totalorder %s241, %s243
      %p250 = scmp.eq.s32.totalorder %s39, 1
      %p251 = por %p249, %p250
      %p252 = scmp.ne.s32.totalorder %s243, %s244
      %p253 = scmp.eq.s32.totalorder %s39, 0
      %p254 = por %p252, %p253
      %p255 = scmp.ne.s32.totalorder %s243, %s244
      %p256 = scmp.eq.s32.totalorder %s40, 1
      %p257 = por %p255, %p256
      %p259 = scmp.ne.s32.totalorder %s244, %s258
      %p260 = scmp.eq.s32.totalorder %s40, 0
      %p261 = por %p259, %p260
      %s263 = sadd.s32 %s262, 1
      %p266 = scmp.eq.s32.totalorder %s34, 1
      %p267 = scmp.ne.s32.totalorder %s262, %s264
      %p268 = scmp.eq.s32.totalorder %s34, 0
      %p269 = por %p267, %p268
      %p270 = scmp.ne.s32.totalorder %s262, %s264
      %p271 = scmp.eq.s32.totalorder %s39, 1
      %p272 = por %p270, %p271
      %p273 = scmp.ne.s32.totalorder %s264, %s265
      %p274 = scmp.eq.s32.totalorder %s39, 0
      %p275 = por %p273, %p274
      %p276 = scmp.ne.s32.totalorder %s264, %s265
      %p277 = scmp.eq.s32.totalorder %s40, 1
      %p278 = por %p276, %p277
      %p280 = scmp.ne.s32.totalorder %s265, %s279
      %p281 = scmp.eq.s32.totalorder %s40, 0
      %p282 = por %p280, %p281
      %s284 = sadd.s32 %s283, 1
      %p287 = scmp.eq.s32.totalorder %s34, 1
      %p288 = scmp.ne.s32.totalorder %s283, %s285
      %p289 = scmp.eq.s32.totalorder %s34, 0
      %p290 = por %p288, %p289
      %p291 = scmp.ne.s32.totalorder %s283, %s285
      %p292 = scmp.eq.s32.totalorder %s39, 1
      %p293 = por %p291, %p292
      %p294 = scmp.ne.s32.totalorder %s285, %s286
      %p295 = scmp.eq.s32.totalorder %s39, 0
      %p296 = por %p294, %p295
      %p297 = scmp.ne.s32.totalorder %s285, %s286
      %p298 = scmp.eq.s32.totalorder %s40, 1
      %p299 = por %p297, %p298
      %p301 = scmp.ne.s32.totalorder %s286, %s300
      %p302 = scmp.eq.s32.totalorder %s40, 0
      %p303 = por %p301, %p302
      %s305 = sadd.s32 %s304, 1
      %p308 = scmp.eq.s32.totalorder %s34, 1
      %p309 = scmp.ne.s32.totalorder %s304, %s306
      %p310 = scmp.eq.s32.totalorder %s34, 0
      %p311 = por %p309, %p310
      %p312 = scmp.ne.s32.totalorder %s304, %s306
      %p313 = scmp.eq.s32.totalorder %s39, 1
      %p314 = por %p312, %p313
      %p315 = scmp.ne.s32.totalorder %s306, %s307
      %p316 = scmp.eq.s32.totalorder %s39, 0
      %p317 = por %p315, %p316
      %p318 = scmp.ne.s32.totalorder %s306, %s307
      %p319 = scmp.eq.s32.totalorder %s40, 1
      %p320 = por %p318, %p319
      %p322 = scmp.ne.s32.totalorder %s307, %s321
      %p323 = scmp.eq.s32.totalorder %s40, 0
      %p324 = por %p322, %p323
      %s326 = sadd.s32 %s325, 1
      %p329 = scmp.eq.s32.totalorder %s34, 1
      %p330 = scmp.ne.s32.totalorder %s325, %s327
      %p331 = scmp.eq.s32.totalorder %s34, 0
      %p332 = por %p330, %p331
      %p333 = scmp.ne.s32.totalorder %s325, %s327
      %p334 = scmp.eq.s32.totalorder %s39, 1
      %p335 = por %p333, %p334
      %p336 = scmp.ne.s32.totalorder %s327, %s328
      %p337 = scmp.eq.s32.totalorder %s39, 0
      %p338 = por %p336, %p337
      %p339 = scmp.ne.s32.totalorder %s327, %s328
      %p340 = scmp.eq.s32.totalorder %s40, 1
      %p341 = por %p339, %p340
      %p343 = scmp.ne.s32.totalorder %s328, %s342
      %p344 = scmp.eq.s32.totalorder %s40, 0
      %p345 = por %p343, %p344
      %s346 = ssub.s32 %s34, %s41
      %p347 = scmp.eq.s32.totalorder %s346, 0
      %s349 = sadd.s32 %s348, 1
      %s350 = scalar_select %p347, %s348, %s349
      %p353 = pneg %p347
      %p354 = scmp.eq.s32.totalorder %s34, 1
      %p355 = por %p353, %p354
      %p356 = scmp.ne.s32.totalorder %s348, %s351
      %p357 = scmp.eq.s32.totalorder %s34, 0
      %p358 = por %p356, %p357
      %p359 = scmp.ne.s32.totalorder %s348, %s351
      %p360 = scmp.eq.s32.totalorder %s39, 1
      %p361 = por %p359, %p360
      %p362 = scmp.ne.s32.totalorder %s351, %s352
      %p363 = scmp.eq.s32.totalorder %s39, 0
      %p364 = por %p362, %p363
      %p365 = scmp.ne.s32.totalorder %s351, %s352
      %p366 = scmp.eq.s32.totalorder %s40, 1
      %p367 = por %p365, %p366
      %p369 = scmp.ne.s32.totalorder %s352, %s368
      %p370 = scmp.eq.s32.totalorder %s40, 0
      %p371 = por %p369, %p370
      %s372 = ssub.s32 %s34, %s41
      %p373 = scmp.eq.s32.totalorder %s372, 0
      %s375 = sadd.s32 %s374, 1
      %s376 = scalar_select %p373, %s374, %s375
      %p379 = pneg %p373
      %p380 = scmp.eq.s32.totalorder %s34, 1
      %p381 = por %p379, %p380
      %p382 = scmp.ne.s32.totalorder %s374, %s377
      %p383 = scmp.eq.s32.totalorder %s34, 0
      %p384 = por %p382, %p383
      %p385 = scmp.ne.s32.totalorder %s374, %s377
      %p386 = scmp.eq.s32.totalorder %s39, 1
      %p387 = por %p385, %p386
      %p388 = scmp.ne.s32.totalorder %s377, %s378
      %p389 = scmp.eq.s32.totalorder %s39, 0
      %p390 = por %p388, %p389
      %p391 = scmp.ne.s32.totalorder %s377, %s378
      %p392 = scmp.eq.s32.totalorder %s40, 1
      %p393 = por %p391, %p392
      %p395 = scmp.ne.s32.totalorder %s378, %s394
      %p396 = scmp.eq.s32.totalorder %s40, 0
      %p397 = por %p395, %p396
      %p398 = scmp.le.s32.totalorder 1, %s34
      %p399 = scmp.lt.s32.totalorder %s34, 3
      %p400 = pnand %p398, %p399
      %p401 = pneg %p400
      // Predicated region
      $region9: #{tpu_custom_call.1} parent=5 // pred_check
        _
      $region10: #{tpu_custom_call.1} parent=5 // pred_check_branch
        %403 = sbr.rel (%p400) target = $region12
      $region11: #{tpu_custom_call.1} parent=5 // pred_region
        %s404 = ssub.s32 %s34, 1
        // Predicated region
        $region13: #{tpu_custom_call.1} parent=11 // pred_check
          %p405 = pneg %p107
        $region14: #{tpu_custom_call.1} parent=11 // pred_check_branch
          %407 = sbr.rel (%p405) target = $region16
        $region15: #{tpu_custom_call.1} parent=11 // pred_region
          %s409 = ssub.s32 512, 512
          %410 = vsyncadd [#allocation6], %s409
          %s411 = sshll.u32 [#allocation5], 4
          %s412 = int_to_ptr.vmem [resolvable:$true] %s411
          %417 = dma.hbm_to_vmem [thread:$0]  %s2, 512, %s412, [#allocation6], 128, 128, 8
        $region16: #{tpu_custom_call.1} parent=11 // pred_fallthru
          _
        // Predicated region
        $region17: #{tpu_custom_call.1} parent=11 // pred_check
          %p418 = pneg %p128
        $region18: #{tpu_custom_call.1} parent=11 // pred_check_branch
          %420 = sbr.rel (%p418) target = $region20
        $region19: #{tpu_custom_call.1} parent=11 // pred_region
          %s422 = ssub.s32 512, 512
          %423 = vsyncadd [#allocation6], %s422
          %s424 = sshll.u32 [#allocation7], 4
          %s425 = int_to_ptr.vmem [resolvable:$true] %s424
          %430 = dma.hbm_to_vmem [thread:$0]  %s3, 512, %s425, [#allocation6], 256, 256, 16
        $region20: #{tpu_custom_call.1} parent=11 // pred_fallthru
          _
        // Predicated region
        $region21: #{tpu_custom_call.1} parent=11 // pred_check
          %p431 = pneg %p149
        $region22: #{tpu_custom_call.1} parent=11 // pred_check_branch
          %433 = sbr.rel (%p431) target = $region24
        $region23: #{tpu_custom_call.1} parent=11 // pred_region
          _
        $region24: #{tpu_custom_call.1} parent=11 // pred_fallthru
          _
        // Predicated region
        $region25: #{tpu_custom_call.1} parent=11 // pred_check
          %p434 = pneg %p170
        $region26: #{tpu_custom_call.1} parent=11 // pred_check_branch
          %436 = sbr.rel (%p434) target = $region28
        $region27: #{tpu_custom_call.1} parent=11 // pred_region
          %s438 = ssub.s32 4096, 4096
          %439 = vsyncadd [#allocation9], %s438
          %s440 = sshll.u32 [#allocation8], 4
          %s441 = int_to_ptr.vmem [resolvable:$true] %s440
          %446 = dma.hbm_to_vmem [thread:$0]  %s5, 4096, %s441, [#allocation9], 256, 256, 16
        $region28: #{tpu_custom_call.1} parent=11 // pred_fallthru
          _
        // Predicated region
        $region29: #{tpu_custom_call.1} parent=11 // pred_check
          %p447 = pneg %p191
        $region30: #{tpu_custom_call.1} parent=11 // pred_check_branch
          %449 = sbr.rel (%p447) target = $region32
        $region31: #{tpu_custom_call.1} parent=11 // pred_region
          %s451 = ssub.s32 128, 128
          %452 = vsyncadd [#allocation9], %s451
          %s453 = sshll.u32 [#allocation10], 4
          %s454 = int_to_ptr.vmem [resolvable:$true] %s453
          %459 = dma.hbm_to_vmem [thread:$0]  %s6, 128, %s454, [#allocation9], 64, 64, 4
        $region32: #{tpu_custom_call.1} parent=11 // pred_fallthru
          _
        // Predicated region
        $region33: #{tpu_custom_call.1} parent=11 // pred_check
          %p460 = pneg %p212
        $region34: #{tpu_custom_call.1} parent=11 // pred_check_branch
          %462 = sbr.rel (%p460) target = $region36
        $region35: #{tpu_custom_call.1} parent=11 // pred_region
          _
        $region36: #{tpu_custom_call.1} parent=11 // pred_fallthru
          _
        // Predicated region
        $region37: #{tpu_custom_call.1} parent=11 // pred_check
          %p463 = pneg %p233
        $region38: #{tpu_custom_call.1} parent=11 // pred_check_branch
          %465 = sbr.rel (%p463) target = $region40
        $region39: #{tpu_custom_call.1} parent=11 // pred_region
          _
        $region40: #{tpu_custom_call.1} parent=11 // pred_fallthru
          _
        // Predicated region
        $region41: #{tpu_custom_call.1} parent=11 // pred_check
          %p466 = pneg %p254
        $region42: #{tpu_custom_call.1} parent=11 // pred_check_branch
          %468 = sbr.rel (%p466) target = $region44
        $region43: #{tpu_custom_call.1} parent=11 // pred_region
          %s470 = ssub.s32 4096, 4096
          %471 = vsyncadd [#allocation12], %s470
          %s472 = sshll.u32 [#allocation11], 4
          %s473 = int_to_ptr.vmem [resolvable:$true] %s472
          %478 = dma.hbm_to_vmem [thread:$0]  %s9, 4096, %s473, [#allocation12], 256, 256, 16
        $region44: #{tpu_custom_call.1} parent=11 // pred_fallthru
          _
        // Predicated region
        $region45: #{tpu_custom_call.1} parent=11 // pred_check
          %p479 = pneg %p275
        $region46: #{tpu_custom_call.1} parent=11 // pred_check_branch
          %481 = sbr.rel (%p479) target = $region48
        $region47: #{tpu_custom_call.1} parent=11 // pred_region
          _
        $region48: #{tpu_custom_call.1} parent=11 // pred_fallthru
          _
        // Predicated region
        $region49: #{tpu_custom_call.1} parent=11 // pred_check
          %p482 = pneg %p296
        $region50: #{tpu_custom_call.1} parent=11 // pred_check_branch
          %484 = sbr.rel (%p482) target = $region52
        $region51: #{tpu_custom_call.1} parent=11 // pred_region
          %s486 = ssub.s32 4096, 4096
          %487 = vsyncadd [#allocation12], %s486
          %s488 = sshll.u32 [#allocation13], 4
          %s489 = int_to_ptr.vmem [resolvable:$true] %s488
          %494 = dma.hbm_to_vmem [thread:$0]  %s11, 4096, %s489, [#allocation12], 256, 256, 16
        $region52: #{tpu_custom_call.1} parent=11 // pred_fallthru
          _
        // Predicated region
        $region53: #{tpu_custom_call.1} parent=11 // pred_check
          %p495 = pneg %p317
        $region54: #{tpu_custom_call.1} parent=11 // pred_check_branch
          %497 = sbr.rel (%p495) target = $region56
        $region55: #{tpu_custom_call.1} parent=11 // pred_region
          _
        $region56: #{tpu_custom_call.1} parent=11 // pred_fallthru
          _
        // Predicated region
        $region57: #{tpu_custom_call.1} parent=11 // pred_check
          %p498 = pneg %p338
        $region58: #{tpu_custom_call.1} parent=11 // pred_check_branch
          %500 = sbr.rel (%p498) target = $region60
        $region59: #{tpu_custom_call.1} parent=11 // pred_region
          _
        $region60: #{tpu_custom_call.1} parent=11 // pred_fallthru
          _
      $region12: #{tpu_custom_call.1} parent=5 // pred_fallthru
        _
      %p501 = scmp.lt.s32.totalorder %s34, 2
      // Predicated region
      $region61: #{tpu_custom_call.1} parent=5 // pred_check
        %p502 = pneg %p501
      $region62: #{tpu_custom_call.1} parent=5 // pred_check_branch
        %504 = sbr.rel (%p502) target = $region64
      $region63: #{tpu_custom_call.1} parent=5 // pred_region
        // Predicated region
        $region65: #{tpu_custom_call.1} parent=63 // pred_check
          %p505 = pneg %p54
        $region66: #{tpu_custom_call.1} parent=63 // pred_check_branch
          %507 = sbr.rel (%p505) target = $region68
        $region67: #{tpu_custom_call.1} parent=63 // pred_region
          %p508 = scmp.lt.s32.totalorder %s34, 1
          %s509 = scalar_select %p508, %s34, 1
          %s510 = smul.addr %s509, 4
          %s511 = smul.addr %s510, 4
          %s512 = scalar_lea.vmem %s0, %s511
        $region68: #{tpu_custom_call.1} parent=63 // pred_fallthru
          _
        // Predicated region
        $region69: #{tpu_custom_call.1} parent=63 // pred_check
          %p513 = pneg %p80
        $region70: #{tpu_custom_call.1} parent=63 // pred_check_branch
          %515 = sbr.rel (%p513) target = $region72
        $region71: #{tpu_custom_call.1} parent=63 // pred_region
          %s516 = sand.u32 %s70, 1
          %s517 = scalar_lea.sflag [#allocation3], %s516
          %s518 = sand.u32 %s70, 1
          %s519 = smul.addr %s518, 16
          %s520 = scalar_lea.vmem [#allocation2], %s519
          %s522 = ssub.s32 256, 256
          %523 = vsyncadd %s517, %s522
          %s524 = smul.addr %s34, 4
          %s525 = smul.addr %s524, 64
          %s526 = scalar_lea.hbm %s1, %s525
          %s527 = sshll.u32 %s520, 4
          %s528 = int_to_ptr.vmem [resolvable:$true] %s527
          %533 = dma.hbm_to_vmem [thread:$0]  %s526, 256, %s528, %s517, 64, 64, 4
        $region72: #{tpu_custom_call.1} parent=63 // pred_fallthru
          _
      $region64: #{tpu_custom_call.1} parent=5 // pred_fallthru
        _
      %p534 = scmp.le.s32.totalorder 1, %s34
      %p535 = scmp.lt.s32.totalorder %s34, 3
      %p536 = pnand %p534, %p535
      %p537 = pneg %p536
      // Predicated region
      $region73: #{tpu_custom_call.1} parent=5 // pred_check
        _
      $region74: #{tpu_custom_call.1} parent=5 // pred_check_branch
        %539 = sbr.rel (%p536) target = $region76
      $region75: #{tpu_custom_call.1} parent=5 // pred_region
        %s540 = ssub.s32 %s34, 1
        %s541 = sand.u32 %s73, 1
        %s542 = scalar_lea.sflag [#allocation3], %s541
        %s543 = sand.u32 %s73, 1
        %s544 = smul.addr %s543, 16
        %s545 = scalar_lea.vmem [#allocation2], %s544
        // Predicated region
        $region77: #{tpu_custom_call.1} parent=75 // pred_check
          %p546 = pneg %p86
        $region78: #{tpu_custom_call.1} parent=75 // pred_check_branch
          %548 = sbr.rel (%p546) target = $region80
        $region79: #{tpu_custom_call.1} parent=75 // pred_region
          %549 = dma.done %s542, 256
        $region80: #{tpu_custom_call.1} parent=75 // pred_fallthru
          _
        // Predicated region
        $region81: #{tpu_custom_call.1} parent=75 // pred_check
          %p550 = pneg %p107
        $region82: #{tpu_custom_call.1} parent=75 // pred_check_branch
          %552 = sbr.rel (%p550) target = $region84
        $region83: #{tpu_custom_call.1} parent=75 // pred_region
          %553 = dma.done [#allocation6], 512
        $region84: #{tpu_custom_call.1} parent=75 // pred_fallthru
          _
        // Predicated region
        $region85: #{tpu_custom_call.1} parent=75 // pred_check
          %p554 = pneg %p128
        $region86: #{tpu_custom_call.1} parent=75 // pred_check_branch
          %556 = sbr.rel (%p554) target = $region88
        $region87: #{tpu_custom_call.1} parent=75 // pred_region
          %557 = dma.done [#allocation6], 512
        $region88: #{tpu_custom_call.1} parent=75 // pred_fallthru
          _
        // Predicated region
        $region89: #{tpu_custom_call.1} parent=75 // pred_check
          %p558 = pneg %p170
        $region90: #{tpu_custom_call.1} parent=75 // pred_check_branch
          %560 = sbr.rel (%p558) target = $region92
        $region91: #{tpu_custom_call.1} parent=75 // pred_region
          %561 = dma.done [#allocation9], 4096
        $region92: #{tpu_custom_call.1} parent=75 // pred_fallthru
          _
        // Predicated region
        $region93: #{tpu_custom_call.1} parent=75 // pred_check
          %p562 = pneg %p191
        $region94: #{tpu_custom_call.1} parent=75 // pred_check_branch
          %564 = sbr.rel (%p562) target = $region96
        $region95: #{tpu_custom_call.1} parent=75 // pred_region
          %565 = dma.done [#allocation9], 128
        $region96: #{tpu_custom_call.1} parent=75 // pred_fallthru
          _
        // Predicated region
        $region97: #{tpu_custom_call.1} parent=75 // pred_check
          %p566 = pneg %p254
        $region98: #{tpu_custom_call.1} parent=75 // pred_check_branch
          %568 = sbr.rel (%p566) target = $region100
        $region99: #{tpu_custom_call.1} parent=75 // pred_region
          %569 = dma.done [#allocation12], 4096
        $region100: #{tpu_custom_call.1} parent=75 // pred_fallthru
          _
        // Predicated region
        $region101: #{tpu_custom_call.1} parent=75 // pred_check
          %p570 = pneg %p296
        $region102: #{tpu_custom_call.1} parent=75 // pred_check_branch
          %572 = sbr.rel (%p570) target = $region104
        $region103: #{tpu_custom_call.1} parent=75 // pred_region
          %573 = dma.done [#allocation12], 4096
        $region104: #{tpu_custom_call.1} parent=75 // pred_fallthru
          _
        %p574 = scmp.lt.s32.totalorder %s39, 1
        %s575 = scalar_select %p574, %s39, 1
        %s576 = smul.addr %s575, 4
        %s577 = smul.addr %s576, 4
        %s578 = scalar_lea.vmem %s0, %s577
        %p579 = pneg %p60
        %p580 = pneg %p57
        %s581 = sand.u32 %s73, 1
        %s582 = scalar_lea.sflag [#allocation3], %s581
        %s583 = sand.u32 %s73, 1
        %s584 = smul.addr %s583, 16
        %s585 = scalar_lea.vmem [#allocation2], %s584
        %p586 = pneg %p86
        %p587 = pneg %p83
        %p588 = pneg %p107
        %p589 = pneg %p104
        %p590 = pneg %p128
        %p591 = pneg %p125
        %p592 = pneg %p149
        %p593 = pneg %p146
        %p594 = pneg %p170
        %p595 = pneg %p167
        %p596 = pneg %p191
        %p597 = pneg %p188
        %p598 = pneg %p212
        %p599 = pneg %p209
        %p600 = pneg %p233
        %p601 = pneg %p230
        %p602 = pneg %p254
        %p603 = pneg %p251
        %p604 = pneg %p275
        %p605 = pneg %p272
        %p606 = pneg %p296
        %p607 = pneg %p293
        %p608 = pneg %p317
        %p609 = pneg %p314
        %p610 = pneg %p338
        %p611 = pneg %p335
        %p612 = pneg %p364
        %p613 = pneg %p361
        %s614 = sand.u32 %s351, 1
        %s615 = scalar_lea.sflag [#allocation4], %s614
        %s616 = sand.u32 %s351, 1
        %s617 = smul.addr %s616, 32
        %s618 = scalar_lea.vmem [#allocation14], %s617
        %p619 = pneg %p390
        %p620 = pneg %p387
        %s621 = sand.u32 %s377, 1
        %s622 = scalar_lea.sflag [#allocation16], %s621
        %s623 = sand.u32 %s377, 1
        %s624 = scalar_lea.vmem [#allocation15], %s623
        %p625 = scmp.lt.s32.totalorder %s39, 1
        %s626 = scalar_select %p625, %s39, 1
        %s627 = smul.addr %s626, 4
        %s628 = smul.addr %s627, 4
        %s629 = scalar_lea.vmem %s0, %s628
        %v631 = vld [vmem:[%s629] sm:$0xf]
        %v632 = vld [vmem:[%s629 + $0x4] sm:$0xf]
        %v633 = vld [vmem:[%s629 + $0x8] sm:$0xf]
        %v634 = vld [vmem:[%s629 + $0xc] sm:$0xf]
        %v635 = vld [vmem:[%s545] sm:$0xf]
        %v636 = vld [vmem:[%s545 + $0x4] sm:$0xf]
        %v637 = vld [vmem:[%s545 + $0x8] sm:$0xf]
        %v638 = vld [vmem:[%s545 + $0xc] sm:$0xf]
        %v639 = vld [vmem:[#allocation5] sm:$0xff]
        %v640 = vld [vmem:[#allocation5 + $0x8] sm:$0xff]
        %v641 = vld [vmem:[#allocation5 + $0x10] sm:$0xff]
        %v642 = vld [vmem:[#allocation5 + $0x18] sm:$0xff]
        %v643 = vld [vmem:[#allocation7] sm:$0xff]
        %v644 = vld [vmem:[#allocation7 + $0x8] sm:$0xff]
        %v645 = vld [vmem:[#allocation7 + $0x10] sm:$0xff]
        %v646 = vld [vmem:[#allocation7 + $0x18] sm:$0xff]
        %v651 = vunpack.c.l.b16 %v631
        %v652 = vunpack.c.l.b16 %v632
        %v653 = vunpack.c.l.b16 %v633
        %v654 = vunpack.c.l.b16 %v634
        %v655 = vpack.c.b16 %v652, %v651
        %v656 = vpack.c.b16 %v654, %v653
        %v661 = vunpack.c.l.b16 %v643
        %v662 = vunpack.c.h.b16 %v643
        %v663 = vunpack.c.l.b16 %v644
        %v664 = vunpack.c.h.b16 %v644
        %v665 = vunpack.c.l.b16 %v645
        %v666 = vunpack.c.h.b16 %v645
        %v667 = vunpack.c.l.b16 %v646
        %v668 = vunpack.c.h.b16 %v646
        %v669 = vpack.c.b16 %v665, %v661
        %v670 = vpack.c.b16 %v666, %v662
        %v671 = vpack.c.b16 %v667, %v663
        %v672 = vpack.c.b16 %v668, %v664
        %vm677 = vcmask 130048
        %v679 = vsel %vm677, %v655, 0
        %v682 = vsel %vm677, %v656, 0
        %684 = vmatprep.subr.bf16.mxu0 %v670
        %685 = vmatpush1.bf16.msra.mxu0 %v669
        %686 = vmatprep.subr.bf16.mxu0 0
        %687 = vmatpush1.bf16.msra.mxu0 0
        %688 = vmatprep.subr.bf16.mxu0 0
        %689 = vmatpush1.bf16.msra.mxu0 0
        %690 = vmatprep.subr.bf16.mxu0 0
        %691 = vmatpush1.bf16.msra.mxu0 0
        %692 = vmatprep.subr.bf16.mxu0 0
        %693 = vmatpush1.bf16.msra.mxu0 0
        %694 = vmatprep.subr.bf16.mxu0 0
        %695 = vmatpush1.bf16.msra.mxu0 0
        %696 = vmatprep.subr.bf16.mxu0 0
        %697 = vmatpush1.bf16.msra.mxu0 0
        %698 = vmatprep.subr.bf16.mxu0 0
        %699 = vmatpush1.bf16.msra.mxu0 0
        %700 = vmatprep.subr.bf16.mxu0 0
        %701 = vmatpush1.bf16.msra.mxu0 0
        %702 = vmatprep.subr.bf16.mxu0 0
        %703 = vmatpush1.bf16.msra.mxu0 0
        %704 = vmatprep.subr.bf16.mxu0 0
        %705 = vmatpush1.bf16.msra.mxu0 0
        %706 = vmatprep.subr.bf16.mxu0 0
        %707 = vmatpush1.bf16.msra.mxu0 0
        %708 = vmatprep.subr.bf16.mxu0 0
        %709 = vmatpush1.bf16.msra.mxu0 0
        %710 = vmatprep.subr.bf16.mxu0 0
        %711 = vmatpush1.bf16.msra.mxu0 0
        %712 = vmatprep.subr.bf16.mxu0 0
        %713 = vmatpush1.bf16.msra.mxu0 0
        %714 = vmatprep.subr.bf16.mxu0 0
        %715 = vmatpush1.bf16.msra.mxu0 0
        %716 = vmatprep.mubr.bf16.mxu0 0
        %717 = vmatmul.mubr.bf16.gmra.mrb[0].mxu0 %v679
        %v718 = vpop.f32.mrb[0].mxu0
        %v719 = vadd.f32 0.0, %v718
        %v720 = vpop.f32.mrb[0].mxu0
        %v721 = vadd.f32 0.0, %v720
        %v722 = vpop.f32.mrb[0].mxu0
        %v723 = vadd.f32 0.0, %v722
        %v724 = vpop.f32.mrb[0].mxu0
        %v725 = vadd.f32 0.0, %v724
        %726 = vmatprep.mubr.bf16.mxu0 0
        %727 = vmatmul.mubr.bf16.gmra.mrb[0].mxu0 %v682
        %v728 = vpop.f32.mrb[0].mxu0
        %v729 = vadd.f32 0.0, %v728
        %v730 = vpop.f32.mrb[0].mxu0
        %v731 = vadd.f32 0.0, %v730
        %v732 = vpop.f32.mrb[0].mxu0
        %v733 = vadd.f32 0.0, %v732
        %v734 = vpop.f32.mrb[0].mxu0
        %v735 = vadd.f32 0.0, %v734
        %736 = vdwg.mxu0
        %737 = vmatprep.subr.bf16.mxu0 %v672
        %738 = vmatpush1.bf16.msra.mxu0 %v671
        %739 = vmatprep.subr.bf16.mxu0 0
        %740 = vmatpush1.bf16.msra.mxu0 0
        %741 = vmatprep.subr.bf16.mxu0 0
        %742 = vmatpush1.bf16.msra.mxu0 0
        %743 = vmatprep.subr.bf16.mxu0 0
        %744 = vmatpush1.bf16.msra.mxu0 0
        %745 = vmatprep.subr.bf16.mxu0 0
        %746 = vmatpush1.bf16.msra.mxu0 0
        %747 = vmatprep.subr.bf16.mxu0 0
        %748 = vmatpush1.bf16.msra.mxu0 0
        %749 = vmatprep.subr.bf16.mxu0 0
        %750 = vmatpush1.bf16.msra.mxu0 0
        %751 = vmatprep.subr.bf16.mxu0 0
        %752 = vmatpush1.bf16.msra.mxu0 0
        %753 = vmatprep.subr.bf16.mxu0 0
        %754 = vmatpush1.bf16.msra.mxu0 0
        %755 = vmatprep.subr.bf16.mxu0 0
        %756 = vmatpush1.bf16.msra.mxu0 0
        %757 = vmatprep.subr.bf16.mxu0 0
        %758 = vmatpush1.bf16.msra.mxu0 0
        %759 = vmatprep.subr.bf16.mxu0 0
        %760 = vmatpush1.bf16.msra.mxu0 0
        %761 = vmatprep.subr.bf16.mxu0 0
        %762 = vmatpush1.bf16.msra.mxu0 0
        %763 = vmatprep.subr.bf16.mxu0 0
        %764 = vmatpush1.bf16.msra.mxu0 0
        %765 = vmatprep.subr.bf16.mxu0 0
        %766 = vmatpush1.bf16.msra.mxu0 0
        %767 = vmatprep.subr.bf16.mxu0 0
        %768 = vmatpush1.bf16.msra.mxu0 0
        %769 = vmatprep.mubr.bf16.mxu0 0
        %770 = vmatmul.mubr.bf16.gmra.mrb[0].mxu0 %v679
        %v771 = vpop.f32.mrb[0].mxu0
        %v772 = vadd.f32 0.0, %v771
        %v773 = vpop.f32.mrb[0].mxu0
        %v774 = vadd.f32 0.0, %v773
        %v775 = vpop.f32.mrb[0].mxu0
        %v776 = vadd.f32 0.0, %v775
        %v777 = vpop.f32.mrb[0].mxu0
        %v778 = vadd.f32 0.0, %v777
        %779 = vmatprep.mubr.bf16.mxu0 0
        %780 = vmatmul.mubr.bf16.gmra.mrb[0].mxu0 %v682
        %v781 = vpop.f32.mrb[0].mxu0
        %v782 = vadd.f32 0.0, %v781
        %v783 = vpop.f32.mrb[0].mxu0
        %v784 = vadd.f32 0.0, %v783
        %v785 = vpop.f32.mrb[0].mxu0
        %v786 = vadd.f32 0.0, %v785
        %v787 = vpop.f32.mrb[0].mxu0
        %v788 = vadd.f32 0.0, %v787
        %789 = vdwg.mxu0
        %v790 = vpack.c.bf16 %v723, %v719
        %v791 = vpack.c.bf16 %v725, %v721
        %v792 = vpack.c.bf16 %v776, %v772
        %v793 = vpack.c.bf16 %v778, %v774
        %v794 = vpack.c.bf16 %v733, %v729
        %v795 = vpack.c.bf16 %v735, %v731
        %v796 = vpack.c.bf16 %v786, %v782
        %v797 = vpack.c.bf16 %v788, %v784
        %v798 = vld [vmem:[%s4] sm:$0x1]
        %v800 = vlaneseq
        %v801 = vshrl.u32 %v800, 7
        %v802 = vsub.s32 0, %v801
        %v803 = vrot.slane %v798, %v802
        %v809 = vunpack.c.l.b16 %v635
        %v810 = vunpack.c.l.b16 %v636
        %v811 = vunpack.c.l.b16 %v637
        %v812 = vunpack.c.l.b16 %v638
        %v813 = vpack.c.b16 %v810, %v809
        %v814 = vpack.c.b16 %v812, %v811
        %817 = vmatprep.subr.bf16.mxu0 0
        %818 = vmatpush1.bf16.msra.mxu0 %v790
        %819 = vmatprep.subr.bf16.mxu0 0
        %820 = vmatpush1.bf16.msra.mxu0 %v794
        %821 = vmatprep.subr.bf16.mxu0 0
        %822 = vmatpush1.bf16.msra.mxu0 %v791
        %823 = vmatprep.subr.bf16.mxu0 0
        %824 = vmatpush1.bf16.msra.mxu0 %v795
        %825 = vmatprep.subr.bf16.mxu0 0
        %826 = vmatpush1.bf16.msra.mxu0 %v792
        %827 = vmatprep.subr.bf16.mxu0 0
        %828 = vmatpush1.bf16.msra.mxu0 %v796
        %829 = vmatprep.subr.bf16.mxu0 0
        %830 = vmatpush1.bf16.msra.mxu0 %v793
        %831 = vmatprep.subr.bf16.mxu0 0
        %832 = vmatpush1.bf16.msra.mxu0 %v797
        %833 = vmatprep.subr.bf16.mxu0 0
        %834 = vmatpush1.bf16.msra.mxu0 0
        %835 = vmatprep.subr.bf16.mxu0 0
        %836 = vmatpush1.bf16.msra.mxu0 0
        %837 = vmatprep.subr.bf16.mxu0 0
        %838 = vmatpush1.bf16.msra.mxu0 0
        %839 = vmatprep.subr.bf16.mxu0 0
        %840 = vmatpush1.bf16.msra.mxu0 0
        %841 = vmatprep.subr.bf16.mxu0 0
        %842 = vmatpush1.bf16.msra.mxu0 0
        %843 = vmatprep.subr.bf16.mxu0 0
        %844 = vmatpush1.bf16.msra.mxu0 0
        %845 = vmatprep.subr.bf16.mxu0 0
        %846 = vmatpush1.bf16.msra.mxu0 0
        %847 = vmatprep.subr.bf16.mxu0 0
        %848 = vmatpush1.bf16.msra.mxu0 0
        %849 = vmatprep.mubr.bf16.mxu0 0
        %850 = vmatmul.mubr.bf16.gmra.mrb[0].mxu0 %v813
        %v851 = vpop.f32.mrb[0].mxu0
        %v852 = vadd.f32 %v803, %v851
        %v853 = vpop.f32.mrb[0].mxu0
        %v854 = vpop.f32.mrb[0].mxu0
        %v855 = vadd.f32 %v803, %v854
        %v856 = vpop.f32.mrb[0].mxu0
        %857 = vmatprep.mubr.bf16.mxu0 0
        %858 = vmatmul.mubr.bf16.gmra.mrb[0].mxu0 %v814
        %v859 = vpop.f32.mrb[0].mxu0
        %v860 = vadd.f32 %v803, %v859
        %v861 = vpop.f32.mrb[0].mxu0
        %v862 = vpop.f32.mrb[0].mxu0
        %v863 = vadd.f32 %v803, %v862
        %v864 = vpop.f32.mrb[0].mxu0
        %865 = vdwg.mxu0
        %v866 = vmax.f32 %v852, 0.0
        %v867 = vmax.f32 %v855, 0.0
        %v868 = vmax.f32 %v860, 0.0
        %v869 = vmax.f32 %v863, 0.0
        %v870 = vpack.c.bf16 %v867, %v866
        %v871 = vpack.c.bf16 %v869, %v868
        %872 = vxpose.xlu0.b32.start [1/16] %v866, 128
        %873 = vxpose.xlu0.b32.cont [2/16] %v867, 128
        %874 = vxpose.xlu0.b32.cont [3/16] %v868, 128
        %875 = vxpose.xlu0.b32.cont [4/16] %v869, 128
        %876 = vxpose.xlu0.b32.cont [5/16] 0.0, 128
        %877 = vxpose.xlu0.b32.cont [6/16] 0.0, 128
        %878 = vxpose.xlu0.b32.cont [7/16] 0.0, 128
        %879 = vxpose.xlu0.b32.cont [8/16] 0.0, 128
        %880 = vxpose.xlu0.b32.cont [9/16] 0.0, 128
        %881 = vxpose.xlu0.b32.cont [10/16] 0.0, 128
        %882 = vxpose.xlu0.b32.cont [11/16] 0.0, 128
        %883 = vxpose.xlu0.b32.cont [12/16] 0.0, 128
        %884 = vxpose.xlu0.b32.cont [13/16] 0.0, 128
        %885 = vxpose.xlu0.b32.cont [14/16] 0.0, 128
        %886 = vxpose.xlu0.b32.cont [15/16] 0.0, 128
        %887 = vxpose.xlu0.b32.end [16/16] 0.0, 128
        %v888 = vpop.trf.xlu0
        %v889 = vpop.trf.xlu0
        %v890 = vpop.trf.xlu0
        %v891 = vpop.trf.xlu0
        %v892 = vpop.trf.xlu0
        %v893 = vpop.trf.xlu0
        %v894 = vpop.trf.xlu0
        %v895 = vpop.trf.xlu0
        %v896 = vpop.trf.xlu0
        %v897 = vpop.trf.xlu0
        %v898 = vpop.trf.xlu0
        %v899 = vpop.trf.xlu0
        %v900 = vpop.trf.xlu0
        %v901 = vpop.trf.xlu0
        %v902 = vpop.trf.xlu0
        %v903 = vpop.trf.xlu0
        %v904 = vpack.c.bf16 %v889, %v888
        %v905 = vpack.c.bf16 %v891, %v890
        %v906 = vpack.c.bf16 %v893, %v892
        %v907 = vpack.c.bf16 %v895, %v894
        %v908 = vpack.c.bf16 %v897, %v896
        %v909 = vpack.c.bf16 %v899, %v898
        %v910 = vpack.c.bf16 %v901, %v900
        %v911 = vpack.c.bf16 %v903, %v902
        %v912 = vld [vmem:[#allocation8] sm:$0xff]
        %v913 = vld [vmem:[#allocation8 + $0x8] sm:$0xff]
        %v914 = vld [vmem:[#allocation8 + $0x10] sm:$0xff]
        %v915 = vld [vmem:[#allocation8 + $0x18] sm:$0xff]
        %v916 = vld [vmem:[#allocation8 + $0x20] sm:$0xff]
        %v917 = vld [vmem:[#allocation8 + $0x28] sm:$0xff]
        %v918 = vld [vmem:[#allocation8 + $0x30] sm:$0xff]
        %v919 = vld [vmem:[#allocation8 + $0x38] sm:$0xff]
        %v920 = vld [vmem:[#allocation8 + $0x40] sm:$0xff]
        %v921 = vld [vmem:[#allocation8 + $0x48] sm:$0xff]
        %v922 = vld [vmem:[#allocation8 + $0x50] sm:$0xff]
        %v923 = vld [vmem:[#allocation8 + $0x58] sm:$0xff]
        %v924 = vld [vmem:[#allocation8 + $0x60] sm:$0xff]
        %v925 = vld [vmem:[#allocation8 + $0x68] sm:$0xff]
        %v926 = vld [vmem:[#allocation8 + $0x70] sm:$0xff]
        %v927 = vld [vmem:[#allocation8 + $0x78] sm:$0xff]
        %v928 = vld [vmem:[#allocation8 + $0x80] sm:$0xff]
        %v929 = vld [vmem:[#allocation8 + $0x88] sm:$0xff]
        %v930 = vld [vmem:[#allocation8 + $0x90] sm:$0xff]
        %v931 = vld [vmem:[#allocation8 + $0x98] sm:$0xff]
        %v932 = vld [vmem:[#allocation8 + $0xa0] sm:$0xff]
        %v933 = vld [vmem:[#allocation8 + $0xa8] sm:$0xff]
        %v934 = vld [vmem:[#allocation8 + $0xb0] sm:$0xff]
        %v935 = vld [vmem:[#allocation8 + $0xb8] sm:$0xff]
        %v936 = vld [vmem:[#allocation8 + $0xc0] sm:$0xff]
        %v937 = vld [vmem:[#allocation8 + $0xc8] sm:$0xff]
        %v938 = vld [vmem:[#allocation8 + $0xd0] sm:$0xff]
        %v939 = vld [vmem:[#allocation8 + $0xd8] sm:$0xff]
        %v940 = vld [vmem:[#allocation8 + $0xe0] sm:$0xff]
        %v941 = vld [vmem:[#allocation8 + $0xe8] sm:$0xff]
        %v942 = vld [vmem:[#allocation8 + $0xf0] sm:$0xff]
        %v943 = vld [vmem:[#allocation8 + $0xf8] sm:$0xff]
        %v976 = vunpack.c.l.b16 %v912
        %v977 = vunpack.c.h.b16 %v912
        %v978 = vunpack.c.l.b16 %v913
        %v979 = vunpack.c.h.b16 %v913
        %v980 = vunpack.c.l.b16 %v914
        %v981 = vunpack.c.h.b16 %v914
        %v982 = vunpack.c.l.b16 %v915
        %v983 = vunpack.c.h.b16 %v915
        %v984 = vunpack.c.l.b16 %v916
        %v985 = vunpack.c.h.b16 %v916
        %v986 = vunpack.c.l.b16 %v917
        %v987 = vunpack.c.h.b16 %v917
        %v988 = vunpack.c.l.b16 %v918
        %v989 = vunpack.c.h.b16 %v918
        %v990 = vunpack.c.l.b16 %v919
        %v991 = vunpack.c.h.b16 %v919
        %v992 = vunpack.c.l.b16 %v920
        %v993 = vunpack.c.h.b16 %v920
        %v994 = vunpack.c.l.b16 %v921
        %v995 = vunpack.c.h.b16 %v921
        %v996 = vunpack.c.l.b16 %v922
        %v997 = vunpack.c.h.b16 %v922
        %v998 = vunpack.c.l.b16 %v923
        %v999 = vunpack.c.h.b16 %v923
        %v1000 = vunpack.c.l.b16 %v924
        %v1001 = vunpack.c.h.b16 %v924
        %v1002 = vunpack.c.l.b16 %v925
        %v1003 = vunpack.c.h.b16 %v925
        %v1004 = vunpack.c.l.b16 %v926
        %v1005 = vunpack.c.h.b16 %v926
        %v1006 = vunpack.c.l.b16 %v927
        %v1007 = vunpack.c.h.b16 %v927
        %v1008 = vunpack.c.l.b16 %v928
        %v1009 = vunpack.c.h.b16 %v928
        %v1010 = vunpack.c.l.b16 %v929
        %v1011 = vunpack.c.h.b16 %v929
        %v1012 = vunpack.c.l.b16 %v930
        %v1013 = vunpack.c.h.b16 %v930
        %v1014 = vunpack.c.l.b16 %v931
        %v1015 = vunpack.c.h.b16 %v931
        %v1016 = vunpack.c.l.b16 %v932
        %v1017 = vunpack.c.h.b16 %v932
        %v1018 = vunpack.c.l.b16 %v933
        %v1019 = vunpack.c.h.b16 %v933
        %v1020 = vunpack.c.l.b16 %v934
        %v1021 = vunpack.c.h.b16 %v934
        %v1022 = vunpack.c.l.b16 %v935
        %v1023 = vunpack.c.h.b16 %v935
        %v1024 = vunpack.c.l.b16 %v936
        %v1025 = vunpack.c.h.b16 %v936
        %v1026 = vunpack.c.l.b16 %v937
        %v1027 = vunpack.c.h.b16 %v937
        %v1028 = vunpack.c.l.b16 %v938
        %v1029 = vunpack.c.h.b16 %v938
        %v1030 = vunpack.c.l.b16 %v939
        %v1031 = vunpack.c.h.b16 %v939
        %v1032 = vunpack.c.l.b16 %v940
        %v1033 = vunpack.c.h.b16 %v940
        %v1034 = vunpack.c.l.b16 %v941
        %v1035 = vunpack.c.h.b16 %v941
        %v1036 = vunpack.c.l.b16 %v942
        %v1037 = vunpack.c.h.b16 %v942
        %v1038 = vunpack.c.l.b16 %v943
        %v1039 = vunpack.c.h.b16 %v943
        %v1040 = vpack.c.b16 %v980, %v976
        %v1041 = vpack.c.b16 %v981, %v977
        %v1042 = vpack.c.b16 %v982, %v978
        %v1043 = vpack.c.b16 %v983, %v979
        %v1044 = vpack.c.b16 %v988, %v984
        %v1045 = vpack.c.b16 %v989, %v985
        %v1046 = vpack.c.b16 %v990, %v986
        %v1047 = vpack.c.b16 %v991, %v987
        %v1048 = vpack.c.b16 %v996, %v992
        %v1049 = vpack.c.b16 %v997, %v993
        %v1050 = vpack.c.b16 %v998, %v994
        %v1051 = vpack.c.b16 %v999, %v995
        %v1052 = vpack.c.b16 %v1004, %v1000
        %v1053 = vpack.c.b16 %v1005, %v1001
        %v1054 = vpack.c.b16 %v1006, %v1002
        %v1055 = vpack.c.b16 %v1007, %v1003
        %v1056 = vpack.c.b16 %v1012, %v1008
        %v1057 = vpack.c.b16 %v1013, %v1009
        %v1058 = vpack.c.b16 %v1014, %v1010
        %v1059 = vpack.c.b16 %v1015, %v1011
        %v1060 = vpack.c.b16 %v1020, %v1016
        %v1061 = vpack.c.b16 %v1021, %v1017
        %v1062 = vpack.c.b16 %v1022, %v1018
        %v1063 = vpack.c.b16 %v1023, %v1019
        %v1064 = vpack.c.b16 %v1028, %v1024
        %v1065 = vpack.c.b16 %v1029, %v1025
        %v1066 = vpack.c.b16 %v1030, %v1026
        %v1067 = vpack.c.b16 %v1031, %v1027
        %v1068 = vpack.c.b16 %v1036, %v1032
        %v1069 = vpack.c.b16 %v1037, %v1033
        %v1070 = vpack.c.b16 %v1038, %v1034
        %v1071 = vpack.c.b16 %v1039, %v1035
        %1104 = vmatprep.subr.bf16.mxu0 %v1041
        %1105 = vmatpush1.bf16.msra.mxu0 %v1040
        %1106 = vmatprep.subr.bf16.mxu0 %v1045
        %1107 = vmatpush1.bf16.msra.mxu0 %v1044
        %1108 = vmatprep.subr.bf16.mxu0 %v1049
        %1109 = vmatpush1.bf16.msra.mxu0 %v1048
        %1110 = vmatprep.subr.bf16.mxu0 %v1053
        %1111 = vmatpush1.bf16.msra.mxu0 %v1052
        %1112 = vmatprep.subr.bf16.mxu0 %v1057
        %1113 = vmatpush1.bf16.msra.mxu0 %v1056
        %1114 = vmatprep.subr.bf16.mxu0 %v1061
        %1115 = vmatpush1.bf16.msra.mxu0 %v1060
        %1116 = vmatprep.subr.bf16.mxu0 %v1065
        %1117 = vmatpush1.bf16.msra.mxu0 %v1064
        %1118 = vmatprep.subr.bf16.mxu0 %v1069
        %1119 = vmatpush1.bf16.msra.mxu0 %v1068
        %1120 = vmatprep.subr.bf16.mxu0 0
        %1121 = vmatpush1.bf16.msra.mxu0 0
        %1122 = vmatprep.subr.bf16.mxu0 0
        %1123 = vmatpush1.bf16.msra.mxu0 0
        %1124 = vmatprep.subr.bf16.mxu0 0
        %1125 = vmatpush1.bf16.msra.mxu0 0
        %1126 = vmatprep.subr.bf16.mxu0 0
        %1127 = vmatpush1.bf16.msra.mxu0 0
        %1128 = vmatprep.subr.bf16.mxu0 0
        %1129 = vmatpush1.bf16.msra.mxu0 0
        %1130 = vmatprep.subr.bf16.mxu0 0
        %1131 = vmatpush1.bf16.msra.mxu0 0
        %1132 = vmatprep.subr.bf16.mxu0 0
        %1133 = vmatpush1.bf16.msra.mxu0 0
        %1134 = vmatprep.subr.bf16.mxu0 0
        %1135 = vmatpush1.bf16.msra.mxu0 0
        %1136 = vmatprep.mubr.bf16.mxu0 0
        %1137 = vmatmul.mubr.bf16.gmra.mrb[0].mxu0 %v870
        %v1138 = vpop.f32.mrb[0].mxu0
        %v1139 = vadd.f32 0.0, %v1138
        %v1140 = vpop.f32.mrb[0].mxu0
        %v1141 = vadd.f32 0.0, %v1140
        %v1142 = vpop.f32.mrb[0].mxu0
        %v1143 = vadd.f32 0.0, %v1142
        %v1144 = vpop.f32.mrb[0].mxu0
        %v1145 = vadd.f32 0.0, %v1144
        %1146 = vmatprep.mubr.bf16.mxu0 0
        %1147 = vmatmul.mubr.bf16.gmra.mrb[0].mxu0 %v871
        %v1148 = vpop.f32.mrb[0].mxu0
        %v1149 = vadd.f32 0.0, %v1148
        %v1150 = vpop.f32.mrb[0].mxu0
        %v1151 = vadd.f32 0.0, %v1150
        %v1152 = vpop.f32.mrb[0].mxu0
        %v1153 = vadd.f32 0.0, %v1152
        %v1154 = vpop.f32.mrb[0].mxu0
        %v1155 = vadd.f32 0.0, %v1154
        %1156 = vdwg.mxu0
        %1157 = vmatprep.subr.bf16.mxu0 %v1043
        %1158 = vmatpush1.bf16.msra.mxu0 %v1042
        %1159 = vmatprep.subr.bf16.mxu0 %v1047
        %1160 = vmatpush1.bf16.msra.mxu0 %v1046
        %1161 = vmatprep.subr.bf16.mxu0 %v1051
        %1162 = vmatpush1.bf16.msra.mxu0 %v1050
        %1163 = vmatprep.subr.bf16.mxu0 %v1055
        %1164 = vmatpush1.bf16.msra.mxu0 %v1054
        %1165 = vmatprep.subr.bf16.mxu0 %v1059
        %1166 = vmatpush1.bf16.msra.mxu0 %v1058
        %1167 = vmatprep.subr.bf16.mxu0 %v1063
        %1168 = vmatpush1.bf16.msra.mxu0 %v1062
        %1169 = vmatprep.subr.bf16.mxu0 %v1067
        %1170 = vmatpush1.bf16.msra.mxu0 %v1066
        %1171 = vmatprep.subr.bf16.mxu0 %v1071
        %1172 = vmatpush1.bf16.msra.mxu0 %v1070
        %1173 = vmatprep.subr.bf16.mxu0 0
        %1174 = vmatpush1.bf16.msra.mxu0 0
        %1175 = vmatprep.subr.bf16.mxu0 0
        %1176 = vmatpush1.bf16.msra.mxu0 0
        %1177 = vmatprep.subr.bf16.mxu0 0
        %1178 = vmatpush1.bf16.msra.mxu0 0
        %1179 = vmatprep.subr.bf16.mxu0 0
        %1180 = vmatpush1.bf16.msra.mxu0 0
        %1181 = vmatprep.subr.bf16.mxu0 0
        %1182 = vmatpush1.bf16.msra.mxu0 0
        %1183 = vmatprep.subr.bf16.mxu0 0
        %1184 = vmatpush1.bf16.msra.mxu0 0
        %1185 = vmatprep.subr.bf16.mxu0 0
        %1186 = vmatpush1.bf16.msra.mxu0 0
        %1187 = vmatprep.subr.bf16.mxu0 0
        %1188 = vmatpush1.bf16.msra.mxu0 0
        %1189 = vmatprep.mubr.bf16.mxu0 0
        %1190 = vmatmul.mubr.bf16.gmra.mrb[0].mxu0 %v870
        %v1191 = vpop.f32.mrb[0].mxu0
        %v1192 = vadd.f32 0.0, %v1191
        %v1193 = vpop.f32.mrb[0].mxu0
        %v1194 = vadd.f32 0.0, %v1193
        %v1195 = vpop.f32.mrb[0].mxu0
        %v1196 = vadd.f32 0.0, %v1195
        %v1197 = vpop.f32.mrb[0].mxu0
        %v1198 = vadd.f32 0.0, %v1197
        %1199 = vmatprep.mubr.bf16.mxu0 0
        %1200 = vmatmul.mubr.bf16.gmra.mrb[0].mxu0 %v871
        %v1201 = vpop.f32.mrb[0].mxu0
        %v1202 = vadd.f32 0.0, %v1201
        %v1203 = vpop.f32.mrb[0].mxu0
        %v1204 = vadd.f32 0.0, %v1203
        %v1205 = vpop.f32.mrb[0].mxu0
        %v1206 = vadd.f32 0.0, %v1205
        %v1207 = vpop.f32.mrb[0].mxu0
        %v1208 = vadd.f32 0.0, %v1207
        %1209 = vdwg.mxu0
        %v1210 = vpack.c.bf16 %v1143, %v1139
        %v1211 = vpack.c.bf16 %v1145, %v1141
        %v1212 = vpack.c.bf16 %v1196, %v1192
        %v1213 = vpack.c.bf16 %v1198, %v1194
        %v1214 = vpack.c.bf16 %v1153, %v1149
        %v1215 = vpack.c.bf16 %v1155, %v1151
        %v1216 = vpack.c.bf16 %v1206, %v1202
        %v1217 = vpack.c.bf16 %v1208, %v1204
        %1218 = vmatprep.subr.bf16.mxu0 0
        %1219 = vmatpush1.bf16.msra.mxu0 %v904
        %1220 = vmatprep.subr.bf16.mxu0 0
        %1221 = vmatpush1.bf16.msra.mxu0 %v905
        %1222 = vmatprep.subr.bf16.mxu0 0
        %1223 = vmatpush1.bf16.msra.mxu0 %v906
        %1224 = vmatprep.subr.bf16.mxu0 0
        %1225 = vmatpush1.bf16.msra.mxu0 %v907
        %1226 = vmatprep.subr.bf16.mxu0 0
        %1227 = vmatpush1.bf16.msra.mxu0 %v908
        %1228 = vmatprep.subr.bf16.mxu0 0
        %1229 = vmatpush1.bf16.msra.mxu0 %v909
        %1230 = vmatprep.subr.bf16.mxu0 0
        %1231 = vmatpush1.bf16.msra.mxu0 %v910
        %1232 = vmatprep.subr.bf16.mxu0 0
        %1233 = vmatpush1.bf16.msra.mxu0 %v911
        %1234 = vmatprep.subr.bf16.mxu0 0
        %1235 = vmatpush1.bf16.msra.mxu0 0
        %1236 = vmatprep.subr.bf16.mxu0 0
        %1237 = vmatpush1.bf16.msra.mxu0 0
        %1238 = vmatprep.subr.bf16.mxu0 0
        %1239 = vmatpush1.bf16.msra.mxu0 0
        %1240 = vmatprep.subr.bf16.mxu0 0
        %1241 = vmatpush1.bf16.msra.mxu0 0
        %1242 = vmatprep.subr.bf16.mxu0 0
        %1243 = vmatpush1.bf16.msra.mxu0 0
        %1244 = vmatprep.subr.bf16.mxu0 0
        %1245 = vmatpush1.bf16.msra.mxu0 0
        %1246 = vmatprep.subr.bf16.mxu0 0
        %1247 = vmatpush1.bf16.msra.mxu0 0
        %1248 = vmatprep.subr.bf16.mxu0 0
        %1249 = vmatpush1.bf16.msra.mxu0 0
        %1250 = vmatprep.mubr.bf16.mxu0 0
        %1251 = vmatmul.mubr.bf16.gmra.mrb[0].mxu0 %v1210
        %v1252 = vpop.f32.mrb[0].mxu0
        %v1253 = vadd.f32 %v639, %v1252
        %v1254 = vpop.f32.mrb[0].mxu0
        %v1255 = vpop.f32.mrb[0].mxu0
        %v1256 = vadd.f32 %v640, %v1255
        %v1257 = vpop.f32.mrb[0].mxu0
        %1258 = vmatprep.mubr.bf16.mxu0 0
        %1259 = vmatmul.mubr.bf16.gmra.mrb[0].mxu0 %v1214
        %v1260 = vpop.f32.mrb[0].mxu0
        %v1261 = vadd.f32 %v641, %v1260
        %v1262 = vpop.f32.mrb[0].mxu0
        %v1263 = vpop.f32.mrb[0].mxu0
        %v1264 = vadd.f32 %v642, %v1263
        %v1265 = vpop.f32.mrb[0].mxu0
        %1266 = vdwg.mxu0
        %vm1267 = vcmask 261120
        %v1268 = vsel %vm1267, %v1253, -inf
        %v1269 = vsel %vm1267, %v1256, -inf
        %v1270 = vsel %vm1267, %v1261, -inf
        %v1271 = vsel %vm1267, %v1264, -inf
        %v1272 = vmax.f32 %v1268, %v1269
        %v1273 = vmax.f32 %v1270, %v1271
        %v1274 = vmax.f32 %v1272, %v1273
        %v1275 = vrot.slane %v1274, 4
        %v1276 = vmax.f32 %v1274, %v1275
        %v1277 = vrot.slane %v1276, 2
        %v1278 = vmax.f32 %v1276, %v1277
        %v1279 = vrot.slane %v1278, 1
        %v1280 = vmax.f32 %v1278, %v1279
        %v1281 = vsub.f32 %v1253, %v1280
        %v1282 = vsub.f32 %v1256, %v1280
        %v1283 = vsub.f32 %v1261, %v1280
        %v1284 = vsub.f32 %v1264, %v1280
        %v1285 = vmul.f32 %v1281, 1.442695
        %v1286 = vpow.pop %v1285
        %v1287 = vmul.f32 %v1282, 1.442695
        %v1288 = vpow.pop %v1287
        %v1289 = vmul.f32 %v1283, 1.442695
        %v1290 = vpow.pop %v1289
        %v1291 = vmul.f32 %v1284, 1.442695
        %v1292 = vpow.pop %v1291
        %v1293 = vsel %vm1267, %v1286, 0.0
        %v1294 = vsel %vm1267, %v1288, 0.0
        %v1295 = vadd.f32 %v1293, %v1294
        %v1296 = vsel %vm1267, %v1290, 0.0
        %v1297 = vadd.f32 %v1295, %v1296
        %v1298 = vsel %vm1267, %v1292, 0.0
        %v1299 = vadd.f32 %v1297, %v1298
        %v1300 = vrot.slane %v1299, 4
        %v1301 = vadd.f32 %v1299, %v1300
        %v1302 = vrot.slane %v1301, 2
        %v1303 = vadd.f32 %v1301, %v1302
        %v1304 = vrot.slane %v1303, 1
        %v1305 = vadd.f32 %v1303, %v1304
        %v1306 = vrcp.pop %v1305
        %v1307 = vmul.f32 %v1286, %v1306
        %v1308 = vmul.f32 %v1288, %v1306
        %v1309 = vmul.f32 %v1290, %v1306
        %v1310 = vmul.f32 %v1292, %v1306
        %v1311 = vunpack.c.l.bf16 %v635
        %v1312 = vunpack.c.l.bf16 %v636
        %v1313 = vunpack.c.l.bf16 %v637
        %v1314 = vunpack.c.l.bf16 %v638
        %v1315 = vmax.f32 %v1311, %v1307
        %v1316 = vmax.f32 %v1312, %v1308
        %v1317 = vmax.f32 %v1313, %v1309
        %v1318 = vmax.f32 %v1314, %v1310
        %1319 = vmatprep.subr.bf16.mxu0 0
        %1320 = vmatpush1.bf16.msra.mxu0 %v904
        %1321 = vmatprep.subr.bf16.mxu0 0
        %1322 = vmatpush1.bf16.msra.mxu0 %v905
        %1323 = vmatprep.subr.bf16.mxu0 0
        %1324 = vmatpush1.bf16.msra.mxu0 %v906
        %1325 = vmatprep.subr.bf16.mxu0 0
        %1326 = vmatpush1.bf16.msra.mxu0 %v907
        %1327 = vmatprep.subr.bf16.mxu0 0
        %1328 = vmatpush1.bf16.msra.mxu0 %v908
        %1329 = vmatprep.subr.bf16.mxu0 0
        %1330 = vmatpush1.bf16.msra.mxu0 %v909
        %1331 = vmatprep.subr.bf16.mxu0 0
        %1332 = vmatpush1.bf16.msra.mxu0 %v910
        %1333 = vmatprep.subr.bf16.mxu0 0
        %1334 = vmatpush1.bf16.msra.mxu0 %v911
        %1335 = vmatprep.subr.bf16.mxu0 0
        %1336 = vmatpush1.bf16.msra.mxu0 0
        %1337 = vmatprep.subr.bf16.mxu0 0
        %1338 = vmatpush1.bf16.msra.mxu0 0
        %1339 = vmatprep.subr.bf16.mxu0 0
        %1340 = vmatpush1.bf16.msra.mxu0 0
        %1341 = vmatprep.subr.bf16.mxu0 0
        %1342 = vmatpush1.bf16.msra.mxu0 0
        %1343 = vmatprep.subr.bf16.mxu0 0
        %1344 = vmatpush1.bf16.msra.mxu0 0
        %1345 = vmatprep.subr.bf16.mxu0 0
        %1346 = vmatpush1.bf16.msra.mxu0 0
        %1347 = vmatprep.subr.bf16.mxu0 0
        %1348 = vmatpush1.bf16.msra.mxu0 0
        %1349 = vmatprep.subr.bf16.mxu0 0
        %1350 = vmatpush1.bf16.msra.mxu0 0
        %1351 = vmatprep.mubr.bf16.mxu0 0
        %1352 = vmatmul.mubr.bf16.gmra.mrb[0].mxu0 %v1211
        %v1353 = vpop.f32.mrb[0].mxu0
        %v1354 = vadd.f32 %v639, %v1353
        %v1355 = vpop.f32.mrb[0].mxu0
        %v1356 = vpop.f32.mrb[0].mxu0
        %v1357 = vadd.f32 %v640, %v1356
        %v1358 = vpop.f32.mrb[0].mxu0
        %1359 = vmatprep.mubr.bf16.mxu0 0
        %1360 = vmatmul.mubr.bf16.gmra.mrb[0].mxu0 %v1215
        %v1361 = vpop.f32.mrb[0].mxu0
        %v1362 = vadd.f32 %v641, %v1361
        %v1363 = vpop.f32.mrb[0].mxu0
        %v1364 = vpop.f32.mrb[0].mxu0
        %v1365 = vadd.f32 %v642, %v1364
        %v1366 = vpop.f32.mrb[0].mxu0
        %1367 = vdwg.mxu0
        %v1368 = vsel %vm1267, %v1354, -inf
        %v1369 = vsel %vm1267, %v1357, -inf
        %v1370 = vsel %vm1267, %v1362, -inf
        %v1371 = vsel %vm1267, %v1365, -inf
        %v1372 = vmax.f32 %v1368, %v1369
        %v1373 = vmax.f32 %v1370, %v1371
        %v1374 = vmax.f32 %v1372, %v1373
        %v1375 = vrot.slane %v1374, 4
        %v1376 = vmax.f32 %v1374, %v1375
        %v1377 = vrot.slane %v1376, 2
        %v1378 = vmax.f32 %v1376, %v1377
        %v1379 = vrot.slane %v1378, 1
        %v1380 = vmax.f32 %v1378, %v1379
        %v1381 = vsub.f32 %v1354, %v1380
        %v1382 = vsub.f32 %v1357, %v1380
        %v1383 = vsub.f32 %v1362, %v1380
        %v1384 = vsub.f32 %v1365, %v1380
        %v1385 = vmul.f32 %v1381, 1.442695
        %v1386 = vpow.pop %v1385
        %v1387 = vmul.f32 %v1382, 1.442695
        %v1388 = vpow.pop %v1387
        %v1389 = vmul.f32 %v1383, 1.442695
        %v1390 = vpow.pop %v1389
        %v1391 = vmul.f32 %v1384, 1.442695
        %v1392 = vpow.pop %v1391
        %v1393 = vsel %vm1267, %v1386, 0.0
        %v1394 = vsel %vm1267, %v1388, 0.0
        %v1395 = vadd.f32 %v1393, %v1394
        %v1396 = vsel %vm1267, %v1390, 0.0
        %v1397 = vadd.f32 %v1395, %v1396
        %v1398 = vsel %vm1267, %v1392, 0.0
        %v1399 = vadd.f32 %v1397, %v1398
        %v1400 = vrot.slane %v1399, 4
        %v1401 = vadd.f32 %v1399, %v1400
        %v1402 = vrot.slane %v1401, 2
        %v1403 = vadd.f32 %v1401, %v1402
        %v1404 = vrot.slane %v1403, 1
        %v1405 = vadd.f32 %v1403, %v1404
        %v1406 = vrcp.pop %v1405
        %v1407 = vmul.f32 %v1386, %v1406
        %v1408 = vmul.f32 %v1388, %v1406
        %v1409 = vmul.f32 %v1390, %v1406
        %v1410 = vmul.f32 %v1392, %v1406
        %1415 = vrot.lane.b32.xlu0 %v1407, 32
        %v1416 = vpop.permute.xlu0 %1415
        %1417 = vrot.lane.b32.xlu0 %v1408, 32
        %v1418 = vpop.permute.xlu0 %1417
        %1419 = vrot.lane.b32.xlu0 %v1409, 32
        %v1420 = vpop.permute.xlu0 %1419
        %1421 = vrot.lane.b32.xlu0 %v1410, 32
        %v1422 = vpop.permute.xlu0 %1421
        %v1427 = vmax.f32 %v1311, %v1416
        %v1428 = vmax.f32 %v1312, %v1418
        %v1429 = vmax.f32 %v1313, %v1420
        %v1430 = vmax.f32 %v1314, %v1422
        %1431 = vmatprep.subr.bf16.mxu0 0
        %1432 = vmatpush1.bf16.msra.mxu0 %v904
        %1433 = vmatprep.subr.bf16.mxu0 0
        %1434 = vmatpush1.bf16.msra.mxu0 %v905
        %1435 = vmatprep.subr.bf16.mxu0 0
        %1436 = vmatpush1.bf16.msra.mxu0 %v906
        %1437 = vmatprep.subr.bf16.mxu0 0
        %1438 = vmatpush1.bf16.msra.mxu0 %v907
        %1439 = vmatprep.subr.bf16.mxu0 0
        %1440 = vmatpush1.bf16.msra.mxu0 %v908
        %1441 = vmatprep.subr.bf16.mxu0 0
        %1442 = vmatpush1.bf16.msra.mxu0 %v909
        %1443 = vmatprep.subr.bf16.mxu0 0
        %1444 = vmatpush1.bf16.msra.mxu0 %v910
        %1445 = vmatprep.subr.bf16.mxu0 0
        %1446 = vmatpush1.bf16.msra.mxu0 %v911
        %1447 = vmatprep.subr.bf16.mxu0 0
        %1448 = vmatpush1.bf16.msra.mxu0 0
        %1449 = vmatprep.subr.bf16.mxu0 0
        %1450 = vmatpush1.bf16.msra.mxu0 0
        %1451 = vmatprep.subr.bf16.mxu0 0
        %1452 = vmatpush1.bf16.msra.mxu0 0
        %1453 = vmatprep.subr.bf16.mxu0 0
        %1454 = vmatpush1.bf16.msra.mxu0 0
        %1455 = vmatprep.subr.bf16.mxu0 0
        %1456 = vmatpush1.bf16.msra.mxu0 0
        %1457 = vmatprep.subr.bf16.mxu0 0
        %1458 = vmatpush1.bf16.msra.mxu0 0
        %1459 = vmatprep.subr.bf16.mxu0 0
        %1460 = vmatpush1.bf16.msra.mxu0 0
        %1461 = vmatprep.subr.bf16.mxu0 0
        %1462 = vmatpush1.bf16.msra.mxu0 0
        %1463 = vmatprep.mubr.bf16.mxu0 0
        %1464 = vmatmul.mubr.bf16.gmra.mrb[0].mxu0 %v1212
        %v1465 = vpop.f32.mrb[0].mxu0
        %v1466 = vadd.f32 %v639, %v1465
        %v1467 = vpop.f32.mrb[0].mxu0
        %v1468 = vpop.f32.mrb[0].mxu0
        %v1469 = vadd.f32 %v640, %v1468
        %v1470 = vpop.f32.mrb[0].mxu0
        %1471 = vmatprep.mubr.bf16.mxu0 0
        %1472 = vmatmul.mubr.bf16.gmra.mrb[0].mxu0 %v1216
        %v1473 = vpop.f32.mrb[0].mxu0
        %v1474 = vadd.f32 %v641, %v1473
        %v1475 = vpop.f32.mrb[0].mxu0
        %v1476 = vpop.f32.mrb[0].mxu0
        %v1477 = vadd.f32 %v642, %v1476
        %v1478 = vpop.f32.mrb[0].mxu0
        %1479 = vdwg.mxu0
        %v1480 = vsel %vm1267, %v1466, -inf
        %v1481 = vsel %vm1267, %v1469, -inf
        %v1482 = vsel %vm1267, %v1474, -inf
        %v1483 = vsel %vm1267, %v1477, -inf
        %v1484 = vmax.f32 %v1480, %v1481
        %v1485 = vmax.f32 %v1482, %v1483
        %v1486 = vmax.f32 %v1484, %v1485
        %v1487 = vrot.slane %v1486, 4
        %v1488 = vmax.f32 %v1486, %v1487
        %v1489 = vrot.slane %v1488, 2
        %v1490 = vmax.f32 %v1488, %v1489
        %v1491 = vrot.slane %v1490, 1
        %v1492 = vmax.f32 %v1490, %v1491
        %v1493 = vsub.f32 %v1466, %v1492
        %v1494 = vsub.f32 %v1469, %v1492
        %v1495 = vsub.f32 %v1474, %v1492
        %v1496 = vsub.f32 %v1477, %v1492
        %v1497 = vmul.f32 %v1493, 1.442695
        %v1498 = vpow.pop %v1497
        %v1499 = vmul.f32 %v1494, 1.442695
        %v1500 = vpow.pop %v1499
        %v1501 = vmul.f32 %v1495, 1.442695
        %v1502 = vpow.pop %v1501
        %v1503 = vmul.f32 %v1496, 1.442695
        %v1504 = vpow.pop %v1503
        %v1505 = vsel %vm1267, %v1498, 0.0
        %v1506 = vsel %vm1267, %v1500, 0.0
        %v1507 = vadd.f32 %v1505, %v1506
        %v1508 = vsel %vm1267, %v1502, 0.0
        %v1509 = vadd.f32 %v1507, %v1508
        %v1510 = vsel %vm1267, %v1504, 0.0
        %v1511 = vadd.f32 %v1509, %v1510
        %v1512 = vrot.slane %v1511, 4
        %v1513 = vadd.f32 %v1511, %v1512
        %v1514 = vrot.slane %v1513, 2
        %v1515 = vadd.f32 %v1513, %v1514
        %v1516 = vrot.slane %v1515, 1
        %v1517 = vadd.f32 %v1515, %v1516
        %v1518 = vrcp.pop %v1517
        %v1519 = vmul.f32 %v1498, %v1518
        %v1520 = vmul.f32 %v1500, %v1518
        %v1521 = vmul.f32 %v1502, %v1518
        %v1522 = vmul.f32 %v1504, %v1518
        %1527 = vrot.lane.b32.xlu0 %v1519, 64
        %v1528 = vpop.permute.xlu0 %1527
        %1529 = vrot.lane.b32.xlu0 %v1520, 64
        %v1530 = vpop.permute.xlu0 %1529
        %1531 = vrot.lane.b32.xlu0 %v1521, 64
        %v1532 = vpop.permute.xlu0 %1531
        %1533 = vrot.lane.b32.xlu0 %v1522, 64
        %v1534 = vpop.permute.xlu0 %1533
        %v1539 = vmax.f32 %v1311, %v1528
        %v1540 = vmax.f32 %v1312, %v1530
        %v1541 = vmax.f32 %v1313, %v1532
        %v1542 = vmax.f32 %v1314, %v1534
        %1543 = vmatprep.subr.bf16.mxu0 0
        %1544 = vmatpush1.bf16.msra.mxu0 %v904
        %1545 = vmatprep.subr.bf16.mxu0 0
        %1546 = vmatpush1.bf16.msra.mxu0 %v905
        %1547 = vmatprep.subr.bf16.mxu0 0
        %1548 = vmatpush1.bf16.msra.mxu0 %v906
        %1549 = vmatprep.subr.bf16.mxu0 0
        %1550 = vmatpush1.bf16.msra.mxu0 %v907
        %1551 = vmatprep.subr.bf16.mxu0 0
        %1552 = vmatpush1.bf16.msra.mxu0 %v908
        %1553 = vmatprep.subr.bf16.mxu0 0
        %1554 = vmatpush1.bf16.msra.mxu0 %v909
        %1555 = vmatprep.subr.bf16.mxu0 0
        %1556 = vmatpush1.bf16.msra.mxu0 %v910
        %1557 = vmatprep.subr.bf16.mxu0 0
        %1558 = vmatpush1.bf16.msra.mxu0 %v911
        %1559 = vmatprep.subr.bf16.mxu0 0
        %1560 = vmatpush1.bf16.msra.mxu0 0
        %1561 = vmatprep.subr.bf16.mxu0 0
        %1562 = vmatpush1.bf16.msra.mxu0 0
        %1563 = vmatprep.subr.bf16.mxu0 0
        %1564 = vmatpush1.bf16.msra.mxu0 0
        %1565 = vmatprep.subr.bf16.mxu0 0
        %1566 = vmatpush1.bf16.msra.mxu0 0
        %1567 = vmatprep.subr.bf16.mxu0 0
        %1568 = vmatpush1.bf16.msra.mxu0 0
        %1569 = vmatprep.subr.bf16.mxu0 0
        %1570 = vmatpush1.bf16.msra.mxu0 0
        %1571 = vmatprep.subr.bf16.mxu0 0
        %1572 = vmatpush1.bf16.msra.mxu0 0
        %1573 = vmatprep.subr.bf16.mxu0 0
        %1574 = vmatpush1.bf16.msra.mxu0 0
        %1575 = vmatprep.mubr.bf16.mxu0 0
        %1576 = vmatmul.mubr.bf16.gmra.mrb[0].mxu0 %v1213
        %v1577 = vpop.f32.mrb[0].mxu0
        %v1578 = vadd.f32 %v639, %v1577
        %v1579 = vpop.f32.mrb[0].mxu0
        %v1580 = vpop.f32.mrb[0].mxu0
        %v1581 = vadd.f32 %v640, %v1580
        %v1582 = vpop.f32.mrb[0].mxu0
        %1583 = vmatprep.mubr.bf16.mxu0 0
        %1584 = vmatmul.mubr.bf16.gmra.mrb[0].mxu0 %v1217
        %v1585 = vpop.f32.mrb[0].mxu0
        %v1586 = vadd.f32 %v641, %v1585
        %v1587 = vpop.f32.mrb[0].mxu0
        %v1588 = vpop.f32.mrb[0].mxu0
        %v1589 = vadd.f32 %v642, %v1588
        %v1590 = vpop.f32.mrb[0].mxu0
        %1591 = vdwg.mxu0
        %v1592 = vsel %vm1267, %v1578, -inf
        %v1593 = vsel %vm1267, %v1581, -inf
        %v1594 = vsel %vm1267, %v1586, -inf
        %v1595 = vsel %vm1267, %v1589, -inf
        %v1596 = vmax.f32 %v1592, %v1593
        %v1597 = vmax.f32 %v1594, %v1595
        %v1598 = vmax.f32 %v1596, %v1597
        %v1599 = vrot.slane %v1598, 4
        %v1600 = vmax.f32 %v1598, %v1599
        %v1601 = vrot.slane %v1600, 2
        %v1602 = vmax.f32 %v1600, %v1601
        %v1603 = vrot.slane %v1602, 1
        %v1604 = vmax.f32 %v1602, %v1603
        %v1605 = vsub.f32 %v1578, %v1604
        %v1606 = vsub.f32 %v1581, %v1604
        %v1607 = vsub.f32 %v1586, %v1604
        %v1608 = vsub.f32 %v1589, %v1604
        %v1609 = vmul.f32 %v1605, 1.442695
        %v1610 = vpow.pop %v1609
        %v1611 = vmul.f32 %v1606, 1.442695
        %v1612 = vpow.pop %v1611
        %v1613 = vmul.f32 %v1607, 1.442695
        %v1614 = vpow.pop %v1613
        %v1615 = vmul.f32 %v1608, 1.442695
        %v1616 = vpow.pop %v1615
        %v1617 = vsel %vm1267, %v1610, 0.0
        %v1618 = vsel %vm1267, %v1612, 0.0
        %v1619 = vadd.f32 %v1617, %v1618
        %v1620 = vsel %vm1267, %v1614, 0.0
        %v1621 = vadd.f32 %v1619, %v1620
        %v1622 = vsel %vm1267, %v1616, 0.0
        %v1623 = vadd.f32 %v1621, %v1622
        %v1624 = vrot.slane %v1623, 4
        %v1625 = vadd.f32 %v1623, %v1624
        %v1626 = vrot.slane %v1625, 2
        %v1627 = vadd.f32 %v1625, %v1626
        %v1628 = vrot.slane %v1627, 1
        %v1629 = vadd.f32 %v1627, %v1628
        %v1630 = vrcp.pop %v1629
        %v1631 = vmul.f32 %v1610, %v1630
        %v1632 = vmul.f32 %v1612, %v1630
        %v1633 = vmul.f32 %v1614, %v1630
        %v1634 = vmul.f32 %v1616, %v1630
        %1639 = vrot.lane.b32.xlu0 %v1631, 96
        %v1640 = vpop.permute.xlu0 %1639
        %1641 = vrot.lane.b32.xlu0 %v1632, 96
        %v1642 = vpop.permute.xlu0 %1641
        %1643 = vrot.lane.b32.xlu0 %v1633, 96
        %v1644 = vpop.permute.xlu0 %1643
        %1645 = vrot.lane.b32.xlu0 %v1634, 96
        %v1646 = vpop.permute.xlu0 %1645
        %v1651 = vmax.f32 %v1311, %v1640
        %v1652 = vmax.f32 %v1312, %v1642
        %v1653 = vmax.f32 %v1313, %v1644
        %v1654 = vmax.f32 %v1314, %v1646
        %v1655 = vsel %vm1267, %v1315, %v1427
        %v1656 = vsel %vm1267, %v1316, %v1428
        %v1657 = vsel %vm1267, %v1317, %v1429
        %v1658 = vsel %vm1267, %v1318, %v1430
        %vm1659 = vcmask 523264
        %v1660 = vsel %vm1659, %v1655, %v1539
        %v1661 = vsel %vm1659, %v1656, %v1540
        %v1662 = vsel %vm1659, %v1657, %v1541
        %v1663 = vsel %vm1659, %v1658, %v1542
        %vm1664 = vcmask 785408
        %v1665 = vsel %vm1664, %v1660, %v1651
        %v1666 = vsel %vm1664, %v1661, %v1652
        %v1667 = vsel %vm1664, %v1662, %v1653
        %v1668 = vsel %vm1664, %v1663, %v1654
        %v1669 = vpack.c.bf16 %v1666, %v1665
        %v1670 = vpack.c.bf16 %v1668, %v1667
        %v1671 = vld [vmem:[#allocation10] sm:$0xf]
        %v1672 = vld [vmem:[#allocation10 + $0x4] sm:$0xf]
        %v1675 = vunpack.c.l.b16 %v1671
        %v1676 = vunpack.c.l.b16 %v1672
        %v1677 = vpack.c.b16 %v1676, %v1675
        %1679 = vmatprep.subr.bf16.mxu0 0
        %1680 = vmatpush1.bf16.msra.mxu0 %v1677
        %1681 = vmatprep.subr.bf16.mxu0 0
        %1682 = vmatpush1.bf16.msra.mxu0 0
        %1683 = vmatprep.subr.bf16.mxu0 0
        %1684 = vmatpush1.bf16.msra.mxu0 0
        %1685 = vmatprep.subr.bf16.mxu0 0
        %1686 = vmatpush1.bf16.msra.mxu0 0
        %1687 = vmatprep.subr.bf16.mxu0 0
        %1688 = vmatpush1.bf16.msra.mxu0 0
        %1689 = vmatprep.subr.bf16.mxu0 0
        %1690 = vmatpush1.bf16.msra.mxu0 0
        %1691 = vmatprep.subr.bf16.mxu0 0
        %1692 = vmatpush1.bf16.msra.mxu0 0
        %1693 = vmatprep.subr.bf16.mxu0 0
        %1694 = vmatpush1.bf16.msra.mxu0 0
        %1695 = vmatprep.subr.bf16.mxu0 0
        %1696 = vmatpush1.bf16.msra.mxu0 0
        %1697 = vmatprep.subr.bf16.mxu0 0
        %1698 = vmatpush1.bf16.msra.mxu0 0
        %1699 = vmatprep.subr.bf16.mxu0 0
        %1700 = vmatpush1.bf16.msra.mxu0 0
        %1701 = vmatprep.subr.bf16.mxu0 0
        %1702 = vmatpush1.bf16.msra.mxu0 0
        %1703 = vmatprep.subr.bf16.mxu0 0
        %1704 = vmatpush1.bf16.msra.mxu0 0
        %1705 = vmatprep.subr.bf16.mxu0 0
        %1706 = vmatpush1.bf16.msra.mxu0 0
        %1707 = vmatprep.subr.bf16.mxu0 0
        %1708 = vmatpush1.bf16.msra.mxu0 0
        %1709 = vmatprep.subr.bf16.mxu0 0
        %1710 = vmatpush1.bf16.msra.mxu0 0
        %1711 = vmatprep.mubr.bf16.mxu0 0
        %1712 = vmatmul.mubr.bf16.gmra.mrb[0].mxu0 %v679
        %v1713 = vpop.f32.mrb[0].mxu0
        %v1714 = vadd.f32 0.0, %v1713
        %v1715 = vpop.f32.mrb[0].mxu0
        %v1716 = vpop.f32.mrb[0].mxu0
        %v1717 = vadd.f32 0.0, %v1716
        %v1718 = vpop.f32.mrb[0].mxu0
        %1719 = vmatprep.mubr.bf16.mxu0 0
        %1720 = vmatmul.mubr.bf16.gmra.mrb[0].mxu0 %v682
        %v1721 = vpop.f32.mrb[0].mxu0
        %v1722 = vadd.f32 0.0, %v1721
        %v1723 = vpop.f32.mrb[0].mxu0
        %v1724 = vpop.f32.mrb[0].mxu0
        %v1725 = vadd.f32 0.0, %v1724
        %v1726 = vpop.f32.mrb[0].mxu0
        %1727 = vdwg.mxu0
        %v1728 = vpack.c.bf16 %v1717, %v1714
        %v1729 = vpack.c.bf16 %v1725, %v1722
        %1732 = vrot.lane.b32.xlu0 %v1728, 96
        %v1733 = vpop.permute.xlu0 %1732
        %1734 = vrot.lane.b32.xlu0 %v1729, 96
        %v1735 = vpop.permute.xlu0 %1734
        %1738 = vrot.lane.b32.xlu0 %v1728, 64
        %v1739 = vpop.permute.xlu0 %1738
        %1740 = vrot.lane.b32.xlu0 %v1729, 64
        %v1741 = vpop.permute.xlu0 %1740
        %1744 = vrot.lane.b32.xlu0 %v1728, 32
        %v1745 = vpop.permute.xlu0 %1744
        %1746 = vrot.lane.b32.xlu0 %v1729, 32
        %v1747 = vpop.permute.xlu0 %1746
        %v1750 = vld [vmem:[%s7] sm:$0x1]
        %v1752 = vlaneseq
        %v1753 = vshrl.u32 %v1752, 7
        %v1754 = vsub.s32 0, %v1753
        %v1755 = vrot.slane %v1750, %v1754
        %1757 = vmatprep.subr.bf16.mxu0 0
        %1758 = vmatpush1.bf16.msra.mxu0 %v1728
        %1759 = vmatprep.subr.bf16.mxu0 0
        %1760 = vmatpush1.bf16.msra.mxu0 %v1729
        %1761 = vmatprep.subr.bf16.mxu0 0
        %1762 = vmatpush1.bf16.msra.mxu0 %v1733
        %1763 = vmatprep.subr.bf16.mxu0 0
        %1764 = vmatpush1.bf16.msra.mxu0 %v1735
        %1765 = vmatprep.subr.bf16.mxu0 0
        %1766 = vmatpush1.bf16.msra.mxu0 %v1739
        %1767 = vmatprep.subr.bf16.mxu0 0
        %1768 = vmatpush1.bf16.msra.mxu0 %v1741
        %1769 = vmatprep.subr.bf16.mxu0 0
        %1770 = vmatpush1.bf16.msra.mxu0 %v1745
        %1771 = vmatprep.subr.bf16.mxu0 0
        %1772 = vmatpush1.bf16.msra.mxu0 %v1747
        %1773 = vmatprep.subr.bf16.mxu0 0
        %1774 = vmatpush1.bf16.msra.mxu0 0
        %1775 = vmatprep.subr.bf16.mxu0 0
        %1776 = vmatpush1.bf16.msra.mxu0 0
        %1777 = vmatprep.subr.bf16.mxu0 0
        %1778 = vmatpush1.bf16.msra.mxu0 0
        %1779 = vmatprep.subr.bf16.mxu0 0
        %1780 = vmatpush1.bf16.msra.mxu0 0
        %1781 = vmatprep.subr.bf16.mxu0 0
        %1782 = vmatpush1.bf16.msra.mxu0 0
        %1783 = vmatprep.subr.bf16.mxu0 0
        %1784 = vmatpush1.bf16.msra.mxu0 0
        %1785 = vmatprep.subr.bf16.mxu0 0
        %1786 = vmatpush1.bf16.msra.mxu0 0
        %1787 = vmatprep.subr.bf16.mxu0 0
        %1788 = vmatpush1.bf16.msra.mxu0 0
        %1789 = vmatprep.mubr.bf16.mxu0 0
        %1790 = vmatmul.mubr.bf16.gmra.mrb[0].mxu0 %v1669
        %v1791 = vpop.f32.mrb[0].mxu0
        %v1792 = vadd.f32 %v1755, %v1791
        %v1793 = vpop.f32.mrb[0].mxu0
        %v1794 = vpop.f32.mrb[0].mxu0
        %v1795 = vadd.f32 %v1755, %v1794
        %v1796 = vpop.f32.mrb[0].mxu0
        %1797 = vmatprep.mubr.bf16.mxu0 0
        %1798 = vmatmul.mubr.bf16.gmra.mrb[0].mxu0 %v1670
        %v1799 = vpop.f32.mrb[0].mxu0
        %v1800 = vadd.f32 %v1755, %v1799
        %v1801 = vpop.f32.mrb[0].mxu0
        %v1802 = vpop.f32.mrb[0].mxu0
        %v1803 = vadd.f32 %v1755, %v1802
        %v1804 = vpop.f32.mrb[0].mxu0
        %1805 = vdwg.mxu0
        %v1806 = vmax.f32 %v1792, 0.0
        %v1807 = vmax.f32 %v1795, 0.0
        %v1808 = vmax.f32 %v1800, 0.0
        %v1809 = vmax.f32 %v1803, 0.0
        %v1810 = vpack.c.bf16 %v1807, %v1806
        %v1811 = vpack.c.bf16 %v1809, %v1808
        %v1812 = vld [vmem:[%s8] sm:$0xff]
        %v1813 = vld [vmem:[%s8 + $0x8] sm:$0xff]
        %v1814 = vld [vmem:[%s8 + $0x10] sm:$0xff]
        %v1815 = vld [vmem:[%s8 + $0x18] sm:$0xff]
        %v1816 = vld [vmem:[%s8 + $0x20] sm:$0xff]
        %v1817 = vld [vmem:[%s8 + $0x28] sm:$0xff]
        %v1818 = vld [vmem:[%s8 + $0x30] sm:$0xff]
        %v1819 = vld [vmem:[%s8 + $0x38] sm:$0xff]
        %v1820 = vld [vmem:[#allocation11] sm:$0xff]
        %v1821 = vld [vmem:[#allocation11 + $0x8] sm:$0xff]
        %v1822 = vld [vmem:[#allocation11 + $0x10] sm:$0xff]
        %v1823 = vld [vmem:[#allocation11 + $0x18] sm:$0xff]
        %v1824 = vld [vmem:[#allocation11 + $0x20] sm:$0xff]
        %v1825 = vld [vmem:[#allocation11 + $0x28] sm:$0xff]
        %v1826 = vld [vmem:[#allocation11 + $0x30] sm:$0xff]
        %v1827 = vld [vmem:[#allocation11 + $0x38] sm:$0xff]
        %v1828 = vld [vmem:[#allocation11 + $0x40] sm:$0xff]
        %v1829 = vld [vmem:[#allocation11 + $0x48] sm:$0xff]
        %v1830 = vld [vmem:[#allocation11 + $0x50] sm:$0xff]
        %v1831 = vld [vmem:[#allocation11 + $0x58] sm:$0xff]
        %v1832 = vld [vmem:[#allocation11 + $0x60] sm:$0xff]
        %v1833 = vld [vmem:[#allocation11 + $0x68] sm:$0xff]
        %v1834 = vld [vmem:[#allocation11 + $0x70] sm:$0xff]
        %v1835 = vld [vmem:[#allocation11 + $0x78] sm:$0xff]
        %v1836 = vld [vmem:[#allocation11 + $0x80] sm:$0xff]
        %v1837 = vld [vmem:[#allocation11 + $0x88] sm:$0xff]
        %v1838 = vld [vmem:[#allocation11 + $0x90] sm:$0xff]
        %v1839 = vld [vmem:[#allocation11 + $0x98] sm:$0xff]
        %v1840 = vld [vmem:[#allocation11 + $0xa0] sm:$0xff]
        %v1841 = vld [vmem:[#allocation11 + $0xa8] sm:$0xff]
        %v1842 = vld [vmem:[#allocation11 + $0xb0] sm:$0xff]
        %v1843 = vld [vmem:[#allocation11 + $0xb8] sm:$0xff]
        %v1844 = vld [vmem:[#allocation11 + $0xc0] sm:$0xff]
        %v1845 = vld [vmem:[#allocation11 + $0xc8] sm:$0xff]
        %v1846 = vld [vmem:[#allocation11 + $0xd0] sm:$0xff]
        %v1847 = vld [vmem:[#allocation11 + $0xd8] sm:$0xff]
        %v1848 = vld [vmem:[#allocation11 + $0xe0] sm:$0xff]
        %v1849 = vld [vmem:[#allocation11 + $0xe8] sm:$0xff]
        %v1850 = vld [vmem:[#allocation11 + $0xf0] sm:$0xff]
        %v1851 = vld [vmem:[#allocation11 + $0xf8] sm:$0xff]
        %v1884 = vunpack.c.l.b16 %v1820
        %v1885 = vunpack.c.h.b16 %v1820
        %v1886 = vunpack.c.l.b16 %v1821
        %v1887 = vunpack.c.h.b16 %v1821
        %v1888 = vunpack.c.l.b16 %v1822
        %v1889 = vunpack.c.h.b16 %v1822
        %v1890 = vunpack.c.l.b16 %v1823
        %v1891 = vunpack.c.h.b16 %v1823
        %v1892 = vunpack.c.l.b16 %v1824
        %v1893 = vunpack.c.h.b16 %v1824
        %v1894 = vunpack.c.l.b16 %v1825
        %v1895 = vunpack.c.h.b16 %v1825
        %v1896 = vunpack.c.l.b16 %v1826
        %v1897 = vunpack.c.h.b16 %v1826
        %v1898 = vunpack.c.l.b16 %v1827
        %v1899 = vunpack.c.h.b16 %v1827
        %v1900 = vunpack.c.l.b16 %v1828
        %v1901 = vunpack.c.h.b16 %v1828
        %v1902 = vunpack.c.l.b16 %v1829
        %v1903 = vunpack.c.h.b16 %v1829
        %v1904 = vunpack.c.l.b16 %v1830
        %v1905 = vunpack.c.h.b16 %v1830
        %v1906 = vunpack.c.l.b16 %v1831
        %v1907 = vunpack.c.h.b16 %v1831
        %v1908 = vunpack.c.l.b16 %v1832
        %v1909 = vunpack.c.h.b16 %v1832
        %v1910 = vunpack.c.l.b16 %v1833
        %v1911 = vunpack.c.h.b16 %v1833
        %v1912 = vunpack.c.l.b16 %v1834
        %v1913 = vunpack.c.h.b16 %v1834
        %v1914 = vunpack.c.l.b16 %v1835
        %v1915 = vunpack.c.h.b16 %v1835
        %v1916 = vunpack.c.l.b16 %v1836
        %v1917 = vunpack.c.h.b16 %v1836
        %v1918 = vunpack.c.l.b16 %v1837
        %v1919 = vunpack.c.h.b16 %v1837
        %v1920 = vunpack.c.l.b16 %v1838
        %v1921 = vunpack.c.h.b16 %v1838
        %v1922 = vunpack.c.l.b16 %v1839
        %v1923 = vunpack.c.h.b16 %v1839
        %v1924 = vunpack.c.l.b16 %v1840
        %v1925 = vunpack.c.h.b16 %v1840
        %v1926 = vunpack.c.l.b16 %v1841
        %v1927 = vunpack.c.h.b16 %v1841
        %v1928 = vunpack.c.l.b16 %v1842
        %v1929 = vunpack.c.h.b16 %v1842
        %v1930 = vunpack.c.l.b16 %v1843
        %v1931 = vunpack.c.h.b16 %v1843
        %v1932 = vunpack.c.l.b16 %v1844
        %v1933 = vunpack.c.h.b16 %v1844
        %v1934 = vunpack.c.l.b16 %v1845
        %v1935 = vunpack.c.h.b16 %v1845
        %v1936 = vunpack.c.l.b16 %v1846
        %v1937 = vunpack.c.h.b16 %v1846
        %v1938 = vunpack.c.l.b16 %v1847
        %v1939 = vunpack.c.h.b16 %v1847
        %v1940 = vunpack.c.l.b16 %v1848
        %v1941 = vunpack.c.h.b16 %v1848
        %v1942 = vunpack.c.l.b16 %v1849
        %v1943 = vunpack.c.h.b16 %v1849
        %v1944 = vunpack.c.l.b16 %v1850
        %v1945 = vunpack.c.h.b16 %v1850
        %v1946 = vunpack.c.l.b16 %v1851
        %v1947 = vunpack.c.h.b16 %v1851
        %v1948 = vpack.c.b16 %v1888, %v1884
        %v1949 = vpack.c.b16 %v1889, %v1885
        %v1950 = vpack.c.b16 %v1890, %v1886
        %v1951 = vpack.c.b16 %v1891, %v1887
        %v1952 = vpack.c.b16 %v1896, %v1892
        %v1953 = vpack.c.b16 %v1897, %v1893
        %v1954 = vpack.c.b16 %v1898, %v1894
        %v1955 = vpack.c.b16 %v1899, %v1895
        %v1956 = vpack.c.b16 %v1904, %v1900
        %v1957 = vpack.c.b16 %v1905, %v1901
        %v1958 = vpack.c.b16 %v1906, %v1902
        %v1959 = vpack.c.b16 %v1907, %v1903
        %v1960 = vpack.c.b16 %v1912, %v1908
        %v1961 = vpack.c.b16 %v1913, %v1909
        %v1962 = vpack.c.b16 %v1914, %v1910
        %v1963 = vpack.c.b16 %v1915, %v1911
        %v1964 = vpack.c.b16 %v1920, %v1916
        %v1965 = vpack.c.b16 %v1921, %v1917
        %v1966 = vpack.c.b16 %v1922, %v1918
        %v1967 = vpack.c.b16 %v1923, %v1919
        %v1968 = vpack.c.b16 %v1928, %v1924
        %v1969 = vpack.c.b16 %v1929, %v1925
        %v1970 = vpack.c.b16 %v1930, %v1926
        %v1971 = vpack.c.b16 %v1931, %v1927
        %v1972 = vpack.c.b16 %v1936, %v1932
        %v1973 = vpack.c.b16 %v1937, %v1933
        %v1974 = vpack.c.b16 %v1938, %v1934
        %v1975 = vpack.c.b16 %v1939, %v1935
        %v1976 = vpack.c.b16 %v1944, %v1940
        %v1977 = vpack.c.b16 %v1945, %v1941
        %v1978 = vpack.c.b16 %v1946, %v1942
        %v1979 = vpack.c.b16 %v1947, %v1943
        %2012 = vmatprep.subr.bf16.mxu0 %v1949
        %2013 = vmatpush1.bf16.msra.mxu0 %v1948
        %2014 = vmatprep.subr.bf16.mxu0 %v1953
        %2015 = vmatpush1.bf16.msra.mxu0 %v1952
        %2016 = vmatprep.subr.bf16.mxu0 %v1957
        %2017 = vmatpush1.bf16.msra.mxu0 %v1956
        %2018 = vmatprep.subr.bf16.mxu0 %v1961
        %2019 = vmatpush1.bf16.msra.mxu0 %v1960
        %2020 = vmatprep.subr.bf16.mxu0 %v1965
        %2021 = vmatpush1.bf16.msra.mxu0 %v1964
        %2022 = vmatprep.subr.bf16.mxu0 %v1969
        %2023 = vmatpush1.bf16.msra.mxu0 %v1968
        %2024 = vmatprep.subr.bf16.mxu0 %v1973
        %2025 = vmatpush1.bf16.msra.mxu0 %v1972
        %2026 = vmatprep.subr.bf16.mxu0 %v1977
        %2027 = vmatpush1.bf16.msra.mxu0 %v1976
        %2028 = vmatprep.subr.bf16.mxu0 0
        %2029 = vmatpush1.bf16.msra.mxu0 0
        %2030 = vmatprep.subr.bf16.mxu0 0
        %2031 = vmatpush1.bf16.msra.mxu0 0
        %2032 = vmatprep.subr.bf16.mxu0 0
        %2033 = vmatpush1.bf16.msra.mxu0 0
        %2034 = vmatprep.subr.bf16.mxu0 0
        %2035 = vmatpush1.bf16.msra.mxu0 0
        %2036 = vmatprep.subr.bf16.mxu0 0
        %2037 = vmatpush1.bf16.msra.mxu0 0
        %2038 = vmatprep.subr.bf16.mxu0 0
        %2039 = vmatpush1.bf16.msra.mxu0 0
        %2040 = vmatprep.subr.bf16.mxu0 0
        %2041 = vmatpush1.bf16.msra.mxu0 0
        %2042 = vmatprep.subr.bf16.mxu0 0
        %2043 = vmatpush1.bf16.msra.mxu0 0
        %2044 = vmatprep.mubr.bf16.mxu0 0
        %2045 = vmatmul.mubr.bf16.gmra.mrb[0].mxu0 %v870
        %v2046 = vpop.f32.mrb[0].mxu0
        %v2047 = vadd.f32 0.0, %v2046
        %v2048 = vpop.f32.mrb[0].mxu0
        %v2049 = vadd.f32 0.0, %v2048
        %v2050 = vpop.f32.mrb[0].mxu0
        %v2051 = vadd.f32 0.0, %v2050
        %v2052 = vpop.f32.mrb[0].mxu0
        %v2053 = vadd.f32 0.0, %v2052
        %2054 = vmatprep.mubr.bf16.mxu0 0
        %2055 = vmatmul.mubr.bf16.gmra.mrb[0].mxu0 %v871
        %v2056 = vpop.f32.mrb[0].mxu0
        %v2057 = vadd.f32 0.0, %v2056
        %v2058 = vpop.f32.mrb[0].mxu0
        %v2059 = vadd.f32 0.0, %v2058
        %v2060 = vpop.f32.mrb[0].mxu0
        %v2061 = vadd.f32 0.0, %v2060
        %v2062 = vpop.f32.mrb[0].mxu0
        %v2063 = vadd.f32 0.0, %v2062
        %2064 = vdwg.mxu0
        %2065 = vmatprep.subr.bf16.mxu0 %v1951
        %2066 = vmatpush1.bf16.msra.mxu0 %v1950
        %2067 = vmatprep.subr.bf16.mxu0 %v1955
        %2068 = vmatpush1.bf16.msra.mxu0 %v1954
        %2069 = vmatprep.subr.bf16.mxu0 %v1959
        %2070 = vmatpush1.bf16.msra.mxu0 %v1958
        %2071 = vmatprep.subr.bf16.mxu0 %v1963
        %2072 = vmatpush1.bf16.msra.mxu0 %v1962
        %2073 = vmatprep.subr.bf16.mxu0 %v1967
        %2074 = vmatpush1.bf16.msra.mxu0 %v1966
        %2075 = vmatprep.subr.bf16.mxu0 %v1971
        %2076 = vmatpush1.bf16.msra.mxu0 %v1970
        %2077 = vmatprep.subr.bf16.mxu0 %v1975
        %2078 = vmatpush1.bf16.msra.mxu0 %v1974
        %2079 = vmatprep.subr.bf16.mxu0 %v1979
        %2080 = vmatpush1.bf16.msra.mxu0 %v1978
        %2081 = vmatprep.subr.bf16.mxu0 0
        %2082 = vmatpush1.bf16.msra.mxu0 0
        %2083 = vmatprep.subr.bf16.mxu0 0
        %2084 = vmatpush1.bf16.msra.mxu0 0
        %2085 = vmatprep.subr.bf16.mxu0 0
        %2086 = vmatpush1.bf16.msra.mxu0 0
        %2087 = vmatprep.subr.bf16.mxu0 0
        %2088 = vmatpush1.bf16.msra.mxu0 0
        %2089 = vmatprep.subr.bf16.mxu0 0
        %2090 = vmatpush1.bf16.msra.mxu0 0
        %2091 = vmatprep.subr.bf16.mxu0 0
        %2092 = vmatpush1.bf16.msra.mxu0 0
        %2093 = vmatprep.subr.bf16.mxu0 0
        %2094 = vmatpush1.bf16.msra.mxu0 0
        %2095 = vmatprep.subr.bf16.mxu0 0
        %2096 = vmatpush1.bf16.msra.mxu0 0
        %2097 = vmatprep.mubr.bf16.mxu0 0
        %2098 = vmatmul.mubr.bf16.gmra.mrb[0].mxu0 %v870
        %v2099 = vpop.f32.mrb[0].mxu0
        %v2100 = vadd.f32 0.0, %v2099
        %v2101 = vpop.f32.mrb[0].mxu0
        %v2102 = vadd.f32 0.0, %v2101
        %v2103 = vpop.f32.mrb[0].mxu0
        %v2104 = vadd.f32 0.0, %v2103
        %v2105 = vpop.f32.mrb[0].mxu0
        %v2106 = vadd.f32 0.0, %v2105
        %2107 = vmatprep.mubr.bf16.mxu0 0
        %2108 = vmatmul.mubr.bf16.gmra.mrb[0].mxu0 %v871
        %v2109 = vpop.f32.mrb[0].mxu0
        %v2110 = vadd.f32 0.0, %v2109
        %v2111 = vpop.f32.mrb[0].mxu0
        %v2112 = vadd.f32 0.0, %v2111
        %v2113 = vpop.f32.mrb[0].mxu0
        %v2114 = vadd.f32 0.0, %v2113
        %v2115 = vpop.f32.mrb[0].mxu0
        %v2116 = vadd.f32 0.0, %v2115
        %2117 = vdwg.mxu0
        %v2126 = vunpack.c.l.b16 %v1812
        %v2127 = vunpack.c.h.b16 %v1812
        %v2128 = vunpack.c.l.b16 %v1813
        %v2129 = vunpack.c.h.b16 %v1813
        %v2130 = vunpack.c.l.b16 %v1814
        %v2131 = vunpack.c.h.b16 %v1814
        %v2132 = vunpack.c.l.b16 %v1815
        %v2133 = vunpack.c.h.b16 %v1815
        %v2134 = vunpack.c.l.b16 %v1816
        %v2135 = vunpack.c.h.b16 %v1816
        %v2136 = vunpack.c.l.b16 %v1817
        %v2137 = vunpack.c.h.b16 %v1817
        %v2138 = vunpack.c.l.b16 %v1818
        %v2139 = vunpack.c.h.b16 %v1818
        %v2140 = vunpack.c.l.b16 %v1819
        %v2141 = vunpack.c.h.b16 %v1819
        %v2142 = vpack.c.b16 %v2130, %v2126
        %v2143 = vpack.c.b16 %v2131, %v2127
        %v2144 = vpack.c.b16 %v2132, %v2128
        %v2145 = vpack.c.b16 %v2133, %v2129
        %v2146 = vpack.c.b16 %v2138, %v2134
        %v2147 = vpack.c.b16 %v2139, %v2135
        %v2148 = vpack.c.b16 %v2140, %v2136
        %v2149 = vpack.c.b16 %v2141, %v2137
        %v2159 = vsel %vm1267, %v1810, 0
        %v2162 = vsel %vm1267, %v1811, 0
        %2164 = vmatprep.subr.bf16.mxu0 %v2143
        %2165 = vmatpush1.bf16.msra.mxu0 %v2142
        %2166 = vmatprep.subr.bf16.mxu0 %v2147
        %2167 = vmatpush1.bf16.msra.mxu0 %v2146
        %2168 = vmatprep.subr.bf16.mxu0 0
        %2169 = vmatpush1.bf16.msra.mxu0 0
        %2170 = vmatprep.subr.bf16.mxu0 0
        %2171 = vmatpush1.bf16.msra.mxu0 0
        %2172 = vmatprep.subr.bf16.mxu0 0
        %2173 = vmatpush1.bf16.msra.mxu0 0
        %2174 = vmatprep.subr.bf16.mxu0 0
        %2175 = vmatpush1.bf16.msra.mxu0 0
        %2176 = vmatprep.subr.bf16.mxu0 0
        %2177 = vmatpush1.bf16.msra.mxu0 0
        %2178 = vmatprep.subr.bf16.mxu0 0
        %2179 = vmatpush1.bf16.msra.mxu0 0
        %2180 = vmatprep.subr.bf16.mxu0 0
        %2181 = vmatpush1.bf16.msra.mxu0 0
        %2182 = vmatprep.subr.bf16.mxu0 0
        %2183 = vmatpush1.bf16.msra.mxu0 0
        %2184 = vmatprep.subr.bf16.mxu0 0
        %2185 = vmatpush1.bf16.msra.mxu0 0
        %2186 = vmatprep.subr.bf16.mxu0 0
        %2187 = vmatpush1.bf16.msra.mxu0 0
        %2188 = vmatprep.subr.bf16.mxu0 0
        %2189 = vmatpush1.bf16.msra.mxu0 0
        %2190 = vmatprep.subr.bf16.mxu0 0
        %2191 = vmatpush1.bf16.msra.mxu0 0
        %2192 = vmatprep.subr.bf16.mxu0 0
        %2193 = vmatpush1.bf16.msra.mxu0 0
        %2194 = vmatprep.subr.bf16.mxu0 0
        %2195 = vmatpush1.bf16.msra.mxu0 0
        %2196 = vmatprep.mubr.bf16.mxu0 0
        %2197 = vmatmul.mubr.bf16.gmra.mrb[0].mxu0 %v2159
        %v2198 = vpop.f32.mrb[0].mxu0
        %v2199 = vadd.f32 %v2047, %v2198
        %v2200 = vpop.f32.mrb[0].mxu0
        %v2201 = vadd.f32 %v2049, %v2200
        %v2202 = vpop.f32.mrb[0].mxu0
        %v2203 = vadd.f32 %v2051, %v2202
        %v2204 = vpop.f32.mrb[0].mxu0
        %v2205 = vadd.f32 %v2053, %v2204
        %2206 = vmatprep.mubr.bf16.mxu0 0
        %2207 = vmatmul.mubr.bf16.gmra.mrb[0].mxu0 %v2162
        %v2208 = vpop.f32.mrb[0].mxu0
        %v2209 = vadd.f32 %v2057, %v2208
        %v2210 = vpop.f32.mrb[0].mxu0
        %v2211 = vadd.f32 %v2059, %v2210
        %v2212 = vpop.f32.mrb[0].mxu0
        %v2213 = vadd.f32 %v2061, %v2212
        %v2214 = vpop.f32.mrb[0].mxu0
        %v2215 = vadd.f32 %v2063, %v2214
        %2216 = vdwg.mxu0
        %2217 = vmatprep.subr.bf16.mxu0 %v2145
        %2218 = vmatpush1.bf16.msra.mxu0 %v2144
        %2219 = vmatprep.subr.bf16.mxu0 %v2149
        %2220 = vmatpush1.bf16.msra.mxu0 %v2148
        %2221 = vmatprep.subr.bf16.mxu0 0
        %2222 = vmatpush1.bf16.msra.mxu0 0
        %2223 = vmatprep.subr.bf16.mxu0 0
        %2224 = vmatpush1.bf16.msra.mxu0 0
        %2225 = vmatprep.subr.bf16.mxu0 0
        %2226 = vmatpush1.bf16.msra.mxu0 0
        %2227 = vmatprep.subr.bf16.mxu0 0
        %2228 = vmatpush1.bf16.msra.mxu0 0
        %2229 = vmatprep.subr.bf16.mxu0 0
        %2230 = vmatpush1.bf16.msra.mxu0 0
        %2231 = vmatprep.subr.bf16.mxu0 0
        %2232 = vmatpush1.bf16.msra.mxu0 0
        %2233 = vmatprep.subr.bf16.mxu0 0
        %2234 = vmatpush1.bf16.msra.mxu0 0
        %2235 = vmatprep.subr.bf16.mxu0 0
        %2236 = vmatpush1.bf16.msra.mxu0 0
        %2237 = vmatprep.subr.bf16.mxu0 0
        %2238 = vmatpush1.bf16.msra.mxu0 0
        %2239 = vmatprep.subr.bf16.mxu0 0
        %2240 = vmatpush1.bf16.msra.mxu0 0
        %2241 = vmatprep.subr.bf16.mxu0 0
        %2242 = vmatpush1.bf16.msra.mxu0 0
        %2243 = vmatprep.subr.bf16.mxu0 0
        %2244 = vmatpush1.bf16.msra.mxu0 0
        %2245 = vmatprep.subr.bf16.mxu0 0
        %2246 = vmatpush1.bf16.msra.mxu0 0
        %2247 = vmatprep.subr.bf16.mxu0 0
        %2248 = vmatpush1.bf16.msra.mxu0 0
        %2249 = vmatprep.mubr.bf16.mxu0 0
        %2250 = vmatmul.mubr.bf16.gmra.mrb[0].mxu0 %v2159
        %v2251 = vpop.f32.mrb[0].mxu0
        %v2252 = vadd.f32 %v2100, %v2251
        %v2253 = vpop.f32.mrb[0].mxu0
        %v2254 = vadd.f32 %v2102, %v2253
        %v2255 = vpop.f32.mrb[0].mxu0
        %v2256 = vadd.f32 %v2104, %v2255
        %v2257 = vpop.f32.mrb[0].mxu0
        %v2258 = vadd.f32 %v2106, %v2257
        %2259 = vmatprep.mubr.bf16.mxu0 0
        %2260 = vmatmul.mubr.bf16.gmra.mrb[0].mxu0 %v2162
        %v2261 = vpop.f32.mrb[0].mxu0
        %v2262 = vadd.f32 %v2110, %v2261
        %v2263 = vpop.f32.mrb[0].mxu0
        %v2264 = vadd.f32 %v2112, %v2263
        %v2265 = vpop.f32.mrb[0].mxu0
        %v2266 = vadd.f32 %v2114, %v2265
        %v2267 = vpop.f32.mrb[0].mxu0
        %v2268 = vadd.f32 %v2116, %v2267
        %2269 = vdwg.mxu0
        %v2270 = vpack.c.bf16 %v2203, %v2199
        %v2271 = vpack.c.bf16 %v2205, %v2201
        %v2272 = vpack.c.bf16 %v2256, %v2252
        %v2273 = vpack.c.bf16 %v2258, %v2254
        %v2274 = vpack.c.bf16 %v2213, %v2209
        %v2275 = vpack.c.bf16 %v2215, %v2211
        %v2276 = vpack.c.bf16 %v2266, %v2262
        %v2277 = vpack.c.bf16 %v2268, %v2264
        %v2278 = vld [vmem:[%s10] sm:$0x1]
        %v2280 = vlaneseq
        %v2281 = vshrl.u32 %v2280, 7
        %v2282 = vsub.s32 0, %v2281
        %v2283 = vrot.slane %v2278, %v2282
        %2285 = vmatprep.subr.bf16.mxu0 0
        %2286 = vmatpush1.bf16.msra.mxu0 %v2270
        %2287 = vmatprep.subr.bf16.mxu0 0
        %2288 = vmatpush1.bf16.msra.mxu0 %v2274
        %2289 = vmatprep.subr.bf16.mxu0 0
        %2290 = vmatpush1.bf16.msra.mxu0 %v2271
        %2291 = vmatprep.subr.bf16.mxu0 0
        %2292 = vmatpush1.bf16.msra.mxu0 %v2275
        %2293 = vmatprep.subr.bf16.mxu0 0
        %2294 = vmatpush1.bf16.msra.mxu0 %v2272
        %2295 = vmatprep.subr.bf16.mxu0 0
        %2296 = vmatpush1.bf16.msra.mxu0 %v2276
        %2297 = vmatprep.subr.bf16.mxu0 0
        %2298 = vmatpush1.bf16.msra.mxu0 %v2273
        %2299 = vmatprep.subr.bf16.mxu0 0
        %2300 = vmatpush1.bf16.msra.mxu0 %v2277
        %2301 = vmatprep.subr.bf16.mxu0 0
        %2302 = vmatpush1.bf16.msra.mxu0 0
        %2303 = vmatprep.subr.bf16.mxu0 0
        %2304 = vmatpush1.bf16.msra.mxu0 0
        %2305 = vmatprep.subr.bf16.mxu0 0
        %2306 = vmatpush1.bf16.msra.mxu0 0
        %2307 = vmatprep.subr.bf16.mxu0 0
        %2308 = vmatpush1.bf16.msra.mxu0 0
        %2309 = vmatprep.subr.bf16.mxu0 0
        %2310 = vmatpush1.bf16.msra.mxu0 0
        %2311 = vmatprep.subr.bf16.mxu0 0
        %2312 = vmatpush1.bf16.msra.mxu0 0
        %2313 = vmatprep.subr.bf16.mxu0 0
        %2314 = vmatpush1.bf16.msra.mxu0 0
        %2315 = vmatprep.subr.bf16.mxu0 0
        %2316 = vmatpush1.bf16.msra.mxu0 0
        %2317 = vmatprep.mubr.bf16.mxu0 0
        %2318 = vmatmul.mubr.bf16.gmra.mrb[0].mxu0 %v1669
        %v2319 = vpop.f32.mrb[0].mxu0
        %v2320 = vadd.f32 %v2283, %v2319
        %v2321 = vpop.f32.mrb[0].mxu0
        %v2322 = vpop.f32.mrb[0].mxu0
        %v2323 = vadd.f32 %v2283, %v2322
        %v2324 = vpop.f32.mrb[0].mxu0
        %2325 = vmatprep.mubr.bf16.mxu0 0
        %2326 = vmatmul.mubr.bf16.gmra.mrb[0].mxu0 %v1670
        %v2327 = vpop.f32.mrb[0].mxu0
        %v2328 = vadd.f32 %v2283, %v2327
        %v2329 = vpop.f32.mrb[0].mxu0
        %v2330 = vpop.f32.mrb[0].mxu0
        %v2331 = vadd.f32 %v2283, %v2330
        %v2332 = vpop.f32.mrb[0].mxu0
        %2333 = vdwg.mxu0
        %v2334 = vmax.f32 %v2320, 0.0
        %v2335 = vmax.f32 %v2323, 0.0
        %v2336 = vmax.f32 %v2328, 0.0
        %v2337 = vmax.f32 %v2331, 0.0
        %v2338 = vpack.c.bf16 %v2335, %v2334
        %v2339 = vpack.c.bf16 %v2337, %v2336
        %2340 = vxpose.xlu0.b32.start [1/16] %v2334, 128
        %2341 = vxpose.xlu0.b32.cont [2/16] %v2335, 128
        %2342 = vxpose.xlu0.b32.cont [3/16] %v2336, 128
        %2343 = vxpose.xlu0.b32.cont [4/16] %v2337, 128
        %2344 = vxpose.xlu0.b32.cont [5/16] 0.0, 128
        %2345 = vxpose.xlu0.b32.cont [6/16] 0.0, 128
        %2346 = vxpose.xlu0.b32.cont [7/16] 0.0, 128
        %2347 = vxpose.xlu0.b32.cont [8/16] 0.0, 128
        %2348 = vxpose.xlu0.b32.cont [9/16] 0.0, 128
        %2349 = vxpose.xlu0.b32.cont [10/16] 0.0, 128
        %2350 = vxpose.xlu0.b32.cont [11/16] 0.0, 128
        %2351 = vxpose.xlu0.b32.cont [12/16] 0.0, 128
        %2352 = vxpose.xlu0.b32.cont [13/16] 0.0, 128
        %2353 = vxpose.xlu0.b32.cont [14/16] 0.0, 128
        %2354 = vxpose.xlu0.b32.cont [15/16] 0.0, 128
        %2355 = vxpose.xlu0.b32.end [16/16] 0.0, 128
        %v2356 = vpop.trf.xlu0
        %v2357 = vpop.trf.xlu0
        %v2358 = vpop.trf.xlu0
        %v2359 = vpop.trf.xlu0
        %v2360 = vpop.trf.xlu0
        %v2361 = vpop.trf.xlu0
        %v2362 = vpop.trf.xlu0
        %v2363 = vpop.trf.xlu0
        %v2364 = vpop.trf.xlu0
        %v2365 = vpop.trf.xlu0
        %v2366 = vpop.trf.xlu0
        %v2367 = vpop.trf.xlu0
        %v2368 = vpop.trf.xlu0
        %v2369 = vpop.trf.xlu0
        %v2370 = vpop.trf.xlu0
        %v2371 = vpop.trf.xlu0
        %v2372 = vpack.c.bf16 %v2357, %v2356
        %v2373 = vpack.c.bf16 %v2359, %v2358
        %v2374 = vpack.c.bf16 %v2361, %v2360
        %v2375 = vpack.c.bf16 %v2363, %v2362
        %v2376 = vpack.c.bf16 %v2365, %v2364
        %v2377 = vpack.c.bf16 %v2367, %v2366
        %v2378 = vpack.c.bf16 %v2369, %v2368
        %v2379 = vpack.c.bf16 %v2371, %v2370
        %v2380 = vld [vmem:[#allocation13] sm:$0xff]
        %v2381 = vld [vmem:[#allocation13 + $0x8] sm:$0xff]
        %v2382 = vld [vmem:[#allocation13 + $0x10] sm:$0xff]
        %v2383 = vld [vmem:[#allocation13 + $0x18] sm:$0xff]
        %v2384 = vld [vmem:[#allocation13 + $0x20] sm:$0xff]
        %v2385 = vld [vmem:[#allocation13 + $0x28] sm:$0xff]
        %v2386 = vld [vmem:[#allocation13 + $0x30] sm:$0xff]
        %v2387 = vld [vmem:[#allocation13 + $0x38] sm:$0xff]
        %v2388 = vld [vmem:[#allocation13 + $0x40] sm:$0xff]
        %v2389 = vld [vmem:[#allocation13 + $0x48] sm:$0xff]
        %v2390 = vld [vmem:[#allocation13 + $0x50] sm:$0xff]
        %v2391 = vld [vmem:[#allocation13 + $0x58] sm:$0xff]
        %v2392 = vld [vmem:[#allocation13 + $0x60] sm:$0xff]
        %v2393 = vld [vmem:[#allocation13 + $0x68] sm:$0xff]
        %v2394 = vld [vmem:[#allocation13 + $0x70] sm:$0xff]
        %v2395 = vld [vmem:[#allocation13 + $0x78] sm:$0xff]
        %v2396 = vld [vmem:[#allocation13 + $0x80] sm:$0xff]
        %v2397 = vld [vmem:[#allocation13 + $0x88] sm:$0xff]
        %v2398 = vld [vmem:[#allocation13 + $0x90] sm:$0xff]
        %v2399 = vld [vmem:[#allocation13 + $0x98] sm:$0xff]
        %v2400 = vld [vmem:[#allocation13 + $0xa0] sm:$0xff]
        %v2401 = vld [vmem:[#allocation13 + $0xa8] sm:$0xff]
        %v2402 = vld [vmem:[#allocation13 + $0xb0] sm:$0xff]
        %v2403 = vld [vmem:[#allocation13 + $0xb8] sm:$0xff]
        %v2404 = vld [vmem:[#allocation13 + $0xc0] sm:$0xff]
        %v2405 = vld [vmem:[#allocation13 + $0xc8] sm:$0xff]
        %v2406 = vld [vmem:[#allocation13 + $0xd0] sm:$0xff]
        %v2407 = vld [vmem:[#allocation13 + $0xd8] sm:$0xff]
        %v2408 = vld [vmem:[#allocation13 + $0xe0] sm:$0xff]
        %v2409 = vld [vmem:[#allocation13 + $0xe8] sm:$0xff]
        %v2410 = vld [vmem:[#allocation13 + $0xf0] sm:$0xff]
        %v2411 = vld [vmem:[#allocation13 + $0xf8] sm:$0xff]
        %v2444 = vunpack.c.l.b16 %v2380
        %v2445 = vunpack.c.h.b16 %v2380
        %v2446 = vunpack.c.l.b16 %v2381
        %v2447 = vunpack.c.h.b16 %v2381
        %v2448 = vunpack.c.l.b16 %v2382
        %v2449 = vunpack.c.h.b16 %v2382
        %v2450 = vunpack.c.l.b16 %v2383
        %v2451 = vunpack.c.h.b16 %v2383
        %v2452 = vunpack.c.l.b16 %v2384
        %v2453 = vunpack.c.h.b16 %v2384
        %v2454 = vunpack.c.l.b16 %v2385
        %v2455 = vunpack.c.h.b16 %v2385
        %v2456 = vunpack.c.l.b16 %v2386
        %v2457 = vunpack.c.h.b16 %v2386
        %v2458 = vunpack.c.l.b16 %v2387
        %v2459 = vunpack.c.h.b16 %v2387
        %v2460 = vunpack.c.l.b16 %v2388
        %v2461 = vunpack.c.h.b16 %v2388
        %v2462 = vunpack.c.l.b16 %v2389
        %v2463 = vunpack.c.h.b16 %v2389
        %v2464 = vunpack.c.l.b16 %v2390
        %v2465 = vunpack.c.h.b16 %v2390
        %v2466 = vunpack.c.l.b16 %v2391
        %v2467 = vunpack.c.h.b16 %v2391
        %v2468 = vunpack.c.l.b16 %v2392
        %v2469 = vunpack.c.h.b16 %v2392
        %v2470 = vunpack.c.l.b16 %v2393
        %v2471 = vunpack.c.h.b16 %v2393
        %v2472 = vunpack.c.l.b16 %v2394
        %v2473 = vunpack.c.h.b16 %v2394
        %v2474 = vunpack.c.l.b16 %v2395
        %v2475 = vunpack.c.h.b16 %v2395
        %v2476 = vunpack.c.l.b16 %v2396
        %v2477 = vunpack.c.h.b16 %v2396
        %v2478 = vunpack.c.l.b16 %v2397
        %v2479 = vunpack.c.h.b16 %v2397
        %v2480 = vunpack.c.l.b16 %v2398
        %v2481 = vunpack.c.h.b16 %v2398
        %v2482 = vunpack.c.l.b16 %v2399
        %v2483 = vunpack.c.h.b16 %v2399
        %v2484 = vunpack.c.l.b16 %v2400
        %v2485 = vunpack.c.h.b16 %v2400
        %v2486 = vunpack.c.l.b16 %v2401
        %v2487 = vunpack.c.h.b16 %v2401
        %v2488 = vunpack.c.l.b16 %v2402
        %v2489 = vunpack.c.h.b16 %v2402
        %v2490 = vunpack.c.l.b16 %v2403
        %v2491 = vunpack.c.h.b16 %v2403
        %v2492 = vunpack.c.l.b16 %v2404
        %v2493 = vunpack.c.h.b16 %v2404
        %v2494 = vunpack.c.l.b16 %v2405
        %v2495 = vunpack.c.h.b16 %v2405
        %v2496 = vunpack.c.l.b16 %v2406
        %v2497 = vunpack.c.h.b16 %v2406
        %v2498 = vunpack.c.l.b16 %v2407
        %v2499 = vunpack.c.h.b16 %v2407
        %v2500 = vunpack.c.l.b16 %v2408
        %v2501 = vunpack.c.h.b16 %v2408
        %v2502 = vunpack.c.l.b16 %v2409
        %v2503 = vunpack.c.h.b16 %v2409
        %v2504 = vunpack.c.l.b16 %v2410
        %v2505 = vunpack.c.h.b16 %v2410
        %v2506 = vunpack.c.l.b16 %v2411
        %v2507 = vunpack.c.h.b16 %v2411
        %v2508 = vpack.c.b16 %v2448, %v2444
        %v2509 = vpack.c.b16 %v2449, %v2445
        %v2510 = vpack.c.b16 %v2450, %v2446
        %v2511 = vpack.c.b16 %v2451, %v2447
        %v2512 = vpack.c.b16 %v2456, %v2452
        %v2513 = vpack.c.b16 %v2457, %v2453
        %v2514 = vpack.c.b16 %v2458, %v2454
        %v2515 = vpack.c.b16 %v2459, %v2455
        %v2516 = vpack.c.b16 %v2464, %v2460
        %v2517 = vpack.c.b16 %v2465, %v2461
        %v2518 = vpack.c.b16 %v2466, %v2462
        %v2519 = vpack.c.b16 %v2467, %v2463
        %v2520 = vpack.c.b16 %v2472, %v2468
        %v2521 = vpack.c.b16 %v2473, %v2469
        %v2522 = vpack.c.b16 %v2474, %v2470
        %v2523 = vpack.c.b16 %v2475, %v2471
        %v2524 = vpack.c.b16 %v2480, %v2476
        %v2525 = vpack.c.b16 %v2481, %v2477
        %v2526 = vpack.c.b16 %v2482, %v2478
        %v2527 = vpack.c.b16 %v2483, %v2479
        %v2528 = vpack.c.b16 %v2488, %v2484
        %v2529 = vpack.c.b16 %v2489, %v2485
        %v2530 = vpack.c.b16 %v2490, %v2486
        %v2531 = vpack.c.b16 %v2491, %v2487
        %v2532 = vpack.c.b16 %v2496, %v2492
        %v2533 = vpack.c.b16 %v2497, %v2493
        %v2534 = vpack.c.b16 %v2498, %v2494
        %v2535 = vpack.c.b16 %v2499, %v2495
        %v2536 = vpack.c.b16 %v2504, %v2500
        %v2537 = vpack.c.b16 %v2505, %v2501
        %v2538 = vpack.c.b16 %v2506, %v2502
        %v2539 = vpack.c.b16 %v2507, %v2503
        %2572 = vmatprep.subr.bf16.mxu0 %v2509
        %2573 = vmatpush1.bf16.msra.mxu0 %v2508
        %2574 = vmatprep.subr.bf16.mxu0 %v2513
        %2575 = vmatpush1.bf16.msra.mxu0 %v2512
        %2576 = vmatprep.subr.bf16.mxu0 %v2517
        %2577 = vmatpush1.bf16.msra.mxu0 %v2516
        %2578 = vmatprep.subr.bf16.mxu0 %v2521
        %2579 = vmatpush1.bf16.msra.mxu0 %v2520
        %2580 = vmatprep.subr.bf16.mxu0 %v2525
        %2581 = vmatpush1.bf16.msra.mxu0 %v2524
        %2582 = vmatprep.subr.bf16.mxu0 %v2529
        %2583 = vmatpush1.bf16.msra.mxu0 %v2528
        %2584 = vmatprep.subr.bf16.mxu0 %v2533
        %2585 = vmatpush1.bf16.msra.mxu0 %v2532
        %2586 = vmatprep.subr.bf16.mxu0 %v2537
        %2587 = vmatpush1.bf16.msra.mxu0 %v2536
        %2588 = vmatprep.subr.bf16.mxu0 0
        %2589 = vmatpush1.bf16.msra.mxu0 0
        %2590 = vmatprep.subr.bf16.mxu0 0
        %2591 = vmatpush1.bf16.msra.mxu0 0
        %2592 = vmatprep.subr.bf16.mxu0 0
        %2593 = vmatpush1.bf16.msra.mxu0 0
        %2594 = vmatprep.subr.bf16.mxu0 0
        %2595 = vmatpush1.bf16.msra.mxu0 0
        %2596 = vmatprep.subr.bf16.mxu0 0
        %2597 = vmatpush1.bf16.msra.mxu0 0
        %2598 = vmatprep.subr.bf16.mxu0 0
        %2599 = vmatpush1.bf16.msra.mxu0 0
        %2600 = vmatprep.subr.bf16.mxu0 0
        %2601 = vmatpush1.bf16.msra.mxu0 0
        %2602 = vmatprep.subr.bf16.mxu0 0
        %2603 = vmatpush1.bf16.msra.mxu0 0
        %2604 = vmatprep.mubr.bf16.mxu0 0
        %2605 = vmatmul.mubr.bf16.gmra.mrb[0].mxu0 %v2338
        %v2606 = vpop.f32.mrb[0].mxu0
        %v2607 = vadd.f32 0.0, %v2606
        %v2608 = vpop.f32.mrb[0].mxu0
        %v2609 = vadd.f32 0.0, %v2608
        %v2610 = vpop.f32.mrb[0].mxu0
        %v2611 = vadd.f32 0.0, %v2610
        %v2612 = vpop.f32.mrb[0].mxu0
        %v2613 = vadd.f32 0.0, %v2612
        %2614 = vmatprep.mubr.bf16.mxu0 0
        %2615 = vmatmul.mubr.bf16.gmra.mrb[0].mxu0 %v2339
        %v2616 = vpop.f32.mrb[0].mxu0
        %v2617 = vadd.f32 0.0, %v2616
        %v2618 = vpop.f32.mrb[0].mxu0
        %v2619 = vadd.f32 0.0, %v2618
        %v2620 = vpop.f32.mrb[0].mxu0
        %v2621 = vadd.f32 0.0, %v2620
        %v2622 = vpop.f32.mrb[0].mxu0
        %v2623 = vadd.f32 0.0, %v2622
        %2624 = vdwg.mxu0
        %2625 = vmatprep.subr.bf16.mxu0 %v2511
        %2626 = vmatpush1.bf16.msra.mxu0 %v2510
        %2627 = vmatprep.subr.bf16.mxu0 %v2515
        %2628 = vmatpush1.bf16.msra.mxu0 %v2514
        %2629 = vmatprep.subr.bf16.mxu0 %v2519
        %2630 = vmatpush1.bf16.msra.mxu0 %v2518
        %2631 = vmatprep.subr.bf16.mxu0 %v2523
        %2632 = vmatpush1.bf16.msra.mxu0 %v2522
        %2633 = vmatprep.subr.bf16.mxu0 %v2527
        %2634 = vmatpush1.bf16.msra.mxu0 %v2526
        %2635 = vmatprep.subr.bf16.mxu0 %v2531
        %2636 = vmatpush1.bf16.msra.mxu0 %v2530
        %2637 = vmatprep.subr.bf16.mxu0 %v2535
        %2638 = vmatpush1.bf16.msra.mxu0 %v2534
        %2639 = vmatprep.subr.bf16.mxu0 %v2539
        %2640 = vmatpush1.bf16.msra.mxu0 %v2538
        %2641 = vmatprep.subr.bf16.mxu0 0
        %2642 = vmatpush1.bf16.msra.mxu0 0
        %2643 = vmatprep.subr.bf16.mxu0 0
        %2644 = vmatpush1.bf16.msra.mxu0 0
        %2645 = vmatprep.subr.bf16.mxu0 0
        %2646 = vmatpush1.bf16.msra.mxu0 0
        %2647 = vmatprep.subr.bf16.mxu0 0
        %2648 = vmatpush1.bf16.msra.mxu0 0
        %2649 = vmatprep.subr.bf16.mxu0 0
        %2650 = vmatpush1.bf16.msra.mxu0 0
        %2651 = vmatprep.subr.bf16.mxu0 0
        %2652 = vmatpush1.bf16.msra.mxu0 0
        %2653 = vmatprep.subr.bf16.mxu0 0
        %2654 = vmatpush1.bf16.msra.mxu0 0
        %2655 = vmatprep.subr.bf16.mxu0 0
        %2656 = vmatpush1.bf16.msra.mxu0 0
        %2657 = vmatprep.mubr.bf16.mxu0 0
        %2658 = vmatmul.mubr.bf16.gmra.mrb[0].mxu0 %v2338
        %v2659 = vpop.f32.mrb[0].mxu0
        %v2660 = vadd.f32 0.0, %v2659
        %v2661 = vpop.f32.mrb[0].mxu0
        %v2662 = vadd.f32 0.0, %v2661
        %v2663 = vpop.f32.mrb[0].mxu0
        %v2664 = vadd.f32 0.0, %v2663
        %v2665 = vpop.f32.mrb[0].mxu0
        %v2666 = vadd.f32 0.0, %v2665
        %2667 = vmatprep.mubr.bf16.mxu0 0
        %2668 = vmatmul.mubr.bf16.gmra.mrb[0].mxu0 %v2339
        %v2669 = vpop.f32.mrb[0].mxu0
        %v2670 = vadd.f32 0.0, %v2669
        %v2671 = vpop.f32.mrb[0].mxu0
        %v2672 = vadd.f32 0.0, %v2671
        %v2673 = vpop.f32.mrb[0].mxu0
        %v2674 = vadd.f32 0.0, %v2673
        %v2675 = vpop.f32.mrb[0].mxu0
        %v2676 = vadd.f32 0.0, %v2675
        %2677 = vdwg.mxu0
        %v2678 = vpack.c.bf16 %v2611, %v2607
        %v2679 = vpack.c.bf16 %v2613, %v2609
        %v2680 = vpack.c.bf16 %v2664, %v2660
        %v2681 = vpack.c.bf16 %v2666, %v2662
        %v2682 = vpack.c.bf16 %v2621, %v2617
        %v2683 = vpack.c.bf16 %v2623, %v2619
        %v2684 = vpack.c.bf16 %v2674, %v2670
        %v2685 = vpack.c.bf16 %v2676, %v2672
        %2686 = vmatprep.subr.bf16.mxu0 0
        %2687 = vmatpush1.bf16.msra.mxu0 %v2372
        %2688 = vmatprep.subr.bf16.mxu0 0
        %2689 = vmatpush1.bf16.msra.mxu0 %v2373
        %2690 = vmatprep.subr.bf16.mxu0 0
        %2691 = vmatpush1.bf16.msra.mxu0 %v2374
        %2692 = vmatprep.subr.bf16.mxu0 0
        %2693 = vmatpush1.bf16.msra.mxu0 %v2375
        %2694 = vmatprep.subr.bf16.mxu0 0
        %2695 = vmatpush1.bf16.msra.mxu0 %v2376
        %2696 = vmatprep.subr.bf16.mxu0 0
        %2697 = vmatpush1.bf16.msra.mxu0 %v2377
        %2698 = vmatprep.subr.bf16.mxu0 0
        %2699 = vmatpush1.bf16.msra.mxu0 %v2378
        %2700 = vmatprep.subr.bf16.mxu0 0
        %2701 = vmatpush1.bf16.msra.mxu0 %v2379
        %2702 = vmatprep.subr.bf16.mxu0 0
        %2703 = vmatpush1.bf16.msra.mxu0 0
        %2704 = vmatprep.subr.bf16.mxu0 0
        %2705 = vmatpush1.bf16.msra.mxu0 0
        %2706 = vmatprep.subr.bf16.mxu0 0
        %2707 = vmatpush1.bf16.msra.mxu0 0
        %2708 = vmatprep.subr.bf16.mxu0 0
        %2709 = vmatpush1.bf16.msra.mxu0 0
        %2710 = vmatprep.subr.bf16.mxu0 0
        %2711 = vmatpush1.bf16.msra.mxu0 0
        %2712 = vmatprep.subr.bf16.mxu0 0
        %2713 = vmatpush1.bf16.msra.mxu0 0
        %2714 = vmatprep.subr.bf16.mxu0 0
        %2715 = vmatpush1.bf16.msra.mxu0 0
        %2716 = vmatprep.subr.bf16.mxu0 0
        %2717 = vmatpush1.bf16.msra.mxu0 0
        %2718 = vmatprep.mubr.bf16.mxu0 0
        %2719 = vmatmul.mubr.bf16.gmra.mrb[0].mxu0 %v2678
        %v2720 = vpop.f32.mrb[0].mxu0
        %v2721 = vadd.f32 %v639, %v2720
        %v2722 = vpop.f32.mrb[0].mxu0
        %v2723 = vpop.f32.mrb[0].mxu0
        %v2724 = vadd.f32 %v640, %v2723
        %v2725 = vpop.f32.mrb[0].mxu0
        %2726 = vmatprep.mubr.bf16.mxu0 0
        %2727 = vmatmul.mubr.bf16.gmra.mrb[0].mxu0 %v2682
        %v2728 = vpop.f32.mrb[0].mxu0
        %v2729 = vadd.f32 %v641, %v2728
        %v2730 = vpop.f32.mrb[0].mxu0
        %v2731 = vpop.f32.mrb[0].mxu0
        %v2732 = vadd.f32 %v642, %v2731
        %v2733 = vpop.f32.mrb[0].mxu0
        %2734 = vdwg.mxu0
        %v2735 = vsel %vm1267, %v2721, -inf
        %v2736 = vsel %vm1267, %v2724, -inf
        %v2737 = vsel %vm1267, %v2729, -inf
        %v2738 = vsel %vm1267, %v2732, -inf
        %v2739 = vmax.f32 %v2735, %v2736
        %v2740 = vmax.f32 %v2737, %v2738
        %v2741 = vmax.f32 %v2739, %v2740
        %v2742 = vrot.slane %v2741, 4
        %v2743 = vmax.f32 %v2741, %v2742
        %v2744 = vrot.slane %v2743, 2
        %v2745 = vmax.f32 %v2743, %v2744
        %v2746 = vrot.slane %v2745, 1
        %v2747 = vmax.f32 %v2745, %v2746
        %v2748 = vsub.f32 %v2721, %v2747
        %v2749 = vsub.f32 %v2724, %v2747
        %v2750 = vsub.f32 %v2729, %v2747
        %v2751 = vsub.f32 %v2732, %v2747
        %v2752 = vmul.f32 %v2748, 1.442695
        %v2753 = vpow.pop %v2752
        %v2754 = vmul.f32 %v2749, 1.442695
        %v2755 = vpow.pop %v2754
        %v2756 = vmul.f32 %v2750, 1.442695
        %v2757 = vpow.pop %v2756
        %v2758 = vmul.f32 %v2751, 1.442695
        %v2759 = vpow.pop %v2758
        %v2760 = vsel %vm1267, %v2753, 0.0
        %v2761 = vsel %vm1267, %v2755, 0.0
        %v2762 = vadd.f32 %v2760, %v2761
        %v2763 = vsel %vm1267, %v2757, 0.0
        %v2764 = vadd.f32 %v2762, %v2763
        %v2765 = vsel %vm1267, %v2759, 0.0
        %v2766 = vadd.f32 %v2764, %v2765
        %v2767 = vrot.slane %v2766, 4
        %v2768 = vadd.f32 %v2766, %v2767
        %v2769 = vrot.slane %v2768, 2
        %v2770 = vadd.f32 %v2768, %v2769
        %v2771 = vrot.slane %v2770, 1
        %v2772 = vadd.f32 %v2770, %v2771
        %v2773 = vrcp.pop %v2772
        %v2774 = vmul.f32 %v2753, %v2773
        %v2775 = vmul.f32 %v2755, %v2773
        %v2776 = vmul.f32 %v2757, %v2773
        %v2777 = vmul.f32 %v2759, %v2773
        %v2778 = vmax.f32 %v1311, %v2774
        %v2779 = vmax.f32 %v1312, %v2775
        %v2780 = vmax.f32 %v1313, %v2776
        %v2781 = vmax.f32 %v1314, %v2777
        %2782 = vmatprep.subr.bf16.mxu0 0
        %2783 = vmatpush1.bf16.msra.mxu0 %v2372
        %2784 = vmatprep.subr.bf16.mxu0 0
        %2785 = vmatpush1.bf16.msra.mxu0 %v2373
        %2786 = vmatprep.subr.bf16.mxu0 0
        %2787 = vmatpush1.bf16.msra.mxu0 %v2374
        %2788 = vmatprep.subr.bf16.mxu0 0
        %2789 = vmatpush1.bf16.msra.mxu0 %v2375
        %2790 = vmatprep.subr.bf16.mxu0 0
        %2791 = vmatpush1.bf16.msra.mxu0 %v2376
        %2792 = vmatprep.subr.bf16.mxu0 0
        %2793 = vmatpush1.bf16.msra.mxu0 %v2377
        %2794 = vmatprep.subr.bf16.mxu0 0
        %2795 = vmatpush1.bf16.msra.mxu0 %v2378
        %2796 = vmatprep.subr.bf16.mxu0 0
        %2797 = vmatpush1.bf16.msra.mxu0 %v2379
        %2798 = vmatprep.subr.bf16.mxu0 0
        %2799 = vmatpush1.bf16.msra.mxu0 0
        %2800 = vmatprep.subr.bf16.mxu0 0
        %2801 = vmatpush1.bf16.msra.mxu0 0
        %2802 = vmatprep.subr.bf16.mxu0 0
        %2803 = vmatpush1.bf16.msra.mxu0 0
        %2804 = vmatprep.subr.bf16.mxu0 0
        %2805 = vmatpush1.bf16.msra.mxu0 0
        %2806 = vmatprep.subr.bf16.mxu0 0
        %2807 = vmatpush1.bf16.msra.mxu0 0
        %2808 = vmatprep.subr.bf16.mxu0 0
        %2809 = vmatpush1.bf16.msra.mxu0 0
        %2810 = vmatprep.subr.bf16.mxu0 0
        %2811 = vmatpush1.bf16.msra.mxu0 0
        %2812 = vmatprep.subr.bf16.mxu0 0
        %2813 = vmatpush1.bf16.msra.mxu0 0
        %2814 = vmatprep.mubr.bf16.mxu0 0
        %2815 = vmatmul.mubr.bf16.gmra.mrb[0].mxu0 %v2679
        %v2816 = vpop.f32.mrb[0].mxu0
        %v2817 = vadd.f32 %v639, %v2816
        %v2818 = vpop.f32.mrb[0].mxu0
        %v2819 = vpop.f32.mrb[0].mxu0
        %v2820 = vadd.f32 %v640, %v2819
        %v2821 = vpop.f32.mrb[0].mxu0
        %2822 = vmatprep.mubr.bf16.mxu0 0
        %2823 = vmatmul.mubr.bf16.gmra.mrb[0].mxu0 %v2683
        %v2824 = vpop.f32.mrb[0].mxu0
        %v2825 = vadd.f32 %v641, %v2824
        %v2826 = vpop.f32.mrb[0].mxu0
        %v2827 = vpop.f32.mrb[0].mxu0
        %v2828 = vadd.f32 %v642, %v2827
        %v2829 = vpop.f32.mrb[0].mxu0
        %2830 = vdwg.mxu0
        %v2831 = vsel %vm1267, %v2817, -inf
        %v2832 = vsel %vm1267, %v2820, -inf
        %v2833 = vsel %vm1267, %v2825, -inf
        %v2834 = vsel %vm1267, %v2828, -inf
        %v2835 = vmax.f32 %v2831, %v2832
        %v2836 = vmax.f32 %v2833, %v2834
        %v2837 = vmax.f32 %v2835, %v2836
        %v2838 = vrot.slane %v2837, 4
        %v2839 = vmax.f32 %v2837, %v2838
        %v2840 = vrot.slane %v2839, 2
        %v2841 = vmax.f32 %v2839, %v2840
        %v2842 = vrot.slane %v2841, 1
        %v2843 = vmax.f32 %v2841, %v2842
        %v2844 = vsub.f32 %v2817, %v2843
        %v2845 = vsub.f32 %v2820, %v2843
        %v2846 = vsub.f32 %v2825, %v2843
        %v2847 = vsub.f32 %v2828, %v2843
        %v2848 = vmul.f32 %v2844, 1.442695
        %v2849 = vpow.pop %v2848
        %v2850 = vmul.f32 %v2845, 1.442695
        %v2851 = vpow.pop %v2850
        %v2852 = vmul.f32 %v2846, 1.442695
        %v2853 = vpow.pop %v2852
        %v2854 = vmul.f32 %v2847, 1.442695
        %v2855 = vpow.pop %v2854
        %v2856 = vsel %vm1267, %v2849, 0.0
        %v2857 = vsel %vm1267, %v2851, 0.0
        %v2858 = vadd.f32 %v2856, %v2857
        %v2859 = vsel %vm1267, %v2853, 0.0
        %v2860 = vadd.f32 %v2858, %v2859
        %v2861 = vsel %vm1267, %v2855, 0.0
        %v2862 = vadd.f32 %v2860, %v2861
        %v2863 = vrot.slane %v2862, 4
        %v2864 = vadd.f32 %v2862, %v2863
        %v2865 = vrot.slane %v2864, 2
        %v2866 = vadd.f32 %v2864, %v2865
        %v2867 = vrot.slane %v2866, 1
        %v2868 = vadd.f32 %v2866, %v2867
        %v2869 = vrcp.pop %v2868
        %v2870 = vmul.f32 %v2849, %v2869
        %v2871 = vmul.f32 %v2851, %v2869
        %v2872 = vmul.f32 %v2853, %v2869
        %v2873 = vmul.f32 %v2855, %v2869
        %2878 = vrot.lane.b32.xlu0 %v2870, 32
        %v2879 = vpop.permute.xlu0 %2878
        %2880 = vrot.lane.b32.xlu0 %v2871, 32
        %v2881 = vpop.permute.xlu0 %2880
        %2882 = vrot.lane.b32.xlu0 %v2872, 32
        %v2883 = vpop.permute.xlu0 %2882
        %2884 = vrot.lane.b32.xlu0 %v2873, 32
        %v2885 = vpop.permute.xlu0 %2884
        %v2890 = vmax.f32 %v1311, %v2879
        %v2891 = vmax.f32 %v1312, %v2881
        %v2892 = vmax.f32 %v1313, %v2883
        %v2893 = vmax.f32 %v1314, %v2885
        %2894 = vmatprep.subr.bf16.mxu0 0
        %2895 = vmatpush1.bf16.msra.mxu0 %v2372
        %2896 = vmatprep.subr.bf16.mxu0 0
        %2897 = vmatpush1.bf16.msra.mxu0 %v2373
        %2898 = vmatprep.subr.bf16.mxu0 0
        %2899 = vmatpush1.bf16.msra.mxu0 %v2374
        %2900 = vmatprep.subr.bf16.mxu0 0
        %2901 = vmatpush1.bf16.msra.mxu0 %v2375
        %2902 = vmatprep.subr.bf16.mxu0 0
        %2903 = vmatpush1.bf16.msra.mxu0 %v2376
        %2904 = vmatprep.subr.bf16.mxu0 0
        %2905 = vmatpush1.bf16.msra.mxu0 %v2377
        %2906 = vmatprep.subr.bf16.mxu0 0
        %2907 = vmatpush1.bf16.msra.mxu0 %v2378
        %2908 = vmatprep.subr.bf16.mxu0 0
        %2909 = vmatpush1.bf16.msra.mxu0 %v2379
        %2910 = vmatprep.subr.bf16.mxu0 0
        %2911 = vmatpush1.bf16.msra.mxu0 0
        %2912 = vmatprep.subr.bf16.mxu0 0
        %2913 = vmatpush1.bf16.msra.mxu0 0
        %2914 = vmatprep.subr.bf16.mxu0 0
        %2915 = vmatpush1.bf16.msra.mxu0 0
        %2916 = vmatprep.subr.bf16.mxu0 0
        %2917 = vmatpush1.bf16.msra.mxu0 0
        %2918 = vmatprep.subr.bf16.mxu0 0
        %2919 = vmatpush1.bf16.msra.mxu0 0
        %2920 = vmatprep.subr.bf16.mxu0 0
        %2921 = vmatpush1.bf16.msra.mxu0 0
        %2922 = vmatprep.subr.bf16.mxu0 0
        %2923 = vmatpush1.bf16.msra.mxu0 0
        %2924 = vmatprep.subr.bf16.mxu0 0
        %2925 = vmatpush1.bf16.msra.mxu0 0
        %2926 = vmatprep.mubr.bf16.mxu0 0
        %2927 = vmatmul.mubr.bf16.gmra.mrb[0].mxu0 %v2680
        %v2928 = vpop.f32.mrb[0].mxu0
        %v2929 = vadd.f32 %v639, %v2928
        %v2930 = vpop.f32.mrb[0].mxu0
        %v2931 = vpop.f32.mrb[0].mxu0
        %v2932 = vadd.f32 %v640, %v2931
        %v2933 = vpop.f32.mrb[0].mxu0
        %2934 = vmatprep.mubr.bf16.mxu0 0
        %2935 = vmatmul.mubr.bf16.gmra.mrb[0].mxu0 %v2684
        %v2936 = vpop.f32.mrb[0].mxu0
        %v2937 = vadd.f32 %v641, %v2936
        %v2938 = vpop.f32.mrb[0].mxu0
        %v2939 = vpop.f32.mrb[0].mxu0
        %v2940 = vadd.f32 %v642, %v2939
        %v2941 = vpop.f32.mrb[0].mxu0
        %2942 = vdwg.mxu0
        %v2943 = vsel %vm1267, %v2929, -inf
        %v2944 = vsel %vm1267, %v2932, -inf
        %v2945 = vsel %vm1267, %v2937, -inf
        %v2946 = vsel %vm1267, %v2940, -inf
        %v2947 = vmax.f32 %v2943, %v2944
        %v2948 = vmax.f32 %v2945, %v2946
        %v2949 = vmax.f32 %v2947, %v2948
        %v2950 = vrot.slane %v2949, 4
        %v2951 = vmax.f32 %v2949, %v2950
        %v2952 = vrot.slane %v2951, 2
        %v2953 = vmax.f32 %v2951, %v2952
        %v2954 = vrot.slane %v2953, 1
        %v2955 = vmax.f32 %v2953, %v2954
        %v2956 = vsub.f32 %v2929, %v2955
        %v2957 = vsub.f32 %v2932, %v2955
        %v2958 = vsub.f32 %v2937, %v2955
        %v2959 = vsub.f32 %v2940, %v2955
        %v2960 = vmul.f32 %v2956, 1.442695
        %v2961 = vpow.pop %v2960
        %v2962 = vmul.f32 %v2957, 1.442695
        %v2963 = vpow.pop %v2962
        %v2964 = vmul.f32 %v2958, 1.442695
        %v2965 = vpow.pop %v2964
        %v2966 = vmul.f32 %v2959, 1.442695
        %v2967 = vpow.pop %v2966
        %v2968 = vsel %vm1267, %v2961, 0.0
        %v2969 = vsel %vm1267, %v2963, 0.0
        %v2970 = vadd.f32 %v2968, %v2969
        %v2971 = vsel %vm1267, %v2965, 0.0
        %v2972 = vadd.f32 %v2970, %v2971
        %v2973 = vsel %vm1267, %v2967, 0.0
        %v2974 = vadd.f32 %v2972, %v2973
        %v2975 = vrot.slane %v2974, 4
        %v2976 = vadd.f32 %v2974, %v2975
        %v2977 = vrot.slane %v2976, 2
        %v2978 = vadd.f32 %v2976, %v2977
        %v2979 = vrot.slane %v2978, 1
        %v2980 = vadd.f32 %v2978, %v2979
        %v2981 = vrcp.pop %v2980
        %v2982 = vmul.f32 %v2961, %v2981
        %v2983 = vmul.f32 %v2963, %v2981
        %v2984 = vmul.f32 %v2965, %v2981
        %v2985 = vmul.f32 %v2967, %v2981
        %2990 = vrot.lane.b32.xlu0 %v2982, 64
        %v2991 = vpop.permute.xlu0 %2990
        %2992 = vrot.lane.b32.xlu0 %v2983, 64
        %v2993 = vpop.permute.xlu0 %2992
        %2994 = vrot.lane.b32.xlu0 %v2984, 64
        %v2995 = vpop.permute.xlu0 %2994
        %2996 = vrot.lane.b32.xlu0 %v2985, 64
        %v2997 = vpop.permute.xlu0 %2996
        %v3002 = vmax.f32 %v1311, %v2991
        %v3003 = vmax.f32 %v1312, %v2993
        %v3004 = vmax.f32 %v1313, %v2995
        %v3005 = vmax.f32 %v1314, %v2997
        %3006 = vmatprep.subr.bf16.mxu0 0
        %3007 = vmatpush1.bf16.msra.mxu0 %v2372
        %3008 = vmatprep.subr.bf16.mxu0 0
        %3009 = vmatpush1.bf16.msra.mxu0 %v2373
        %3010 = vmatprep.subr.bf16.mxu0 0
        %3011 = vmatpush1.bf16.msra.mxu0 %v2374
        %3012 = vmatprep.subr.bf16.mxu0 0
        %3013 = vmatpush1.bf16.msra.mxu0 %v2375
        %3014 = vmatprep.subr.bf16.mxu0 0
        %3015 = vmatpush1.bf16.msra.mxu0 %v2376
        %3016 = vmatprep.subr.bf16.mxu0 0
        %3017 = vmatpush1.bf16.msra.mxu0 %v2377
        %3018 = vmatprep.subr.bf16.mxu0 0
        %3019 = vmatpush1.bf16.msra.mxu0 %v2378
        %3020 = vmatprep.subr.bf16.mxu0 0
        %3021 = vmatpush1.bf16.msra.mxu0 %v2379
        %3022 = vmatprep.subr.bf16.mxu0 0
        %3023 = vmatpush1.bf16.msra.mxu0 0
        %3024 = vmatprep.subr.bf16.mxu0 0
        %3025 = vmatpush1.bf16.msra.mxu0 0
        %3026 = vmatprep.subr.bf16.mxu0 0
        %3027 = vmatpush1.bf16.msra.mxu0 0
        %3028 = vmatprep.subr.bf16.mxu0 0
        %3029 = vmatpush1.bf16.msra.mxu0 0
        %3030 = vmatprep.subr.bf16.mxu0 0
        %3031 = vmatpush1.bf16.msra.mxu0 0
        %3032 = vmatprep.subr.bf16.mxu0 0
        %3033 = vmatpush1.bf16.msra.mxu0 0
        %3034 = vmatprep.subr.bf16.mxu0 0
        %3035 = vmatpush1.bf16.msra.mxu0 0
        %3036 = vmatprep.subr.bf16.mxu0 0
        %3037 = vmatpush1.bf16.msra.mxu0 0
        %3038 = vmatprep.mubr.bf16.mxu0 0
        %3039 = vmatmul.mubr.bf16.gmra.mrb[0].mxu0 %v2681
        %v3040 = vpop.f32.mrb[0].mxu0
        %v3041 = vadd.f32 %v639, %v3040
        %v3042 = vpop.f32.mrb[0].mxu0
        %v3043 = vpop.f32.mrb[0].mxu0
        %v3044 = vadd.f32 %v640, %v3043
        %v3045 = vpop.f32.mrb[0].mxu0
        %3046 = vmatprep.mubr.bf16.mxu0 0
        %3047 = vmatmul.mubr.bf16.gmra.mrb[0].mxu0 %v2685
        %v3048 = vpop.f32.mrb[0].mxu0
        %v3049 = vadd.f32 %v641, %v3048
        %v3050 = vpop.f32.mrb[0].mxu0
        %v3051 = vpop.f32.mrb[0].mxu0
        %v3052 = vadd.f32 %v642, %v3051
        %v3053 = vpop.f32.mrb[0].mxu0
        %3054 = vdwg.mxu0
        %v3055 = vsel %vm1267, %v3041, -inf
        %v3056 = vsel %vm1267, %v3044, -inf
        %v3057 = vsel %vm1267, %v3049, -inf
        %v3058 = vsel %vm1267, %v3052, -inf
        %v3059 = vmax.f32 %v3055, %v3056
        %v3060 = vmax.f32 %v3057, %v3058
        %v3061 = vmax.f32 %v3059, %v3060
        %v3062 = vrot.slane %v3061, 4
        %v3063 = vmax.f32 %v3061, %v3062
        %v3064 = vrot.slane %v3063, 2
        %v3065 = vmax.f32 %v3063, %v3064
        %v3066 = vrot.slane %v3065, 1
        %v3067 = vmax.f32 %v3065, %v3066
        %v3068 = vsub.f32 %v3041, %v3067
        %v3069 = vsub.f32 %v3044, %v3067
        %v3070 = vsub.f32 %v3049, %v3067
        %v3071 = vsub.f32 %v3052, %v3067
        %v3072 = vmul.f32 %v3068, 1.442695
        %v3073 = vpow.pop %v3072
        %v3074 = vmul.f32 %v3069, 1.442695
        %v3075 = vpow.pop %v3074
        %v3076 = vmul.f32 %v3070, 1.442695
        %v3077 = vpow.pop %v3076
        %v3078 = vmul.f32 %v3071, 1.442695
        %v3079 = vpow.pop %v3078
        %v3080 = vsel %vm1267, %v3073, 0.0
        %v3081 = vsel %vm1267, %v3075, 0.0
        %v3082 = vadd.f32 %v3080, %v3081
        %v3083 = vsel %vm1267, %v3077, 0.0
        %v3084 = vadd.f32 %v3082, %v3083
        %v3085 = vsel %vm1267, %v3079, 0.0
        %v3086 = vadd.f32 %v3084, %v3085
        %v3087 = vrot.slane %v3086, 4
        %v3088 = vadd.f32 %v3086, %v3087
        %v3089 = vrot.slane %v3088, 2
        %v3090 = vadd.f32 %v3088, %v3089
        %v3091 = vrot.slane %v3090, 1
        %v3092 = vadd.f32 %v3090, %v3091
        %v3093 = vrcp.pop %v3092
        %v3094 = vmul.f32 %v3073, %v3093
        %v3095 = vmul.f32 %v3075, %v3093
        %v3096 = vmul.f32 %v3077, %v3093
        %v3097 = vmul.f32 %v3079, %v3093
        %3102 = vrot.lane.b32.xlu0 %v3094, 96
        %v3103 = vpop.permute.xlu0 %3102
        %3104 = vrot.lane.b32.xlu0 %v3095, 96
        %v3105 = vpop.permute.xlu0 %3104
        %3106 = vrot.lane.b32.xlu0 %v3096, 96
        %v3107 = vpop.permute.xlu0 %3106
        %3108 = vrot.lane.b32.xlu0 %v3097, 96
        %v3109 = vpop.permute.xlu0 %3108
        %v3114 = vmax.f32 %v1311, %v3103
        %v3115 = vmax.f32 %v1312, %v3105
        %v3116 = vmax.f32 %v1313, %v3107
        %v3117 = vmax.f32 %v1314, %v3109
        %v3118 = vsel %vm1267, %v2778, %v2890
        %v3119 = vsel %vm1267, %v2779, %v2891
        %v3120 = vsel %vm1267, %v2780, %v2892
        %v3121 = vsel %vm1267, %v2781, %v2893
        %v3122 = vsel %vm1659, %v3118, %v3002
        %v3123 = vsel %vm1659, %v3119, %v3003
        %v3124 = vsel %vm1659, %v3120, %v3004
        %v3125 = vsel %vm1659, %v3121, %v3005
        %v3126 = vsel %vm1664, %v3122, %v3114
        %v3127 = vsel %vm1664, %v3123, %v3115
        %v3128 = vsel %vm1664, %v3124, %v3116
        %v3129 = vsel %vm1664, %v3125, %v3117
        %v3130 = vpack.c.bf16 %v3127, %v3126
        %v3131 = vpack.c.bf16 %v3129, %v3128
        %v3132 = vld [vmem:[%s12] sm:$0xf]
        %v3133 = vld [vmem:[%s12 + $0x4] sm:$0xf]
        %v3134 = vld [vmem:[%s12 + $0x8] sm:$0xf]
        %v3135 = vld [vmem:[%s12 + $0xc] sm:$0xf]
        %v3140 = vunpack.c.l.b16 %v3132
        %v3141 = vunpack.c.l.b16 %v3133
        %v3142 = vunpack.c.l.b16 %v3134
        %v3143 = vunpack.c.l.b16 %v3135
        %v3144 = vpack.c.b16 %v3141, %v3140
        %v3145 = vpack.c.b16 %v3143, %v3142
        %3148 = vmatprep.subr.bf16.mxu0 0
        %3149 = vmatpush1.bf16.msra.mxu0 %v3144
        %3150 = vmatprep.subr.bf16.mxu0 0
        %3151 = vmatpush1.bf16.msra.mxu0 %v3145
        %3152 = vmatprep.subr.bf16.mxu0 0
        %3153 = vmatpush1.bf16.msra.mxu0 0
        %3154 = vmatprep.subr.bf16.mxu0 0
        %3155 = vmatpush1.bf16.msra.mxu0 0
        %3156 = vmatprep.subr.bf16.mxu0 0
        %3157 = vmatpush1.bf16.msra.mxu0 0
        %3158 = vmatprep.subr.bf16.mxu0 0
        %3159 = vmatpush1.bf16.msra.mxu0 0
        %3160 = vmatprep.subr.bf16.mxu0 0
        %3161 = vmatpush1.bf16.msra.mxu0 0
        %3162 = vmatprep.subr.bf16.mxu0 0
        %3163 = vmatpush1.bf16.msra.mxu0 0
        %3164 = vmatprep.subr.bf16.mxu0 0
        %3165 = vmatpush1.bf16.msra.mxu0 0
        %3166 = vmatprep.subr.bf16.mxu0 0
        %3167 = vmatpush1.bf16.msra.mxu0 0
        %3168 = vmatprep.subr.bf16.mxu0 0
        %3169 = vmatpush1.bf16.msra.mxu0 0
        %3170 = vmatprep.subr.bf16.mxu0 0
        %3171 = vmatpush1.bf16.msra.mxu0 0
        %3172 = vmatprep.subr.bf16.mxu0 0
        %3173 = vmatpush1.bf16.msra.mxu0 0
        %3174 = vmatprep.subr.bf16.mxu0 0
        %3175 = vmatpush1.bf16.msra.mxu0 0
        %3176 = vmatprep.subr.bf16.mxu0 0
        %3177 = vmatpush1.bf16.msra.mxu0 0
        %3178 = vmatprep.subr.bf16.mxu0 0
        %3179 = vmatpush1.bf16.msra.mxu0 0
        %3180 = vmatprep.mubr.bf16.mxu0 0
        %3181 = vmatmul.mubr.bf16.gmra.mrb[0].mxu0 %v2159
        %v3182 = vpop.f32.mrb[0].mxu0
        %v3183 = vadd.f32 0.0, %v3182
        %v3184 = vpop.f32.mrb[0].mxu0
        %v3185 = vpop.f32.mrb[0].mxu0
        %v3186 = vadd.f32 0.0, %v3185
        %v3187 = vpop.f32.mrb[0].mxu0
        %3188 = vmatprep.mubr.bf16.mxu0 0
        %3189 = vmatmul.mubr.bf16.gmra.mrb[0].mxu0 %v2162
        %v3190 = vpop.f32.mrb[0].mxu0
        %v3191 = vadd.f32 0.0, %v3190
        %v3192 = vpop.f32.mrb[0].mxu0
        %v3193 = vpop.f32.mrb[0].mxu0
        %v3194 = vadd.f32 0.0, %v3193
        %v3195 = vpop.f32.mrb[0].mxu0
        %3196 = vdwg.mxu0
        %v3197 = vpack.c.bf16 %v3186, %v3183
        %v3198 = vpack.c.bf16 %v3194, %v3191
        %3201 = vrot.lane.b32.xlu0 %v3197, 96
        %v3202 = vpop.permute.xlu0 %3201
        %3203 = vrot.lane.b32.xlu0 %v3198, 96
        %v3204 = vpop.permute.xlu0 %3203
        %3207 = vrot.lane.b32.xlu0 %v3197, 64
        %v3208 = vpop.permute.xlu0 %3207
        %3209 = vrot.lane.b32.xlu0 %v3198, 64
        %v3210 = vpop.permute.xlu0 %3209
        %3213 = vrot.lane.b32.xlu0 %v3197, 32
        %v3214 = vpop.permute.xlu0 %3213
        %3215 = vrot.lane.b32.xlu0 %v3198, 32
        %v3216 = vpop.permute.xlu0 %3215
        %v3219 = vld [vmem:[%s13] sm:$0x1]
        %v3221 = vlaneseq
        %v3222 = vshrl.u32 %v3221, 7
        %v3223 = vsub.s32 0, %v3222
        %v3224 = vrot.slane %v3219, %v3223
        %3226 = vmatprep.subr.bf16.mxu0 0
        %3227 = vmatpush1.bf16.msra.mxu0 %v3197
        %3228 = vmatprep.subr.bf16.mxu0 0
        %3229 = vmatpush1.bf16.msra.mxu0 %v3198
        %3230 = vmatprep.subr.bf16.mxu0 0
        %3231 = vmatpush1.bf16.msra.mxu0 %v3202
        %3232 = vmatprep.subr.bf16.mxu0 0
        %3233 = vmatpush1.bf16.msra.mxu0 %v3204
        %3234 = vmatprep.subr.bf16.mxu0 0
        %3235 = vmatpush1.bf16.msra.mxu0 %v3208
        %3236 = vmatprep.subr.bf16.mxu0 0
        %3237 = vmatpush1.bf16.msra.mxu0 %v3210
        %3238 = vmatprep.subr.bf16.mxu0 0
        %3239 = vmatpush1.bf16.msra.mxu0 %v3214
        %3240 = vmatprep.subr.bf16.mxu0 0
        %3241 = vmatpush1.bf16.msra.mxu0 %v3216
        %3242 = vmatprep.subr.bf16.mxu0 0
        %3243 = vmatpush1.bf16.msra.mxu0 0
        %3244 = vmatprep.subr.bf16.mxu0 0
        %3245 = vmatpush1.bf16.msra.mxu0 0
        %3246 = vmatprep.subr.bf16.mxu0 0
        %3247 = vmatpush1.bf16.msra.mxu0 0
        %3248 = vmatprep.subr.bf16.mxu0 0
        %3249 = vmatpush1.bf16.msra.mxu0 0
        %3250 = vmatprep.subr.bf16.mxu0 0
        %3251 = vmatpush1.bf16.msra.mxu0 0
        %3252 = vmatprep.subr.bf16.mxu0 0
        %3253 = vmatpush1.bf16.msra.mxu0 0
        %3254 = vmatprep.subr.bf16.mxu0 0
        %3255 = vmatpush1.bf16.msra.mxu0 0
        %3256 = vmatprep.subr.bf16.mxu0 0
        %3257 = vmatpush1.bf16.msra.mxu0 0
        %3258 = vmatprep.mubr.bf16.mxu0 0
        %3259 = vmatmul.mubr.bf16.gmra.mrb[0].mxu0 %v3130
        %v3260 = vpop.f32.mrb[0].mxu0
        %v3261 = vadd.f32 %v3224, %v3260
        %v3262 = vpop.f32.mrb[0].mxu0
        %v3263 = vpop.f32.mrb[0].mxu0
        %v3264 = vadd.f32 %v3224, %v3263
        %v3265 = vpop.f32.mrb[0].mxu0
        %3266 = vmatprep.mubr.bf16.mxu0 0
        %3267 = vmatmul.mubr.bf16.gmra.mrb[0].mxu0 %v3131
        %v3268 = vpop.f32.mrb[0].mxu0
        %v3269 = vadd.f32 %v3224, %v3268
        %v3270 = vpop.f32.mrb[0].mxu0
        %v3271 = vpop.f32.mrb[0].mxu0
        %v3272 = vadd.f32 %v3224, %v3271
        %v3273 = vpop.f32.mrb[0].mxu0
        %3274 = vdwg.mxu0
        %v3275 = vmax.f32 %v3261, 0.0
        %v3276 = vmax.f32 %v3264, 0.0
        %v3277 = vmax.f32 %v3269, 0.0
        %v3278 = vmax.f32 %v3272, 0.0
        %3279 = vst.msk [vmem:[%s618] sm:$0xff] %vm1267, %v3275
        %3280 = vst.msk [vmem:[%s618 + $0x8] sm:$0xff] %vm1267, %v3276
        %3281 = vst.msk [vmem:[%s618 + $0x10] sm:$0xff] %vm1267, %v3277
        %3282 = vst.msk [vmem:[%s618 + $0x18] sm:$0xff] %vm1267, %v3278
        %v3284 = vsel %vm1267, 1.0, 0
        %3286 = vmatprep.subr.mxu0 0.0
        %3287 = vmatpush1.msra.mxu0 %v3275
        %3288 = vmatprep.subr.mxu0 0.0
        %3289 = vmatpush1.msra.mxu0 %v3276
        %3290 = vmatprep.subr.mxu0 0.0
        %3291 = vmatpush1.msra.mxu0 %v3277
        %3292 = vmatprep.subr.mxu0 0.0
        %3293 = vmatpush1.msra.mxu0 %v3278
        %3294 = vmatprep.subr.mxu0 0.0
        %3295 = vmatpush1.msra.mxu0 0.0
        %3296 = vmatprep.subr.mxu0 0.0
        %3297 = vmatpush1.msra.mxu0 0.0
        %3298 = vmatprep.subr.mxu0 0.0
        %3299 = vmatpush1.msra.mxu0 0.0
        %3300 = vmatprep.subr.mxu0 0.0
        %3301 = vmatpush1.msra.mxu0 0.0
        %3302 = vmatprep.subr.mxu0 0.0
        %3303 = vmatpush1.msra.mxu0 0.0
        %3304 = vmatprep.subr.mxu0 0.0
        %3305 = vmatpush1.msra.mxu0 0.0
        %3306 = vmatprep.subr.mxu0 0.0
        %3307 = vmatpush1.msra.mxu0 0.0
        %3308 = vmatprep.subr.mxu0 0.0
        %3309 = vmatpush1.msra.mxu0 0.0
        %3310 = vmatprep.subr.mxu0 0.0
        %3311 = vmatpush1.msra.mxu0 0.0
        %3312 = vmatprep.subr.mxu0 0.0
        %3313 = vmatpush1.msra.mxu0 0.0
        %3314 = vmatprep.subr.mxu0 0.0
        %3315 = vmatpush1.msra.mxu0 0.0
        %3316 = vmatprep.subr.mxu0 0.0
        %3317 = vmatpush1.msra.mxu0 0.0
        %3318 = vmatprep.subr.mxu0 0.0
        %3319 = vmatpush1.msra.mxu0 0.0
        %3320 = vmatprep.subr.mxu0 0.0
        %3321 = vmatpush1.msra.mxu0 0.0
        %3322 = vmatprep.subr.mxu0 0.0
        %3323 = vmatpush1.msra.mxu0 0.0
        %3324 = vmatprep.subr.mxu0 0.0
        %3325 = vmatpush1.msra.mxu0 0.0
        %3326 = vmatprep.subr.mxu0 0.0
        %3327 = vmatpush1.msra.mxu0 0.0
        %3328 = vmatprep.subr.mxu0 0.0
        %3329 = vmatpush1.msra.mxu0 0.0
        %3330 = vmatprep.subr.mxu0 0.0
        %3331 = vmatpush1.msra.mxu0 0.0
        %3332 = vmatprep.subr.mxu0 0.0
        %3333 = vmatpush1.msra.mxu0 0.0
        %3334 = vmatprep.subr.mxu0 0.0
        %3335 = vmatpush1.msra.mxu0 0.0
        %3336 = vmatprep.subr.mxu0 0.0
        %3337 = vmatpush1.msra.mxu0 0.0
        %3338 = vmatprep.subr.mxu0 0.0
        %3339 = vmatpush1.msra.mxu0 0.0
        %3340 = vmatprep.subr.mxu0 0.0
        %3341 = vmatpush1.msra.mxu0 0.0
        %3342 = vmatprep.subr.mxu0 0.0
        %3343 = vmatpush1.msra.mxu0 0.0
        %3344 = vmatprep.subr.mxu0 0.0
        %3345 = vmatpush1.msra.mxu0 0.0
        %3346 = vmatprep.subr.mxu0 0.0
        %3347 = vmatpush1.msra.mxu0 0.0
        %3348 = vmatprep.subr.mxu0 0.0
        %3349 = vmatpush1.msra.mxu0 0.0
        %3350 = vmatprep.mubr.f32.mxu0 0.0
        %3351 = vmatmul.mubr.f32.gmra.mrb[0].mxu0 %v3284
        %v3352 = vpop.f32.mrb[0].mxu0
        %v3353 = vadd.f32 0.0, %v3352
        %v3354 = vpop.f32.mrb[0].mxu0
        %3355 = vdwg.mxu0
        %vm3356 = vcmask 253952
        %3357 = vst.msk [vmem:[%s624] sm:$0x1] %vm3356, %v3353
        %s3358 = sand.u32 %s351, 1
        %s3359 = scalar_lea.sflag [#allocation4], %s3358
        %s3360 = sand.u32 %s351, 1
        %s3361 = smul.addr %s3360, 32
        %s3362 = scalar_lea.vmem [#allocation14], %s3361
        %s3363 = sand.u32 %s377, 1
        %s3364 = scalar_lea.sflag [#allocation16], %s3363
        %s3365 = sand.u32 %s377, 1
        %s3366 = scalar_lea.vmem [#allocation15], %s3365
        // Predicated region
        $region105: #{tpu_custom_call.1} parent=75 // pred_check
          %p3367 = pneg %p361
        $region106: #{tpu_custom_call.1} parent=75 // pred_check_branch
          %3369 = sbr.rel (%p3367) target = $region108
        $region107: #{tpu_custom_call.1} parent=75 // pred_region
          %s3371 = ssub.s32 512, 512
          %3372 = vsyncadd %s3359, %s3371
          %s3373 = smul.addr %s39, 4
          %s3374 = smul.addr %s3373, 128
          %s3375 = scalar_lea.hbm %s14, %s3374
          %s3376 = sshll.u32 %s3362, 4
          %s3377 = int_to_ptr.vmem [resolvable:$true] %s3376
          %3382 = dma.vmem_to_hbm [thread:$0]  %s3377, 512, %s3375, %s3359, 128, 128, 8
        $region108: #{tpu_custom_call.1} parent=75 // pred_fallthru
          _
        // Predicated region
        $region109: #{tpu_custom_call.1} parent=75 // pred_check
          %p3383 = pneg %p387
        $region110: #{tpu_custom_call.1} parent=75 // pred_check_branch
          %3385 = sbr.rel (%p3383) target = $region112
        $region111: #{tpu_custom_call.1} parent=75 // pred_region
          %s3387 = ssub.s32 16, 16
          %3388 = vsyncadd %s3364, %s3387
          %s3389 = smul.addr %s39, 16
          %s3390 = scalar_lea.hbm %s15, %s3389
          %s3392 = sshll.u32 %s3366, 4
          %s3393 = int_to_ptr.vmem [resolvable:$true] %s3392
          %3395 = dma.vmem_to_hbm [thread:$0]  %s3393, 16, %s3390, %s3364
        $region112: #{tpu_custom_call.1} parent=75 // pred_fallthru
          _
      $region76: #{tpu_custom_call.1} parent=5 // pred_fallthru
        _
      %p3396 = scmp.le.s32.totalorder 2, %s34
      // Predicated region
      $region113: #{tpu_custom_call.1} parent=5 // pred_check
        %p3397 = pneg %p3396
      $region114: #{tpu_custom_call.1} parent=5 // pred_check_branch
        %3399 = sbr.rel (%p3397) target = $region116
      $region115: #{tpu_custom_call.1} parent=5 // pred_region
        %s3400 = ssub.s32 %s34, 2
        // Predicated region
        $region117: #{tpu_custom_call.1} parent=115 // pred_check
          %p3401 = pneg %p367
        $region118: #{tpu_custom_call.1} parent=115 // pred_check_branch
          %3403 = sbr.rel (%p3401) target = $region120
        $region119: #{tpu_custom_call.1} parent=115 // pred_region
          %s3404 = sand.u32 %s352, 1
          %s3405 = scalar_lea.sflag [#allocation4], %s3404
          %s3406 = sand.u32 %s352, 1
          %s3407 = smul.addr %s3406, 32
          %s3408 = scalar_lea.vmem [#allocation14], %s3407
          %3409 = dma.done %s3405, 512
        $region120: #{tpu_custom_call.1} parent=115 // pred_fallthru
          _
        // Predicated region
        $region121: #{tpu_custom_call.1} parent=115 // pred_check
          %p3410 = pneg %p393
        $region122: #{tpu_custom_call.1} parent=115 // pred_check_branch
          %3412 = sbr.rel (%p3410) target = $region124
        $region123: #{tpu_custom_call.1} parent=115 // pred_region
          %s3413 = sand.u32 %s378, 1
          %s3414 = scalar_lea.sflag [#allocation16], %s3413
          %s3415 = sand.u32 %s378, 1
          %s3416 = scalar_lea.vmem [#allocation15], %s3415
          %3417 = dma.done %s3414, 16
        $region124: #{tpu_custom_call.1} parent=115 // pred_fallthru
          _
      $region116: #{tpu_custom_call.1} parent=5 // pred_fallthru
        _
    $region6: #{tpu_custom_call.1} parent=1 // loop_footer
      %s38 = sadd.s32 1, %s34
    $region7: #{tpu_custom_call.1} parent=1 // loop_footer_branch
      %33 = sbr.rel target = $region3
    $region8: #{tpu_custom_call.1} parent=1 // loop_exit
      _
    %3418 = vsyncpa [#allocation3], 1
    %s3419 = scalar_lea.sflag [#allocation3], 1
    %3420 = vsyncpa %s3419, 1
    %3421 = vsyncpa [#allocation6], 1
    %3422 = vsyncpa [#allocation9], 1
    %3423 = vsyncpa [#allocation12], 1
    %3424 = vsyncpa [#allocation4], 1
    %s3425 = scalar_lea.sflag [#allocation4], 1
    %3426 = vsyncpa %s3425, 1
    %3427 = vsyncpa [#allocation16], 1
    %s3428 = scalar_lea.sflag [#allocation16], 1
    %3429 = vsyncpa %s3428, 1

</llo_original>
